<compile_context>
chip_gen: v5e
topology: v5e:2x2
jax: 0.10.0
libtpu: 0.0.40
codegen_flags: <defaults>
</compile_context>

<pallas_src>
import itertools
from functools import partial

import numpy as np
import jax
import jax.numpy as jnp
from jax import lax
from jax.experimental import pallas as pl
from jax.experimental.pallas import tpu as pltpu

# (spanned axes of the cell, sign in the Euler curve)
_FAMILIES = (
    ((), +1.0),         # vertices
    ((2,), -1.0),       # edges along axis 2
    ((1,), -1.0),       # edges along axis 1
    ((0,), -1.0),       # edges along axis 0
    ((1, 2), +1.0),     # squares in (1,2) plane
    ((0, 2), +1.0),     # squares in (0,2) plane
    ((0, 1), +1.0),     # squares in (0,1) plane
    ((0, 1, 2), -1.0),  # cubes
)
_NFAM = len(_FAMILIES)

_DBLK = 8      # directions per grid step: one sublane group -> single-vreg partial sums
_CHUNK = 512   # lane strip kept register-resident across the 8 x T compare/select/sum loop


def _round_up(v, m):
    return ((v + m - 1) // m) * m


def _wect_kernel(dinfo_ref, c_ref, w_ref, out_ref, *, thresholds, chunk):
    """One (direction-block, cell-block) step of the WECT.

    dinfo_ref: (8, 16)     [d0, d1, d2, off_family0..7, 0 pad] per direction row
    c_ref:     (8, mblk)   rows 0..2 = base-cell coordinates (i, j, k); rest zero
    w_ref:     (8, mblk)   signed per-family cell weights (0 for invalid / padded cells)
    out_ref:   (8, tlane)  curve block; thresholds on the lane axis, accumulated over the
                           cell-block grid axis.
    """
    mi = pl.program_id(1)

    @pl.when(mi == 0)
    def _init():
        out_ref[...] = jnp.zeros_like(out_ref)

    dblk, tlane = out_ref.shape
    mblk = c_ref.shape[1]
    T = len(thresholds)
    n_chunks = mblk // chunk

    # Per-direction data, read once per grid step (each is a single (8,1) column).
    d0 = dinfo_ref[:, 0:1]
    d1 = dinfo_ref[:, 1:2]
    d2 = dinfo_ref[:, 2:3]
    offs = [dinfo_ref[:, 3 + f:4 + f] for f in range(_NFAM)]

    def strip(start, partials):
        """Process one register-resident lane strip of `chunk` base cells."""
        sl = pl.ds(start, chunk)
        ci = c_ref[0:1, sl]                                   # (1, chunk)
        cj = c_ref[1:2, sl]
        ck = c_ref[2:3, sl]
        # Base-cell heights for this strip: pure VPU, computed once, reused 8*T times.
        vh = d0 * ci + d1 * cj + d2 * ck                      # (8, chunk)
        partials = list(partials)
        for f in range(_NFAM):
            # Hoisted sublane broadcast of this family's signed weights (once per strip).
            wf = jnp.broadcast_to(w_ref[f:f + 1, sl], (dblk, chunk))
            hf = vh + offs[f]                                 # cell heights of family f
            for t_idx in range(T):                            # static unroll, T ~ 13..32
                m = jnp.where(hf <= thresholds[t_idx], wf, 0.0)
                partials[t_idx] = partials[t_idx] + jnp.sum(m, axis=1, keepdims=True)
        return tuple(partials)

    init = tuple(jnp.zeros((dblk, 1), jnp.float32) for _ in range(T))
    if n_chunks == 1:
        partials = strip(0, init)
    else:
        partials = lax.fori_loop(
            0, n_chunks,
            lambda c, p: strip(pl.multiple_of(c * chunk, chunk), p),
            init)

    # Assemble the lane-dense output row once per grid step (outside the hot loop),
    # then a single full-width accumulate-store.
    lane = lax.broadcasted_iota(jnp.int32, (dblk, tlane), 1)
    acc = jnp.zeros((dblk, tlane), jnp.float32)
    for t_idx in range(T):
        acc = acc + jnp.where(lane == t_idx, partials[t_idx], 0.0)
    out_ref[...] += acc


def _family_dense(x32, arr, spanned, prod):
    """Dense (A,B,C) array of unsigned cell values; 0 where the cell does not exist."""
    A, B, C = x32.shape
    sizes = (A - (1 if 0 in spanned else 0),
             B - (1 if 1 in spanned else 0),
             C - (1 if 2 in spanned else 0))
    deltas = list(itertools.product(*[(0, 1) if a in spanned else (0,) for a in range(3)]))
    ssum = jnp.zeros(sizes, jnp.float32)
    vagg = None
    for d in deltas:
        sl = tuple(slice(d[a], d[a] + sizes[a]) for a in range(3))
        ssum = ssum + arr[sl]
        v = x32[sl]
        vagg = v if vagg is None else (vagg * v if prod else jnp.maximum(vagg, v))
    valid = ssum == jnp.float32(len(deltas))      # same equality check as torch's conv == 2/4/8
    core = jnp.where(valid, vagg, jnp.float32(0.0))
    pad = tuple((0, full - s) for full, s in zip((A, B, C), sizes))
    return jnp.pad(core, pad)


@partial(jax.jit, static_argnames=("thresholds", "mblk", "tlane", "prod"))
def _wect_forward(x, dinfo, coords, *, thresholds, mblk, tlane, prod):
    dpad = dinfo.shape[0]
    mpad = coords.shape[1]
    grid = (dpad // _DBLK, mpad // mblk)

    # ---- glue (regular XLA): signed per-family cell weights, one stack + one pad ----
    A, B, C = x.shape
    N = A * B * C
    x32 = x.astype(jnp.float32)
    arr = jnp.where(x32 > 0, jnp.float32(1.0), x32)
    slabs = []
    for spanned, sign in _FAMILIES:
        if spanned == ():
            dense = jnp.where(x32 != 0, x32, jnp.float32(0.0))   # vertices: x != 0
        else:
            dense = _family_dense(x32, arr, spanned, prod)
        slabs.append(jnp.float32(sign) * dense.reshape(-1))
    w = jnp.stack(slabs, axis=0)                                  # (8, N)
    w = jnp.pad(w, ((0, 0), (0, mpad - N)))                       # padded cells -> weight 0

    kernel = partial(_wect_kernel, thresholds=thresholds, chunk=min(_CHUNK, mblk))
    out = pl.pallas_call(
        kernel,
        out_shape=jax.ShapeDtypeStruct((dpad, tlane), jnp.float32),
        grid_spec=pltpu.PrefetchScalarGridSpec(
            num_scalar_prefetch=0,
            grid=grid,                                   # reduction (cell) axis last
            in_specs=[
                pl.BlockSpec((_DBLK, 16), lambda di, mi: (di, 0)),   # per-direction info
                pl.BlockSpec((8, mblk), lambda di, mi: (0, mi)),     # base-cell coords
                pl.BlockSpec((8, mblk), lambda di, mi: (0, mi)),     # signed family weights
            ],
            out_specs=pl.BlockSpec((_DBLK, tlane), lambda di, mi: (di, 0)),
        ),
        compiler_params=pltpu.CompilerParams(
            dimension_semantics=("parallel", "arbitrary"),
            vmem_limit_bytes=32 * 1024 * 1024,   # footprint is << this on every generation
        ),
    )(dinfo, coords, w)
    return out


class WeightedEulerCurveTPU:
    """JAX/Pallas port of torch_topological's WeightedEulerCurve (forward pass)."""

    def __init__(self, num_directions=100, num_steps=30, prod=False, max_cell_block=4096):
        # torch module seeds np.random(4) and draws directions with numpy only.
        np.random.seed(4)
        dirs = []
        for _ in range(num_directions):
            phi = np.random.uniform(0, np.pi * 2)
            costheta = np.random.uniform(-1, 1)
            theta = np.arccos(costheta)
            dirs.append([np.sin(theta) * np.cos(phi),
                         np.sin(theta) * np.sin(phi),
                         np.cos(theta)])
        self.directions = np.asarray(dirs, dtype=np.float64)
        self.num_directions = num_directions
        self.num_steps = num_steps
        self.prod = prod
        self.max_cell_block = _round_up(max(int(max_cell_block), _CHUNK), _CHUNK)

        # Per-direction info (cached for the lifetime of the module):
        #   columns 0..2  : direction components
        #   columns 3..10 : per-family height offset  sum_{a in spanned} max(0, d_a)
        D = num_directions
        dpad = _round_up(max(D, 1), _DBLK)
        dirs32 = self.directions.astype(np.float32)
        dinfo = np.zeros((dpad, 16), np.float32)
        dinfo[:D, 0:3] = dirs32
        for f, (spanned, _sign) in enumerate(_FAMILIES):
            off = np.zeros((D,), np.float32)
            for a in spanned:
                off = off + np.maximum(np.float32(0.0), dirs32[:, a])
            dinfo[:D, 3 + f] = off
        self._dinfo_np = dinfo
        self._dinfo = jnp.asarray(dinfo)

        self._geom_cache = {}
        self._intervals = None

    def _geometry(self, shape):
        """Shape-dependent constants, cached across calls."""
        key = tuple(int(s) for s in shape)
        cached = self._geom_cache.get(key)
        if cached is None:
            A, B, C = key
            N = A * B * C
            mblk = max(_CHUNK, min(self.max_cell_block, _round_up(N, _CHUNK)))
            mpad = _round_up(N, mblk)

            # Base-cell coordinates: 3 meaningful rows, padded to 8 sublanes.
            coords = np.zeros((8, mpad), np.float32)
            ii, jj, kk = np.meshgrid(np.arange(A), np.arange(B), np.arange(C), indexing="ij")
            coords[0, :N] = ii.ravel()
            coords[1, :N] = jj.ravel()
            coords[2, :N] = kk.ravel()

            # Height thresholds (same construction as the torch module).
            min_height = -(3 ** 0.5) * A
            max_height = -min_height
            dh = (max_height - min_height) / self.num_steps
            intervals = np.arange(min_height, max_height + dh, dh).astype(np.float32)
            thresholds = tuple(float(v) for v in intervals)   # static kernel constants
            T = len(thresholds)
            assert T <= 128, "num_steps too large for a single 128-lane output row"
            tlane = _round_up(max(T, 1), 128)

            cached = (jnp.asarray(coords), thresholds, intervals, mblk, tlane)
            self._geom_cache[key] = cached
        return cached

    def __call__(self, x):
        coords, thresholds, intervals, mblk, tlane = self._geometry(x.shape)
        self._intervals = intervals
        out = _wect_forward(x, self._dinfo, coords,
                            thresholds=thresholds, mblk=mblk, tlane=tlane, prod=self.prod)
        # torch returns shape (num_directions, len(intervals)) despite the docstring.
        return out[: self.num_directions, : len(thresholds)]


def _reference_wect(x_np, module, prod=False):
    """Numpy emulation of the torch algorithm (nonzero / sort / cumsum / searchsorted).

    Heights use the same f32 expression order as the kernel (base.dot(d) + family offset)
    so that the comparison is not perturbed by last-ulp differences in summation order.
    """
    A, B, C = x_np.shape
    x_np = x_np.astype(np.float32)
    arr = np.where(x_np > 0, np.float32(1.0), x_np)
    dirs = module.directions.astype(np.float32)
    dinfo = module._dinfo_np
    intervals = module._intervals
    D = dirs.shape[0]
    T = intervals.shape[0]

    cells = []
    for f, (spanned, sign) in enumerate(_FAMILIES):
        if spanned == ():
            idx = np.argwhere(x_np != 0)
            base = idx.astype(np.float32)
            vals = (x_np[idx[:, 0], idx[:, 1], idx[:, 2]]
                    if idx.shape[0] else np.zeros((0,), np.float32))
        else:
            sizes = [A - (1 if 0 in spanned else 0),
                     B - (1 if 1 in spanned else 0),
                     C - (1 if 2 in spanned else 0)]
            deltas = list(itertools.product(*[(0, 1) if a in spanned else (0,) for a in range(3)]))
            ssum = np.zeros(sizes, np.float32)
            vagg = None
            for d in deltas:
                sl = tuple(slice(d[a], d[a] + sizes[a]) for a in range(3))
                ssum = ssum + arr[sl]
                v = x_np[sl]
                vagg = v.copy() if vagg is None else (vagg * v if prod else np.maximum(vagg, v))
            idx = np.argwhere(ssum == np.float32(len(deltas)))
            base = idx.astype(np.float32)
            vals = (vagg[idx[:, 0], idx[:, 1], idx[:, 2]]
                    if idx.shape[0] else np.zeros((0,), np.float32))
        cells.append((base, vals.astype(np.float32), f, np.float64(sign)))

    out = np.zeros((D, T), np.float32)
    for di in range(D):
        d0, d1, d2 = dirs[di, 0], dirs[di, 1], dirs[di, 2]
        total = np.zeros(T, np.float64)
        for base, vals, f, sign in cells:
            if base.shape[0] == 0:
                continue
            h = (d0 * base[:, 0] + d1 * base[:, 1] + d2 * base[:, 2]) + dinfo[di, 3 + f]
            order = np.argsort(h, kind="stable")
            hs = np.concatenate([np.asarray([-1e9], np.float32), h[order]]).astype(np.float32)
            cum = np.concatenate([[0.0], np.cumsum(vals[order].astype(np.float64))])
            ptr = np.searchsorted(hs, intervals, side="right") - 1
            total += sign * cum[ptr]
        out[di] = total
    return out


if __name__ == "__main__":
    key = jax.random.PRNGKey(0)
    A = B = C = 12
    num_directions, num_steps = 16, 12

    u = jax.random.uniform(key, (A, B, C), dtype=jnp.float32)
    x = jnp.where(u > 0.35, u, jnp.float32(0.0))    # sparse-ish nonnegative 3D volume

    # max_cell_block=1024 so this small demo exercises both the reduction grid axis
    # (2 cell blocks) and the in-kernel strip loop (2 strips per block).
    module = WeightedEulerCurveTPU(num_directions=num_directions, num_steps=num_steps,
                                   max_cell_block=1024)
    out = module(x)
    out = jax.block_until_ready(out)

    ref = _reference_wect(np.asarray(x), module, prod=False)
    assert out.shape == ref.shape, (out.shape, ref.shape)
    np.testing.assert_allclose(np.asarray(out), ref, rtol=2e-4, atol=5e-2)
    print("KERNEL_OK")
</pallas_src>

<mosaic_0001>
module attributes {stable_mosaic.version = 11 : i64} {
  func.func @_wect_kernel(%arg0: i32, %arg1: i32, %arg2: memref<8x16xf32, #tpu.memory_space<vmem>>, %arg3: memref<8x1024xf32, #tpu.memory_space<vmem>>, %arg4: memref<8x1024xf32, #tpu.memory_space<vmem>>, %arg5: memref<8x128xf32, #tpu.memory_space<vmem>>) attributes {dimension_semantics = [#tpu.dimension_semantics<parallel>, #tpu.dimension_semantics<arbitrary>], iteration_bounds = array<i64: 2, 2>, scalar_prefetch = 0 : i64, scratch_operands = 0 : i64, tpu.core_type = #tpu.core_type<tc>, window_params = [{transform_indices = @transform_0, window_bounds = array<i64: 8, 16>}, {transform_indices = @transform_1, window_bounds = array<i64: 8, 1024>}, {transform_indices = @transform_2, window_bounds = array<i64: 8, 1024>}, {transform_indices = @transform_3, window_bounds = array<i64: 8, 128>}]} {
    %c0_i32 = arith.constant 0 : i32
    %0 = arith.cmpi eq, %arg1, %c0_i32 : i32
    %1 = arith.extui %0 : i1 to i32
    %c0_i32_0 = arith.constant 0 : i32
    %2 = arith.cmpi ne, %1, %c0_i32_0 : i32
    scf.if %2 {
      %cst_47 = arith.constant 0.000000e+00 : f32
      %125 = vector.broadcast %cst_47 : f32 to vector<8x128xf32>
      %c0_48 = arith.constant 0 : index
      %c0_49 = arith.constant 0 : index
      %126 = vector.load %arg5[%c0_48, %c0_49] : memref<8x128xf32, #tpu.memory_space<vmem>>, vector<8x128xf32>
      tpu.vector_store %arg5[%c0_48, %c0_49], %125 {strides = array<i32>} : memref<8x128xf32, #tpu.memory_space<vmem>>, vector<8x128xf32>,
    } else {
    }
    %c0 = arith.constant 0 : index
    %c0_1 = arith.constant 0 : index
    %3 = vector.load %arg2[%c0, %c0_1] : memref<8x16xf32, #tpu.memory_space<vmem>>, vector<8x1xf32>
    %c0_2 = arith.constant 0 : index
    %c1 = arith.constant 1 : index
    %4 = vector.load %arg2[%c0_2, %c1] : memref<8x16xf32, #tpu.memory_space<vmem>>, vector<8x1xf32>
    %c0_3 = arith.constant 0 : index
    %c2 = arith.constant 2 : index
    %5 = vector.load %arg2[%c0_3, %c2] : memref<8x16xf32, #tpu.memory_space<vmem>>, vector<8x1xf32>
    %c0_4 = arith.constant 0 : index
    %c3 = arith.constant 3 : index
    %6 = vector.load %arg2[%c0_4, %c3] : memref<8x16xf32, #tpu.memory_space<vmem>>, vector<8x1xf32>
    %c0_5 = arith.constant 0 : index
    %c4 = arith.constant 4 : index
    %7 = vector.load %arg2[%c0_5, %c4] : memref<8x16xf32, #tpu.memory_space<vmem>>, vector<8x1xf32>
    %c0_6 = arith.constant 0 : index
    %c5 = arith.constant 5 : index
    %8 = vector.load %arg2[%c0_6, %c5] : memref<8x16xf32, #tpu.memory_space<vmem>>, vector<8x1xf32>
    %c0_7 = arith.constant 0 : index
    %c6 = arith.constant 6 : index
    %9 = vector.load %arg2[%c0_7, %c6] : memref<8x16xf32, #tpu.memory_space<vmem>>, vector<8x1xf32>
    %c0_8 = arith.constant 0 : index
    %c7 = arith.constant 7 : index
    %10 = vector.load %arg2[%c0_8, %c7] : memref<8x16xf32, #tpu.memory_space<vmem>>, vector<8x1xf32>
    %c0_9 = arith.constant 0 : index
    %c8 = arith.constant 8 : index
    %11 = vector.load %arg2[%c0_9, %c8] : memref<8x16xf32, #tpu.memory_space<vmem>>, vector<8x1xf32>
    %c0_10 = arith.constant 0 : index
    %c9 = arith.constant 9 : index
    %12 = vector.load %arg2[%c0_10, %c9] : memref<8x16xf32, #tpu.memory_space<vmem>>, vector<8x1xf32>
    %c0_11 = arith.constant 0 : index
    %c10 = arith.constant 10 : index
    %13 = vector.load %arg2[%c0_11, %c10] : memref<8x16xf32, #tpu.memory_space<vmem>>, vector<8x1xf32>
    %cst = arith.constant 0.000000e+00 : f32
    %14 = vector.broadcast %cst : f32 to vector<8x1xf32>
    %cst_12 = arith.constant 0.000000e+00 : f32
    %15 = vector.broadcast %cst_12 : f32 to vector<8x1xf32>
    %cst_13 = arith.constant 0.000000e+00 : f32
    %16 = vector.broadcast %cst_13 : f32 to vector<8x1xf32>
    %cst_14 = arith.constant 0.000000e+00 : f32
    %17 = vector.broadcast %cst_14 : f32 to vector<8x1xf32>
    %cst_15 = arith.constant 0.000000e+00 : f32
    %18 = vector.broadcast %cst_15 : f32 to vector<8x1xf32>
    %cst_16 = arith.constant 0.000000e+00 : f32
    %19 = vector.broadcast %cst_16 : f32 to vector<8x1xf32>
    %cst_17 = arith.constant 0.000000e+00 : f32
    %20 = vector.broadcast %cst_17 : f32 to vector<8x1xf32>
    %cst_18 = arith.constant 0.000000e+00 : f32
    %21 = vector.broadcast %cst_18 : f32 to vector<8x1xf32>
    %cst_19 = arith.constant 0.000000e+00 : f32
    %22 = vector.broadcast %cst_19 : f32 to vector<8x1xf32>
    %cst_20 = arith.constant 0.000000e+00 : f32
    %23 = vector.broadcast %cst_20 : f32 to vector<8x1xf32>
    %cst_21 = arith.constant 0.000000e+00 : f32
    %24 = vector.broadcast %cst_21 : f32 to vector<8x1xf32>
    %cst_22 = arith.constant 0.000000e+00 : f32
    %25 = vector.broadcast %cst_22 : f32 to vector<8x1xf32>
    %cst_23 = arith.constant 0.000000e+00 : f32
    %26 = vector.broadcast %cst_23 : f32 to vector<8x1xf32>
    %c0_i32_24 = arith.constant 0 : i32
    %c2_i32 = arith.constant 2 : i32
    %27 = arith.addi %c0_i32_24, %c2_i32 : i32
    %c1_i32 = arith.constant 1 : i32
    %28:13 = scf.for %arg6 = %c0_i32_24 to %27 step %c1_i32 iter_args(%arg7 = %14, %arg8 = %15, %arg9 = %16, %arg10 = %17, %arg11 = %18, %arg12 = %19, %arg13 = %20, %arg14 = %21, %arg15 = %22, %arg16 = %23, %arg17 = %24, %arg18 = %25, %arg19 = %26) -> (vector<8x1xf32>, vector<8x1xf32>, vector<8x1xf32>, vector<8x1xf32>, vector<8x1xf32>, vector<8x1xf32>, vector<8x1xf32>, vector<8x1xf32>, vector<8x1xf32>, vector<8x1xf32>, vector<8x1xf32>, vector<8x1xf32>, vector<8x1xf32>)  : i32 {
      %c512_i32 = arith.constant 512 : i32
      %125 = arith.muli %arg6, %c512_i32 : i32
      %126 = tpu.assume_multiple %125, 512 : i32
      %c0_47 = arith.constant 0 : index
      %127 = arith.index_cast %126 : i32 to index
      %128 = vector.load %arg3[%c0_47, %127] : memref<8x1024xf32, #tpu.memory_space<vmem>>, vector<1x512xf32>
      %c1_48 = arith.constant 1 : index
      %129 = arith.index_cast %126 : i32 to index
      %130 = vector.load %arg3[%c1_48, %129] : memref<8x1024xf32, #tpu.memory_space<vmem>>, vector<1x512xf32>
      %c2_49 = arith.constant 2 : index
      %131 = arith.index_cast %126 : i32 to index
      %132 = vector.load %arg3[%c2_49, %131] : memref<8x1024xf32, #tpu.memory_space<vmem>>, vector<1x512xf32>
      %133 = vector.broadcast %3 : vector<8x1xf32> to vector<8x512xf32>
      %134 = vector.broadcast %128 : vector<1x512xf32> to vector<8x512xf32>
      %135 = arith.mulf %133, %134 : vector<8x512xf32>
      %136 = vector.broadcast %4 : vector<8x1xf32> to vector<8x512xf32>
      %137 = vector.broadcast %130 : vector<1x512xf32> to vector<8x512xf32>
      %138 = arith.mulf %136, %137 : vector<8x512xf32>
      %139 = arith.addf %135, %138 : vector<8x512xf32>
      %140 = vector.broadcast %5 : vector<8x1xf32> to vector<8x512xf32>
      %141 = vector.broadcast %132 : vector<1x512xf32> to vector<8x512xf32>
      %142 = arith.mulf %140, %141 : vector<8x512xf32>
      %143 = arith.addf %139, %142 : vector<8x512xf32>
      %c0_50 = arith.constant 0 : index
      %144 = arith.index_cast %126 : i32 to index
      %145 = vector.load %arg4[%c0_50, %144] : memref<8x1024xf32, #tpu.memory_space<vmem>>, vector<1x512xf32>
      %146 = vector.shape_cast %145 : vector<1x512xf32> to vector<1x512xf32>
      %147 = vector.broadcast %146 : vector<1x512xf32> to vector<8x512xf32>
      %148 = vector.broadcast %6 : vector<8x1xf32> to vector<8x512xf32>
      %149 = arith.addf %143, %148 : vector<8x512xf32>
      %cst_51 = arith.constant -20.7846088 : f32
      %150 = vector.broadcast %cst_51 : f32 to vector<8x512xf32>
      %151 = arith.cmpf ole, %149, %150 : vector<8x512xf32>
      %cst_52 = arith.constant 0.000000e+00 : f32
      %152 = vector.broadcast %cst_52 : f32 to vector<8x512xf32>
      %153 = arith.select %151, %147, %152 : vector<8x512xi1>, vector<8x512xf32>
      %cst_53 = arith.constant dense<0.000000e+00> : vector<8xf32>
      %154 = vector.multi_reduction <add>, %153, %cst_53 [1] : vector<8x512xf32> to vector<8xf32>
      %155 = vector.shape_cast %154 : vector<8xf32> to vector<8x1xf32>
      %156 = arith.addf %arg7, %155 : vector<8x1xf32>
      %cst_54 = arith.constant -17.320509 : f32
      %157 = vector.broadcast %cst_54 : f32 to vector<8x512xf32>
      %158 = arith.cmpf ole, %149, %157 : vector<8x512xf32>
      %cst_55 = arith.constant 0.000000e+00 : f32
      %159 = vector.broadcast %cst_55 : f32 to vector<8x512xf32>
      %160 = arith.select %158, %147, %159 : vector<8x512xi1>, vector<8x512xf32>
      %cst_56 = arith.constant dense<0.000000e+00> : vector<8xf32>
      %161 = vector.multi_reduction <add>, %160, %cst_56 [1] : vector<8x512xf32> to vector<8xf32>
      %162 = vector.shape_cast %161 : vector<8xf32> to vector<8x1xf32>
      %163 = arith.addf %arg8, %162 : vector<8x1xf32>
      %cst_57 = arith.constant -13.8564062 : f32
      %164 = vector.broadcast %cst_57 : f32 to vector<8x512xf32>
      %165 = arith.cmpf ole, %149, %164 : vector<8x512xf32>
      %cst_58 = arith.constant 0.000000e+00 : f32
      %166 = vector.broadcast %cst_58 : f32 to vector<8x512xf32>
      %167 = arith.select %165, %147, %166 : vector<8x512xi1>, vector<8x512xf32>
      %cst_59 = arith.constant dense<0.000000e+00> : vector<8xf32>
      %168 = vector.multi_reduction <add>, %167, %cst_59 [1] : vector<8x512xf32> to vector<8xf32>
      %169 = vector.shape_cast %168 : vector<8xf32> to vector<8x1xf32>
      %170 = arith.addf %arg9, %169 : vector<8x1xf32>
      %cst_60 = arith.constant -10.3923044 : f32
      %171 = vector.broadcast %cst_60 : f32 to vector<8x512xf32>
      %172 = arith.cmpf ole, %149, %171 : vector<8x512xf32>
      %cst_61 = arith.constant 0.000000e+00 : f32
      %173 = vector.broadcast %cst_61 : f32 to vector<8x512xf32>
      %174 = arith.select %172, %147, %173 : vector<8x512xi1>, vector<8x512xf32>
      %cst_62 = arith.constant dense<0.000000e+00> : vector<8xf32>
      %175 = vector.multi_reduction <add>, %174, %cst_62 [1] : vector<8x512xf32> to vector<8xf32>
      %176 = vector.shape_cast %175 : vector<8xf32> to vector<8x1xf32>
      %177 = arith.addf %arg10, %176 : vector<8x1xf32>
      %cst_63 = arith.constant -6.92820311 : f32
      %178 = vector.broadcast %cst_63 : f32 to vector<8x512xf32>
      %179 = arith.cmpf ole, %149, %178 : vector<8x512xf32>
      %cst_64 = arith.constant 0.000000e+00 : f32
      %180 = vector.broadcast %cst_64 : f32 to vector<8x512xf32>
      %181 = arith.select %179, %147, %180 : vector<8x512xi1>, vector<8x512xf32>
      %cst_65 = arith.constant dense<0.000000e+00> : vector<8xf32>
      %182 = vector.multi_reduction <add>, %181, %cst_65 [1] : vector<8x512xf32> to vector<8xf32>
      %183 = vector.shape_cast %182 : vector<8xf32> to vector<8x1xf32>
      %184 = arith.addf %arg11, %183 : vector<8x1xf32>
      %cst_66 = arith.constant -3.46410155 : f32
      %185 = vector.broadcast %cst_66 : f32 to vector<8x512xf32>
      %186 = arith.cmpf ole, %149, %185 : vector<8x512xf32>
      %cst_67 = arith.constant 0.000000e+00 : f32
      %187 = vector.broadcast %cst_67 : f32 to vector<8x512xf32>
      %188 = arith.select %186, %147, %187 : vector<8x512xi1>, vector<8x512xf32>
      %cst_68 = arith.constant dense<0.000000e+00> : vector<8xf32>
      %189 = vector.multi_reduction <add>, %188, %cst_68 [1] : vector<8x512xf32> to vector<8xf32>
      %190 = vector.shape_cast %189 : vector<8xf32> to vector<8x1xf32>
      %191 = arith.addf %arg12, %190 : vector<8x1xf32>
      %cst_69 = arith.constant -7.10542735E-15 : f32
      %192 = vector.broadcast %cst_69 : f32 to vector<8x512xf32>
      %193 = arith.cmpf ole, %149, %192 : vector<8x512xf32>
      %cst_70 = arith.constant 0.000000e+00 : f32
      %194 = vector.broadcast %cst_70 : f32 to vector<8x512xf32>
      %195 = arith.select %193, %147, %194 : vector<8x512xi1>, vector<8x512xf32>
      %cst_71 = arith.constant dense<0.000000e+00> : vector<8xf32>
      %196 = vector.multi_reduction <add>, %195, %cst_71 [1] : vector<8x512xf32> to vector<8xf32>
      %197 = vector.shape_cast %196 : vector<8xf32> to vector<8x1xf32>
      %198 = arith.addf %arg13, %197 : vector<8x1xf32>
      %cst_72 = arith.constant 3.46410155 : f32
      %199 = vector.broadcast %cst_72 : f32 to vector<8x512xf32>
      %200 = arith.cmpf ole, %149, %199 : vector<8x512xf32>
      %cst_73 = arith.constant 0.000000e+00 : f32
      %201 = vector.broadcast %cst_73 : f32 to vector<8x512xf32>
      %202 = arith.select %200, %147, %201 : vector<8x512xi1>, vector<8x512xf32>
      %cst_74 = arith.constant dense<0.000000e+00> : vector<8xf32>
      %203 = vector.multi_reduction <add>, %202, %cst_74 [1] : vector<8x512xf32> to vector<8xf32>
      %204 = vector.shape_cast %203 : vector<8xf32> to vector<8x1xf32>
      %205 = arith.addf %arg14, %204 : vector<8x1xf32>
      %cst_75 = arith.constant 6.92820311 : f32
      %206 = vector.broadcast %cst_75 : f32 to vector<8x512xf32>
      %207 = arith.cmpf ole, %149, %206 : vector<8x512xf32>
      %cst_76 = arith.constant 0.000000e+00 : f32
      %208 = vector.broadcast %cst_76 : f32 to vector<8x512xf32>
      %209 = arith.select %207, %147, %208 : vector<8x512xi1>, vector<8x512xf32>
      %cst_77 = arith.constant dense<0.000000e+00> : vector<8xf32>
      %210 = vector.multi_reduction <add>, %209, %cst_77 [1] : vector<8x512xf32> to vector<8xf32>
      %211 = vector.shape_cast %210 : vector<8xf32> to vector<8x1xf32>
      %212 = arith.addf %arg15, %211 : vector<8x1xf32>
      %cst_78 = arith.constant 10.3923044 : f32
      %213 = vector.broadcast %cst_78 : f32 to vector<8x512xf32>
      %214 = arith.cmpf ole, %149, %213 : vector<8x512xf32>
      %cst_79 = arith.constant 0.000000e+00 : f32
      %215 = vector.broadcast %cst_79 : f32 to vector<8x512xf32>
      %216 = arith.select %214, %147, %215 : vector<8x512xi1>, vector<8x512xf32>
      %cst_80 = arith.constant dense<0.000000e+00> : vector<8xf32>
      %217 = vector.multi_reduction <add>, %216, %cst_80 [1] : vector<8x512xf32> to vector<8xf32>
      %218 = vector.shape_cast %217 : vector<8xf32> to vector<8x1xf32>
      %219 = arith.addf %arg16, %218 : vector<8x1xf32>
      %cst_81 = arith.constant 13.8564062 : f32
      %220 = vector.broadcast %cst_81 : f32 to vector<8x512xf32>
      %221 = arith.cmpf ole, %149, %220 : vector<8x512xf32>
      %cst_82 = arith.constant 0.000000e+00 : f32
      %222 = vector.broadcast %cst_82 : f32 to vector<8x512xf32>
      %223 = arith.select %221, %147, %222 : vector<8x512xi1>, vector<8x512xf32>
      %cst_83 = arith.constant dense<0.000000e+00> : vector<8xf32>
      %224 = vector.multi_reduction <add>, %223, %cst_83 [1] : vector<8x512xf32> to vector<8xf32>
      %225 = vector.shape_cast %224 : vector<8xf32> to vector<8x1xf32>
      %226 = arith.addf %arg17, %225 : vector<8x1xf32>
      %cst_84 = arith.constant 17.320509 : f32
      %227 = vector.broadcast %cst_84 : f32 to vector<8x512xf32>
      %228 = arith.cmpf ole, %149, %227 : vector<8x512xf32>
      %cst_85 = arith.constant 0.000000e+00 : f32
      %229 = vector.broadcast %cst_85 : f32 to vector<8x512xf32>
      %230 = arith.select %228, %147, %229 : vector<8x512xi1>, vector<8x512xf32>
      %cst_86 = arith.constant dense<0.000000e+00> : vector<8xf32>
      %231 = vector.multi_reduction <add>, %230, %cst_86 [1] : vector<8x512xf32> to vector<8xf32>
      %232 = vector.shape_cast %231 : vector<8xf32> to vector<8x1xf32>
      %233 = arith.addf %arg18, %232 : vector<8x1xf32>
      %cst_87 = arith.constant 20.7846088 : f32
      %234 = vector.broadcast %cst_87 : f32 to vector<8x512xf32>
      %235 = arith.cmpf ole, %149, %234 : vector<8x512xf32>
      %cst_88 = arith.constant 0.000000e+00 : f32
      %236 = vector.broadcast %cst_88 : f32 to vector<8x512xf32>
      %237 = arith.select %235, %147, %236 : vector<8x512xi1>, vector<8x512xf32>
      %cst_89 = arith.constant dense<0.000000e+00> : vector<8xf32>
      %238 = vector.multi_reduction <add>, %237, %cst_89 [1] : vector<8x512xf32> to vector<8xf32>
      %239 = vector.shape_cast %238 : vector<8xf32> to vector<8x1xf32>
      %240 = arith.addf %arg19, %239 : vector<8x1xf32>
      %c1_90 = arith.constant 1 : index
      %241 = arith.index_cast %126 : i32 to index
      %242 = vector.load %arg4[%c1_90, %241] : memref<8x1024xf32, #tpu.memory_space<vmem>>, vector<1x512xf32>
      %243 = vector.shape_cast %242 : vector<1x512xf32> to vector<1x512xf32>
      %244 = vector.broadcast %243 : vector<1x512xf32> to vector<8x512xf32>
      %245 = vector.broadcast %7 : vector<8x1xf32> to vector<8x512xf32>
      %246 = arith.addf %143, %245 : vector<8x512xf32>
      %cst_91 = arith.constant -20.7846088 : f32
      %247 = vector.broadcast %cst_91 : f32 to vector<8x512xf32>
      %248 = arith.cmpf ole, %246, %247 : vector<8x512xf32>
      %cst_92 = arith.constant 0.000000e+00 : f32
      %249 = vector.broadcast %cst_92 : f32 to vector<8x512xf32>
      %250 = arith.select %248, %244, %249 : vector<8x512xi1>, vector<8x512xf32>
      %cst_93 = arith.constant dense<0.000000e+00> : vector<8xf32>
      %251 = vector.multi_reduction <add>, %250, %cst_93 [1] : vector<8x512xf32> to vector<8xf32>
      %252 = vector.shape_cast %251 : vector<8xf32> to vector<8x1xf32>
      %253 = arith.addf %156, %252 : vector<8x1xf32>
      %cst_94 = arith.constant -17.320509 : f32
      %254 = vector.broadcast %cst_94 : f32 to vector<8x512xf32>
      %255 = arith.cmpf ole, %246, %254 : vector<8x512xf32>
      %cst_95 = arith.constant 0.000000e+00 : f32
      %256 = vector.broadcast %cst_95 : f32 to vector<8x512xf32>
      %257 = arith.select %255, %244, %256 : vector<8x512xi1>, vector<8x512xf32>
      %cst_96 = arith.constant dense<0.000000e+00> : vector<8xf32>
      %258 = vector.multi_reduction <add>, %257, %cst_96 [1] : vector<8x512xf32> to vector<8xf32>
      %259 = vector.shape_cast %258 : vector<8xf32> to vector<8x1xf32>
      %260 = arith.addf %163, %259 : vector<8x1xf32>
      %cst_97 = arith.constant -13.8564062 : f32
      %261 = vector.broadcast %cst_97 : f32 to vector<8x512xf32>
      %262 = arith.cmpf ole, %246, %261 : vector<8x512xf32>
      %cst_98 = arith.constant 0.000000e+00 : f32
      %263 = vector.broadcast %cst_98 : f32 to vector<8x512xf32>
      %264 = arith.select %262, %244, %263 : vector<8x512xi1>, vector<8x512xf32>
      %cst_99 = arith.constant dense<0.000000e+00> : vector<8xf32>
      %265 = vector.multi_reduction <add>, %264, %cst_99 [1] : vector<8x512xf32> to vector<8xf32>
      %266 = vector.shape_cast %265 : vector<8xf32> to vector<8x1xf32>
      %267 = arith.addf %170, %266 : vector<8x1xf32>
      %cst_100 = arith.constant -10.3923044 : f32
      %268 = vector.broadcast %cst_100 : f32 to vector<8x512xf32>
      %269 = arith.cmpf ole, %246, %268 : vector<8x512xf32>
      %cst_101 = arith.constant 0.000000e+00 : f32
      %270 = vector.broadcast %cst_101 : f32 to vector<8x512xf32>
      %271 = arith.select %269, %244, %270 : vector<8x512xi1>, vector<8x512xf32>
      %cst_102 = arith.constant dense<0.000000e+00> : vector<8xf32>
      %272 = vector.multi_reduction <add>, %271, %cst_102 [1] : vector<8x512xf32> to vector<8xf32>
      %273 = vector.shape_cast %272 : vector<8xf32> to vector<8x1xf32>
      %274 = arith.addf %177, %273 : vector<8x1xf32>
      %cst_103 = arith.constant -6.92820311 : f32
      %275 = vector.broadcast %cst_103 : f32 to vector<8x512xf32>
      %276 = arith.cmpf ole, %246, %275 : vector<8x512xf32>
      %cst_104 = arith.constant 0.000000e+00 : f32
      %277 = vector.broadcast %cst_104 : f32 to vector<8x512xf32>
      %278 = arith.select %276, %244, %277 : vector<8x512xi1>, vector<8x512xf32>
      %cst_105 = arith.constant dense<0.000000e+00> : vector<8xf32>
      %279 = vector.multi_reduction <add>, %278, %cst_105 [1] : vector<8x512xf32> to vector<8xf32>
      %280 = vector.shape_cast %279 : vector<8xf32> to vector<8x1xf32>
      %281 = arith.addf %184, %280 : vector<8x1xf32>
      %cst_106 = arith.constant -3.46410155 : f32
      %282 = vector.broadcast %cst_106 : f32 to vector<8x512xf32>
      %283 = arith.cmpf ole, %246, %282 : vector<8x512xf32>
      %cst_107 = arith.constant 0.000000e+00 : f32
      %284 = vector.broadcast %cst_107 : f32 to vector<8x512xf32>
      %285 = arith.select %283, %244, %284 : vector<8x512xi1>, vector<8x512xf32>
      %cst_108 = arith.constant dense<0.000000e+00> : vector<8xf32>
      %286 = vector.multi_reduction <add>, %285, %cst_108 [1] : vector<8x512xf32> to vector<8xf32>
      %287 = vector.shape_cast %286 : vector<8xf32> to vector<8x1xf32>
      %288 = arith.addf %191, %287 : vector<8x1xf32>
      %cst_109 = arith.constant -7.10542735E-15 : f32
      %289 = vector.broadcast %cst_109 : f32 to vector<8x512xf32>
      %290 = arith.cmpf ole, %246, %289 : vector<8x512xf32>
      %cst_110 = arith.constant 0.000000e+00 : f32
      %291 = vector.broadcast %cst_110 : f32 to vector<8x512xf32>
      %292 = arith.select %290, %244, %291 : vector<8x512xi1>, vector<8x512xf32>
      %cst_111 = arith.constant dense<0.000000e+00> : vector<8xf32>
      %293 = vector.multi_reduction <add>, %292, %cst_111 [1] : vector<8x512xf32> to vector<8xf32>
      %294 = vector.shape_cast %293 : vector<8xf32> to vector<8x1xf32>
      %295 = arith.addf %198, %294 : vector<8x1xf32>
      %cst_112 = arith.constant 3.46410155 : f32
      %296 = vector.broadcast %cst_112 : f32 to vector<8x512xf32>
      %297 = arith.cmpf ole, %246, %296 : vector<8x512xf32>
      %cst_113 = arith.constant 0.000000e+00 : f32
      %298 = vector.broadcast %cst_113 : f32 to vector<8x512xf32>
      %299 = arith.select %297, %244, %298 : vector<8x512xi1>, vector<8x512xf32>
      %cst_114 = arith.constant dense<0.000000e+00> : vector<8xf32>
      %300 = vector.multi_reduction <add>, %299, %cst_114 [1] : vector<8x512xf32> to vector<8xf32>
      %301 = vector.shape_cast %300 : vector<8xf32> to vector<8x1xf32>
      %302 = arith.addf %205, %301 : vector<8x1xf32>
      %cst_115 = arith.constant 6.92820311 : f32
      %303 = vector.broadcast %cst_115 : f32 to vector<8x512xf32>
      %304 = arith.cmpf ole, %246, %303 : vector<8x512xf32>
      %cst_116 = arith.constant 0.000000e+00 : f32
      %305 = vector.broadcast %cst_116 : f32 to vector<8x512xf32>
      %306 = arith.select %304, %244, %305 : vector<8x512xi1>, vector<8x512xf32>
      %cst_117 = arith.constant dense<0.000000e+00> : vector<8xf32>
      %307 = vector.multi_reduction <add>, %306, %cst_117 [1] : vector<8x512xf32> to vector<8xf32>
      %308 = vector.shape_cast %307 : vector<8xf32> to vector<8x1xf32>
      %309 = arith.addf %212, %308 : vector<8x1xf32>
      %cst_118 = arith.constant 10.3923044 : f32
      %310 = vector.broadcast %cst_118 : f32 to vector<8x512xf32>
      %311 = arith.cmpf ole, %246, %310 : vector<8x512xf32>
      %cst_119 = arith.constant 0.000000e+00 : f32
      %312 = vector.broadcast %cst_119 : f32 to vector<8x512xf32>
      %313 = arith.select %311, %244, %312 : vector<8x512xi1>, vector<8x512xf32>
      %cst_120 = arith.constant dense<0.000000e+00> : vector<8xf32>
      %314 = vector.multi_reduction <add>, %313, %cst_120 [1] : vector<8x512xf32> to vector<8xf32>
      %315 = vector.shape_cast %314 : vector<8xf32> to vector<8x1xf32>
      %316 = arith.addf %219, %315 : vector<8x1xf32>
      %cst_121 = arith.constant 13.8564062 : f32
      %317 = vector.broadcast %cst_121 : f32 to vector<8x512xf32>
      %318 = arith.cmpf ole, %246, %317 : vector<8x512xf32>
      %cst_122 = arith.constant 0.000000e+00 : f32
      %319 = vector.broadcast %cst_122 : f32 to vector<8x512xf32>
      %320 = arith.select %318, %244, %319 : vector<8x512xi1>, vector<8x512xf32>
      %cst_123 = arith.constant dense<0.000000e+00> : vector<8xf32>
      %321 = vector.multi_reduction <add>, %320, %cst_123 [1] : vector<8x512xf32> to vector<8xf32>
      %322 = vector.shape_cast %321 : vector<8xf32> to vector<8x1xf32>
      %323 = arith.addf %226, %322 : vector<8x1xf32>
      %cst_124 = arith.constant 17.320509 : f32
      %324 = vector.broadcast %cst_124 : f32 to vector<8x512xf32>
      %325 = arith.cmpf ole, %246, %324 : vector<8x512xf32>
      %cst_125 = arith.constant 0.000000e+00 : f32
      %326 = vector.broadcast %cst_125 : f32 to vector<8x512xf32>
      %327 = arith.select %325, %244, %326 : vector<8x512xi1>, vector<8x512xf32>
      %cst_126 = arith.constant dense<0.000000e+00> : vector<8xf32>
      %328 = vector.multi_reduction <add>, %327, %cst_126 [1] : vector<8x512xf32> to vector<8xf32>
      %329 = vector.shape_cast %328 : vector<8xf32> to vector<8x1xf32>
      %330 = arith.addf %233, %329 : vector<8x1xf32>
      %cst_127 = arith.constant 20.7846088 : f32
      %331 = vector.broadcast %cst_127 : f32 to vector<8x512xf32>
      %332 = arith.cmpf ole, %246, %331 : vector<8x512xf32>
      %cst_128 = arith.constant 0.000000e+00 : f32
      %333 = vector.broadcast %cst_128 : f32 to vector<8x512xf32>
      %334 = arith.select %332, %244, %333 : vector<8x512xi1>, vector<8x512xf32>
      %cst_129 = arith.constant dense<0.000000e+00> : vector<8xf32>
      %335 = vector.multi_reduction <add>, %334, %cst_129 [1] : vector<8x512xf32> to vector<8xf32>
      %336 = vector.shape_cast %335 : vector<8xf32> to vector<8x1xf32>
      %337 = arith.addf %240, %336 : vector<8x1xf32>
      %c2_130 = arith.constant 2 : index
      %338 = arith.index_cast %126 : i32 to index
      %339 = vector.load %arg4[%c2_130, %338] : memref<8x1024xf32, #tpu.memory_space<vmem>>, vector<1x512xf32>
      %340 = vector.shape_cast %339 : vector<1x512xf32> to vector<1x512xf32>
      %341 = vector.broadcast %340 : vector<1x512xf32> to vector<8x512xf32>
      %342 = vector.broadcast %8 : vector<8x1xf32> to vector<8x512xf32>
      %343 = arith.addf %143, %342 : vector<8x512xf32>
      %cst_131 = arith.constant -20.7846088 : f32
      %344 = vector.broadcast %cst_131 : f32 to vector<8x512xf32>
      %345 = arith.cmpf ole, %343, %344 : vector<8x512xf32>
      %cst_132 = arith.constant 0.000000e+00 : f32
      %346 = vector.broadcast %cst_132 : f32 to vector<8x512xf32>
      %347 = arith.select %345, %341, %346 : vector<8x512xi1>, vector<8x512xf32>
      %cst_133 = arith.constant dense<0.000000e+00> : vector<8xf32>
      %348 = vector.multi_reduction <add>, %347, %cst_133 [1] : vector<8x512xf32> to vector<8xf32>
      %349 = vector.shape_cast %348 : vector<8xf32> to vector<8x1xf32>
      %350 = arith.addf %253, %349 : vector<8x1xf32>
      %cst_134 = arith.constant -17.320509 : f32
      %351 = vector.broadcast %cst_134 : f32 to vector<8x512xf32>
      %352 = arith.cmpf ole, %343, %351 : vector<8x512xf32>
      %cst_135 = arith.constant 0.000000e+00 : f32
      %353 = vector.broadcast %cst_135 : f32 to vector<8x512xf32>
      %354 = arith.select %352, %341, %353 : vector<8x512xi1>, vector<8x512xf32>
      %cst_136 = arith.constant dense<0.000000e+00> : vector<8xf32>
      %355 = vector.multi_reduction <add>, %354, %cst_136 [1] : vector<8x512xf32> to vector<8xf32>
      %356 = vector.shape_cast %355 : vector<8xf32> to vector<8x1xf32>
      %357 = arith.addf %260, %356 : vector<8x1xf32>
      %cst_137 = arith.constant -13.8564062 : f32
      %358 = vector.broadcast %cst_137 : f32 to vector<8x512xf32>
      %359 = arith.cmpf ole, %343, %358 : vector<8x512xf32>
      %cst_138 = arith.constant 0.000000e+00 : f32
      %360 = vector.broadcast %cst_138 : f32 to vector<8x512xf32>
      %361 = arith.select %359, %341, %360 : vector<8x512xi1>, vector<8x512xf32>
      %cst_139 = arith.constant dense<0.000000e+00> : vector<8xf32>
      %362 = vector.multi_reduction <add>, %361, %cst_139 [1] : vector<8x512xf32> to vector<8xf32>
      %363 = vector.shape_cast %362 : vector<8xf32> to vector<8x1xf32>
      %364 = arith.addf %267, %363 : vector<8x1xf32>
      %cst_140 = arith.constant -10.3923044 : f32
      %365 = vector.broadcast %cst_140 : f32 to vector<8x512xf32>
      %366 = arith.cmpf ole, %343, %365 : vector<8x512xf32>
      %cst_141 = arith.constant 0.000000e+00 : f32
      %367 = vector.broadcast %cst_141 : f32 to vector<8x512xf32>
      %368 = arith.select %366, %341, %367 : vector<8x512xi1>, vector<8x512xf32>
      %cst_142 = arith.constant dense<0.000000e+00> : vector<8xf32>
      %369 = vector.multi_reduction <add>, %368, %cst_142 [1] : vector<8x512xf32> to vector<8xf32>
      %370 = vector.shape_cast %369 : vector<8xf32> to vector<8x1xf32>
      %371 = arith.addf %274, %370 : vector<8x1xf32>
      %cst_143 = arith.constant -6.92820311 : f32
      %372 = vector.broadcast %cst_143 : f32 to vector<8x512xf32>
      %373 = arith.cmpf ole, %343, %372 : vector<8x512xf32>
      %cst_144 = arith.constant 0.000000e+00 : f32
      %374 = vector.broadcast %cst_144 : f32 to vector<8x512xf32>
      %375 = arith.select %373, %341, %374 : vector<8x512xi1>, vector<8x512xf32>
      %cst_145 = arith.constant dense<0.000000e+00> : vector<8xf32>
      %376 = vector.multi_reduction <add>, %375, %cst_145 [1] : vector<8x512xf32> to vector<8xf32>
      %377 = vector.shape_cast %376 : vector<8xf32> to vector<8x1xf32>
      %378 = arith.addf %281, %377 : vector<8x1xf32>
      %cst_146 = arith.constant -3.46410155 : f32
      %379 = vector.broadcast %cst_146 : f32 to vector<8x512xf32>
      %380 = arith.cmpf ole, %343, %379 : vector<8x512xf32>
      %cst_147 = arith.constant 0.000000e+00 : f32
      %381 = vector.broadcast %cst_147 : f32 to vector<8x512xf32>
      %382 = arith.select %380, %341, %381 : vector<8x512xi1>, vector<8x512xf32>
      %cst_148 = arith.constant dense<0.000000e+00> : vector<8xf32>
      %383 = vector.multi_reduction <add>, %382, %cst_148 [1] : vector<8x512xf32> to vector<8xf32>
      %384 = vector.shape_cast %383 : vector<8xf32> to vector<8x1xf32>
      %385 = arith.addf %288, %384 : vector<8x1xf32>
      %cst_149 = arith.constant -7.10542735E-15 : f32
      %386 = vector.broadcast %cst_149 : f32 to vector<8x512xf32>
      %387 = arith.cmpf ole, %343, %386 : vector<8x512xf32>
      %cst_150 = arith.constant 0.000000e+00 : f32
      %388 = vector.broadcast %cst_150 : f32 to vector<8x512xf32>
      %389 = arith.select %387, %341, %388 : vector<8x512xi1>, vector<8x512xf32>
      %cst_151 = arith.constant dense<0.000000e+00> : vector<8xf32>
      %390 = vector.multi_reduction <add>, %389, %cst_151 [1] : vector<8x512xf32> to vector<8xf32>
      %391 = vector.shape_cast %390 : vector<8xf32> to vector<8x1xf32>
      %392 = arith.addf %295, %391 : vector<8x1xf32>
      %cst_152 = arith.constant 3.46410155 : f32
      %393 = vector.broadcast %cst_152 : f32 to vector<8x512xf32>
      %394 = arith.cmpf ole, %343, %393 : vector<8x512xf32>
      %cst_153 = arith.constant 0.000000e+00 : f32
      %395 = vector.broadcast %cst_153 : f32 to vector<8x512xf32>
      %396 = arith.select %394, %341, %395 : vector<8x512xi1>, vector<8x512xf32>
      %cst_154 = arith.constant dense<0.000000e+00> : vector<8xf32>
      %397 = vector.multi_reduction <add>, %396, %cst_154 [1] : vector<8x512xf32> to vector<8xf32>
      %398 = vector.shape_cast %397 : vector<8xf32> to vector<8x1xf32>
      %399 = arith.addf %302, %398 : vector<8x1xf32>
      %cst_155 = arith.constant 6.92820311 : f32
      %400 = vector.broadcast %cst_155 : f32 to vector<8x512xf32>
      %401 = arith.cmpf ole, %343, %400 : vector<8x512xf32>
      %cst_156 = arith.constant 0.000000e+00 : f32
      %402 = vector.broadcast %cst_156 : f32 to vector<8x512xf32>
      %403 = arith.select %401, %341, %402 : vector<8x512xi1>, vector<8x512xf32>
      %cst_157 = arith.constant dense<0.000000e+00> : vector<8xf32>
      %404 = vector.multi_reduction <add>, %403, %cst_157 [1] : vector<8x512xf32> to vector<8xf32>
      %405 = vector.shape_cast %404 : vector<8xf32> to vector<8x1xf32>
      %406 = arith.addf %309, %405 : vector<8x1xf32>
      %cst_158 = arith.constant 10.3923044 : f32
      %407 = vector.broadcast %cst_158 : f32 to vector<8x512xf32>
      %408 = arith.cmpf ole, %343, %407 : vector<8x512xf32>
      %cst_159 = arith.constant 0.000000e+00 : f32
      %409 = vector.broadcast %cst_159 : f32 to vector<8x512xf32>
      %410 = arith.select %408, %341, %409 : vector<8x512xi1>, vector<8x512xf32>
      %cst_160 = arith.constant dense<0.000000e+00> : vector<8xf32>
      %411 = vector.multi_reduction <add>, %410, %cst_160 [1] : vector<8x512xf32> to vector<8xf32>
      %412 = vector.shape_cast %411 : vector<8xf32> to vector<8x1xf32>
      %413 = arith.addf %316, %412 : vector<8x1xf32>
      %cst_161 = arith.constant 13.8564062 : f32
      %414 = vector.broadcast %cst_161 : f32 to vector<8x512xf32>
      %415 = arith.cmpf ole, %343, %414 : vector<8x512xf32>
      %cst_162 = arith.constant 0.000000e+00 : f32
      %416 = vector.broadcast %cst_162 : f32 to vector<8x512xf32>
      %417 = arith.select %415, %341, %416 : vector<8x512xi1>, vector<8x512xf32>
      %cst_163 = arith.constant dense<0.000000e+00> : vector<8xf32>
      %418 = vector.multi_reduction <add>, %417, %cst_163 [1] : vector<8x512xf32> to vector<8xf32>
      %419 = vector.shape_cast %418 : vector<8xf32> to vector<8x1xf32>
      %420 = arith.addf %323, %419 : vector<8x1xf32>
      %cst_164 = arith.constant 17.320509 : f32
      %421 = vector.broadcast %cst_164 : f32 to vector<8x512xf32>
      %422 = arith.cmpf ole, %343, %421 : vector<8x512xf32>
      %cst_165 = arith.constant 0.000000e+00 : f32
      %423 = vector.broadcast %cst_165 : f32 to vector<8x512xf32>
      %424 = arith.select %422, %341, %423 : vector<8x512xi1>, vector<8x512xf32>
      %cst_166 = arith.constant dense<0.000000e+00> : vector<8xf32>
      %425 = vector.multi_reduction <add>, %424, %cst_166 [1] : vector<8x512xf32> to vector<8xf32>
      %426 = vector.shape_cast %425 : vector<8xf32> to vector<8x1xf32>
      %427 = arith.addf %330, %426 : vector<8x1xf32>
      %cst_167 = arith.constant 20.7846088 : f32
      %428 = vector.broadcast %cst_167 : f32 to vector<8x512xf32>
      %429 = arith.cmpf ole, %343, %428 : vector<8x512xf32>
      %cst_168 = arith.constant 0.000000e+00 : f32
      %430 = vector.broadcast %cst_168 : f32 to vector<8x512xf32>
      %431 = arith.select %429, %341, %430 : vector<8x512xi1>, vector<8x512xf32>
      %cst_169 = arith.constant dense<0.000000e+00> : vector<8xf32>
      %432 = vector.multi_reduction <add>, %431, %cst_169 [1] : vector<8x512xf32> to vector<8xf32>
      %433 = vector.shape_cast %432 : vector<8xf32> to vector<8x1xf32>
      %434 = arith.addf %337, %433 : vector<8x1xf32>
      %c3_170 = arith.constant 3 : index
      %435 = arith.index_cast %126 : i32 to index
      %436 = vector.load %arg4[%c3_170, %435] : memref<8x1024xf32, #tpu.memory_space<vmem>>, vector<1x512xf32>
      %437 = vector.shape_cast %436 : vector<1x512xf32> to vector<1x512xf32>
      %438 = vector.broadcast %437 : vector<1x512xf32> to vector<8x512xf32>
      %439 = vector.broadcast %9 : vector<8x1xf32> to vector<8x512xf32>
      %440 = arith.addf %143, %439 : vector<8x512xf32>
      %cst_171 = arith.constant -20.7846088 : f32
      %441 = vector.broadcast %cst_171 : f32 to vector<8x512xf32>
      %442 = arith.cmpf ole, %440, %441 : vector<8x512xf32>
      %cst_172 = arith.constant 0.000000e+00 : f32
      %443 = vector.broadcast %cst_172 : f32 to vector<8x512xf32>
      %444 = arith.select %442, %438, %443 : vector<8x512xi1>, vector<8x512xf32>
      %cst_173 = arith.constant dense<0.000000e+00> : vector<8xf32>
      %445 = vector.multi_reduction <add>, %444, %cst_173 [1] : vector<8x512xf32> to vector<8xf32>
      %446 = vector.shape_cast %445 : vector<8xf32> to vector<8x1xf32>
      %447 = arith.addf %350, %446 : vector<8x1xf32>
      %cst_174 = arith.constant -17.320509 : f32
      %448 = vector.broadcast %cst_174 : f32 to vector<8x512xf32>
      %449 = arith.cmpf ole, %440, %448 : vector<8x512xf32>
      %cst_175 = arith.constant 0.000000e+00 : f32
      %450 = vector.broadcast %cst_175 : f32 to vector<8x512xf32>
      %451 = arith.select %449, %438, %450 : vector<8x512xi1>, vector<8x512xf32>
      %cst_176 = arith.constant dense<0.000000e+00> : vector<8xf32>
      %452 = vector.multi_reduction <add>, %451, %cst_176 [1] : vector<8x512xf32> to vector<8xf32>
      %453 = vector.shape_cast %452 : vector<8xf32> to vector<8x1xf32>
      %454 = arith.addf %357, %453 : vector<8x1xf32>
      %cst_177 = arith.constant -13.8564062 : f32
      %455 = vector.broadcast %cst_177 : f32 to vector<8x512xf32>
      %456 = arith.cmpf ole, %440, %455 : vector<8x512xf32>
      %cst_178 = arith.constant 0.000000e+00 : f32
      %457 = vector.broadcast %cst_178 : f32 to vector<8x512xf32>
      %458 = arith.select %456, %438, %457 : vector<8x512xi1>, vector<8x512xf32>
      %cst_179 = arith.constant dense<0.000000e+00> : vector<8xf32>
      %459 = vector.multi_reduction <add>, %458, %cst_179 [1] : vector<8x512xf32> to vector<8xf32>
      %460 = vector.shape_cast %459 : vector<8xf32> to vector<8x1xf32>
      %461 = arith.addf %364, %460 : vector<8x1xf32>
      %cst_180 = arith.constant -10.3923044 : f32
      %462 = vector.broadcast %cst_180 : f32 to vector<8x512xf32>
      %463 = arith.cmpf ole, %440, %462 : vector<8x512xf32>
      %cst_181 = arith.constant 0.000000e+00 : f32
      %464 = vector.broadcast %cst_181 : f32 to vector<8x512xf32>
      %465 = arith.select %463, %438, %464 : vector<8x512xi1>, vector<8x512xf32>
      %cst_182 = arith.constant dense<0.000000e+00> : vector<8xf32>
      %466 = vector.multi_reduction <add>, %465, %cst_182 [1] : vector<8x512xf32> to vector<8xf32>
      %467 = vector.shape_cast %466 : vector<8xf32> to vector<8x1xf32>
      %468 = arith.addf %371, %467 : vector<8x1xf32>
      %cst_183 = arith.constant -6.92820311 : f32
      %469 = vector.broadcast %cst_183 : f32 to vector<8x512xf32>
      %470 = arith.cmpf ole, %440, %469 : vector<8x512xf32>
      %cst_184 = arith.constant 0.000000e+00 : f32
      %471 = vector.broadcast %cst_184 : f32 to vector<8x512xf32>
      %472 = arith.select %470, %438, %471 : vector<8x512xi1>, vector<8x512xf32>
      %cst_185 = arith.constant dense<0.000000e+00> : vector<8xf32>
      %473 = vector.multi_reduction <add>, %472, %cst_185 [1] : vector<8x512xf32> to vector<8xf32>
      %474 = vector.shape_cast %473 : vector<8xf32> to vector<8x1xf32>
      %475 = arith.addf %378, %474 : vector<8x1xf32>
      %cst_186 = arith.constant -3.46410155 : f32
      %476 = vector.broadcast %cst_186 : f32 to vector<8x512xf32>
      %477 = arith.cmpf ole, %440, %476 : vector<8x512xf32>
      %cst_187 = arith.constant 0.000000e+00 : f32
      %478 = vector.broadcast %cst_187 : f32 to vector<8x512xf32>
      %479 = arith.select %477, %438, %478 : vector<8x512xi1>, vector<8x512xf32>
      %cst_188 = arith.constant dense<0.000000e+00> : vector<8xf32>
      %480 = vector.multi_reduction <add>, %479, %cst_188 [1] : vector<8x512xf32> to vector<8xf32>
      %481 = vector.shape_cast %480 : vector<8xf32> to vector<8x1xf32>
      %482 = arith.addf %385, %481 : vector<8x1xf32>
      %cst_189 = arith.constant -7.10542735E-15 : f32
      %483 = vector.broadcast %cst_189 : f32 to vector<8x512xf32>
      %484 = arith.cmpf ole, %440, %483 : vector<8x512xf32>
      %cst_190 = arith.constant 0.000000e+00 : f32
      %485 = vector.broadcast %cst_190 : f32 to vector<8x512xf32>
      %486 = arith.select %484, %438, %485 : vector<8x512xi1>, vector<8x512xf32>
      %cst_191 = arith.constant dense<0.000000e+00> : vector<8xf32>
      %487 = vector.multi_reduction <add>, %486, %cst_191 [1] : vector<8x512xf32> to vector<8xf32>
      %488 = vector.shape_cast %487 : vector<8xf32> to vector<8x1xf32>
      %489 = arith.addf %392, %488 : vector<8x1xf32>
      %cst_192 = arith.constant 3.46410155 : f32
      %490 = vector.broadcast %cst_192 : f32 to vector<8x512xf32>
      %491 = arith.cmpf ole, %440, %490 : vector<8x512xf32>
      %cst_193 = arith.constant 0.000000e+00 : f32
      %492 = vector.broadcast %cst_193 : f32 to vector<8x512xf32>
      %493 = arith.select %491, %438, %492 : vector<8x512xi1>, vector<8x512xf32>
      %cst_194 = arith.constant dense<0.000000e+00> : vector<8xf32>
      %494 = vector.multi_reduction <add>, %493, %cst_194 [1] : vector<8x512xf32> to vector<8xf32>
      %495 = vector.shape_cast %494 : vector<8xf32> to vector<8x1xf32>
      %496 = arith.addf %399, %495 : vector<8x1xf32>
      %cst_195 = arith.constant 6.92820311 : f32
      %497 = vector.broadcast %cst_195 : f32 to vector<8x512xf32>
      %498 = arith.cmpf ole, %440, %497 : vector<8x512xf32>
      %cst_196 = arith.constant 0.000000e+00 : f32
      %499 = vector.broadcast %cst_196 : f32 to vector<8x512xf32>
      %500 = arith.select %498, %438, %499 : vector<8x512xi1>, vector<8x512xf32>
      %cst_197 = arith.constant dense<0.000000e+00> : vector<8xf32>
      %501 = vector.multi_reduction <add>, %500, %cst_197 [1] : vector<8x512xf32> to vector<8xf32>
      %502 = vector.shape_cast %501 : vector<8xf32> to vector<8x1xf32>
      %503 = arith.addf %406, %502 : vector<8x1xf32>
      %cst_198 = arith.constant 10.3923044 : f32
      %504 = vector.broadcast %cst_198 : f32 to vector<8x512xf32>
      %505 = arith.cmpf ole, %440, %504 : vector<8x512xf32>
      %cst_199 = arith.constant 0.000000e+00 : f32
      %506 = vector.broadcast %cst_199 : f32 to vector<8x512xf32>
      %507 = arith.select %505, %438, %506 : vector<8x512xi1>, vector<8x512xf32>
      %cst_200 = arith.constant dense<0.000000e+00> : vector<8xf32>
      %508 = vector.multi_reduction <add>, %507, %cst_200 [1] : vector<8x512xf32> to vector<8xf32>
      %509 = vector.shape_cast %508 : vector<8xf32> to vector<8x1xf32>
      %510 = arith.addf %413, %509 : vector<8x1xf32>
      %cst_201 = arith.constant 13.8564062 : f32
      %511 = vector.broadcast %cst_201 : f32 to vector<8x512xf32>
      %512 = arith.cmpf ole, %440, %511 : vector<8x512xf32>
      %cst_202 = arith.constant 0.000000e+00 : f32
      %513 = vector.broadcast %cst_202 : f32 to vector<8x512xf32>
      %514 = arith.select %512, %438, %513 : vector<8x512xi1>, vector<8x512xf32>
      %cst_203 = arith.constant dense<0.000000e+00> : vector<8xf32>
      %515 = vector.multi_reduction <add>, %514, %cst_203 [1] : vector<8x512xf32> to vector<8xf32>
      %516 = vector.shape_cast %515 : vector<8xf32> to vector<8x1xf32>
      %517 = arith.addf %420, %516 : vector<8x1xf32>
      %cst_204 = arith.constant 17.320509 : f32
      %518 = vector.broadcast %cst_204 : f32 to vector<8x512xf32>
      %519 = arith.cmpf ole, %440, %518 : vector<8x512xf32>
      %cst_205 = arith.constant 0.000000e+00 : f32
      %520 = vector.broadcast %cst_205 : f32 to vector<8x512xf32>
      %521 = arith.select %519, %438, %520 : vector<8x512xi1>, vector<8x512xf32>
      %cst_206 = arith.constant dense<0.000000e+00> : vector<8xf32>
      %522 = vector.multi_reduction <add>, %521, %cst_206 [1] : vector<8x512xf32> to vector<8xf32>
      %523 = vector.shape_cast %522 : vector<8xf32> to vector<8x1xf32>
      %524 = arith.addf %427, %523 : vector<8x1xf32>
      %cst_207 = arith.constant 20.7846088 : f32
      %525 = vector.broadcast %cst_207 : f32 to vector<8x512xf32>
      %526 = arith.cmpf ole, %440, %525 : vector<8x512xf32>
      %cst_208 = arith.constant 0.000000e+00 : f32
      %527 = vector.broadcast %cst_208 : f32 to vector<8x512xf32>
      %528 = arith.select %526, %438, %527 : vector<8x512xi1>, vector<8x512xf32>
      %cst_209 = arith.constant dense<0.000000e+00> : vector<8xf32>
      %529 = vector.multi_reduction <add>, %528, %cst_209 [1] : vector<8x512xf32> to vector<8xf32>
      %530 = vector.shape_cast %529 : vector<8xf32> to vector<8x1xf32>
      %531 = arith.addf %434, %530 : vector<8x1xf32>
      %c4_210 = arith.constant 4 : index
      %532 = arith.index_cast %126 : i32 to index
      %533 = vector.load %arg4[%c4_210, %532] : memref<8x1024xf32, #tpu.memory_space<vmem>>, vector<1x512xf32>
      %534 = vector.shape_cast %533 : vector<1x512xf32> to vector<1x512xf32>
      %535 = vector.broadcast %534 : vector<1x512xf32> to vector<8x512xf32>
      %536 = vector.broadcast %10 : vector<8x1xf32> to vector<8x512xf32>
      %537 = arith.addf %143, %536 : vector<8x512xf32>
      %cst_211 = arith.constant -20.7846088 : f32
      %538 = vector.broadcast %cst_211 : f32 to vector<8x512xf32>
      %539 = arith.cmpf ole, %537, %538 : vector<8x512xf32>
      %cst_212 = arith.constant 0.000000e+00 : f32
      %540 = vector.broadcast %cst_212 : f32 to vector<8x512xf32>
      %541 = arith.select %539, %535, %540 : vector<8x512xi1>, vector<8x512xf32>
      %cst_213 = arith.constant dense<0.000000e+00> : vector<8xf32>
      %542 = vector.multi_reduction <add>, %541, %cst_213 [1] : vector<8x512xf32> to vector<8xf32>
      %543 = vector.shape_cast %542 : vector<8xf32> to vector<8x1xf32>
      %544 = arith.addf %447, %543 : vector<8x1xf32>
      %cst_214 = arith.constant -17.320509 : f32
      %545 = vector.broadcast %cst_214 : f32 to vector<8x512xf32>
      %546 = arith.cmpf ole, %537, %545 : vector<8x512xf32>
      %cst_215 = arith.constant 0.000000e+00 : f32
      %547 = vector.broadcast %cst_215 : f32 to vector<8x512xf32>
      %548 = arith.select %546, %535, %547 : vector<8x512xi1>, vector<8x512xf32>
      %cst_216 = arith.constant dense<0.000000e+00> : vector<8xf32>
      %549 = vector.multi_reduction <add>, %548, %cst_216 [1] : vector<8x512xf32> to vector<8xf32>
      %550 = vector.shape_cast %549 : vector<8xf32> to vector<8x1xf32>
      %551 = arith.addf %454, %550 : vector<8x1xf32>
      %cst_217 = arith.constant -13.8564062 : f32
      %552 = vector.broadcast %cst_217 : f32 to vector<8x512xf32>
      %553 = arith.cmpf ole, %537, %552 : vector<8x512xf32>
      %cst_218 = arith.constant 0.000000e+00 : f32
      %554 = vector.broadcast %cst_218 : f32 to vector<8x512xf32>
      %555 = arith.select %553, %535, %554 : vector<8x512xi1>, vector<8x512xf32>
      %cst_219 = arith.constant dense<0.000000e+00> : vector<8xf32>
      %556 = vector.multi_reduction <add>, %555, %cst_219 [1] : vector<8x512xf32> to vector<8xf32>
      %557 = vector.shape_cast %556 : vector<8xf32> to vector<8x1xf32>
      %558 = arith.addf %461, %557 : vector<8x1xf32>
      %cst_220 = arith.constant -10.3923044 : f32
      %559 = vector.broadcast %cst_220 : f32 to vector<8x512xf32>
      %560 = arith.cmpf ole, %537, %559 : vector<8x512xf32>
      %cst_221 = arith.constant 0.000000e+00 : f32
      %561 = vector.broadcast %cst_221 : f32 to vector<8x512xf32>
      %562 = arith.select %560, %535, %561 : vector<8x512xi1>, vector<8x512xf32>
      %cst_222 = arith.constant dense<0.000000e+00> : vector<8xf32>
      %563 = vector.multi_reduction <add>, %562, %cst_222 [1] : vector<8x512xf32> to vector<8xf32>
      %564 = vector.shape_cast %563 : vector<8xf32> to vector<8x1xf32>
      %565 = arith.addf %468, %564 : vector<8x1xf32>
      %cst_223 = arith.constant -6.92820311 : f32
      %566 = vector.broadcast %cst_223 : f32 to vector<8x512xf32>
      %567 = arith.cmpf ole, %537, %566 : vector<8x512xf32>
      %cst_224 = arith.constant 0.000000e+00 : f32
      %568 = vector.broadcast %cst_224 : f32 to vector<8x512xf32>
      %569 = arith.select %567, %535, %568 : vector<8x512xi1>, vector<8x512xf32>
      %cst_225 = arith.constant dense<0.000000e+00> : vector<8xf32>
      %570 = vector.multi_reduction <add>, %569, %cst_225 [1] : vector<8x512xf32> to vector<8xf32>
      %571 = vector.shape_cast %570 : vector<8xf32> to vector<8x1xf32>
      %572 = arith.addf %475, %571 : vector<8x1xf32>
      %cst_226 = arith.constant -3.46410155 : f32
      %573 = vector.broadcast %cst_226 : f32 to vector<8x512xf32>
      %574 = arith.cmpf ole, %537, %573 : vector<8x512xf32>
      %cst_227 = arith.constant 0.000000e+00 : f32
      %575 = vector.broadcast %cst_227 : f32 to vector<8x512xf32>
      %576 = arith.select %574, %535, %575 : vector<8x512xi1>, vector<8x512xf32>
      %cst_228 = arith.constant dense<0.000000e+00> : vector<8xf32>
      %577 = vector.multi_reduction <add>, %576, %cst_228 [1] : vector<8x512xf32> to vector<8xf32>
      %578 = vector.shape_cast %577 : vector<8xf32> to vector<8x1xf32>
      %579 = arith.addf %482, %578 : vector<8x1xf32>
      %cst_229 = arith.constant -7.10542735E-15 : f32
      %580 = vector.broadcast %cst_229 : f32 to vector<8x512xf32>
      %581 = arith.cmpf ole, %537, %580 : vector<8x512xf32>
      %cst_230 = arith.constant 0.000000e+00 : f32
      %582 = vector.broadcast %cst_230 : f32 to vector<8x512xf32>
      %583 = arith.select %581, %535, %582 : vector<8x512xi1>, vector<8x512xf32>
      %cst_231 = arith.constant dense<0.000000e+00> : vector<8xf32>
      %584 = vector.multi_reduction <add>, %583, %cst_231 [1] : vector<8x512xf32> to vector<8xf32>
      %585 = vector.shape_cast %584 : vector<8xf32> to vector<8x1xf32>
      %586 = arith.addf %489, %585 : vector<8x1xf32>
      %cst_232 = arith.constant 3.46410155 : f32
      %587 = vector.broadcast %cst_232 : f32 to vector<8x512xf32>
      %588 = arith.cmpf ole, %537, %587 : vector<8x512xf32>
      %cst_233 = arith.constant 0.000000e+00 : f32
      %589 = vector.broadcast %cst_233 : f32 to vector<8x512xf32>
      %590 = arith.select %588, %535, %589 : vector<8x512xi1>, vector<8x512xf32>
      %cst_234 = arith.constant dense<0.000000e+00> : vector<8xf32>
      %591 = vector.multi_reduction <add>, %590, %cst_234 [1] : vector<8x512xf32> to vector<8xf32>
      %592 = vector.shape_cast %591 : vector<8xf32> to vector<8x1xf32>
      %593 = arith.addf %496, %592 : vector<8x1xf32>
      %cst_235 = arith.constant 6.92820311 : f32
      %594 = vector.broadcast %cst_235 : f32 to vector<8x512xf32>
      %595 = arith.cmpf ole, %537, %594 : vector<8x512xf32>
      %cst_236 = arith.constant 0.000000e+00 : f32
      %596 = vector.broadcast %cst_236 : f32 to vector<8x512xf32>
      %597 = arith.select %595, %535, %596 : vector<8x512xi1>, vector<8x512xf32>
      %cst_237 = arith.constant dense<0.000000e+00> : vector<8xf32>
      %598 = vector.multi_reduction <add>, %597, %cst_237 [1] : vector<8x512xf32> to vector<8xf32>
      %599 = vector.shape_cast %598 : vector<8xf32> to vector<8x1xf32>
      %600 = arith.addf %503, %599 : vector<8x1xf32>
      %cst_238 = arith.constant 10.3923044 : f32
      %601 = vector.broadcast %cst_238 : f32 to vector<8x512xf32>
      %602 = arith.cmpf ole, %537, %601 : vector<8x512xf32>
      %cst_239 = arith.constant 0.000000e+00 : f32
      %603 = vector.broadcast %cst_239 : f32 to vector<8x512xf32>
      %604 = arith.select %602, %535, %603 : vector<8x512xi1>, vector<8x512xf32>
      %cst_240 = arith.constant dense<0.000000e+00> : vector<8xf32>
      %605 = vector.multi_reduction <add>, %604, %cst_240 [1] : vector<8x512xf32> to vector<8xf32>
      %606 = vector.shape_cast %605 : vector<8xf32> to vector<8x1xf32>
      %607 = arith.addf %510, %606 : vector<8x1xf32>
      %cst_241 = arith.constant 13.8564062 : f32
      %608 = vector.broadcast %cst_241 : f32 to vector<8x512xf32>
      %609 = arith.cmpf ole, %537, %608 : vector<8x512xf32>
      %cst_242 = arith.constant 0.000000e+00 : f32
      %610 = vector.broadcast %cst_242 : f32 to vector<8x512xf32>
      %611 = arith.select %609, %535, %610 : vector<8x512xi1>, vector<8x512xf32>
      %cst_243 = arith.constant dense<0.000000e+00> : vector<8xf32>
      %612 = vector.multi_reduction <add>, %611, %cst_243 [1] : vector<8x512xf32> to vector<8xf32>
      %613 = vector.shape_cast %612 : vector<8xf32> to vector<8x1xf32>
      %614 = arith.addf %517, %613 : vector<8x1xf32>
      %cst_244 = arith.constant 17.320509 : f32
      %615 = vector.broadcast %cst_244 : f32 to vector<8x512xf32>
      %616 = arith.cmpf ole, %537, %615 : vector<8x512xf32>
      %cst_245 = arith.constant 0.000000e+00 : f32
      %617 = vector.broadcast %cst_245 : f32 to vector<8x512xf32>
      %618 = arith.select %616, %535, %617 : vector<8x512xi1>, vector<8x512xf32>
      %cst_246 = arith.constant dense<0.000000e+00> : vector<8xf32>
      %619 = vector.multi_reduction <add>, %618, %cst_246 [1] : vector<8x512xf32> to vector<8xf32>
      %620 = vector.shape_cast %619 : vector<8xf32> to vector<8x1xf32>
      %621 = arith.addf %524, %620 : vector<8x1xf32>
      %cst_247 = arith.constant 20.7846088 : f32
      %622 = vector.broadcast %cst_247 : f32 to vector<8x512xf32>
      %623 = arith.cmpf ole, %537, %622 : vector<8x512xf32>
      %cst_248 = arith.constant 0.000000e+00 : f32
      %624 = vector.broadcast %cst_248 : f32 to vector<8x512xf32>
      %625 = arith.select %623, %535, %624 : vector<8x512xi1>, vector<8x512xf32>
      %cst_249 = arith.constant dense<0.000000e+00> : vector<8xf32>
      %626 = vector.multi_reduction <add>, %625, %cst_249 [1] : vector<8x512xf32> to vector<8xf32>
      %627 = vector.shape_cast %626 : vector<8xf32> to vector<8x1xf32>
      %628 = arith.addf %531, %627 : vector<8x1xf32>
      %c5_250 = arith.constant 5 : index
      %629 = arith.index_cast %126 : i32 to index
      %630 = vector.load %arg4[%c5_250, %629] : memref<8x1024xf32, #tpu.memory_space<vmem>>, vector<1x512xf32>
      %631 = vector.shape_cast %630 : vector<1x512xf32> to vector<1x512xf32>
      %632 = vector.broadcast %631 : vector<1x512xf32> to vector<8x512xf32>
      %633 = vector.broadcast %11 : vector<8x1xf32> to vector<8x512xf32>
      %634 = arith.addf %143, %633 : vector<8x512xf32>
      %cst_251 = arith.constant -20.7846088 : f32
      %635 = vector.broadcast %cst_251 : f32 to vector<8x512xf32>
      %636 = arith.cmpf ole, %634, %635 : vector<8x512xf32>
      %cst_252 = arith.constant 0.000000e+00 : f32
      %637 = vector.broadcast %cst_252 : f32 to vector<8x512xf32>
      %638 = arith.select %636, %632, %637 : vector<8x512xi1>, vector<8x512xf32>
      %cst_253 = arith.constant dense<0.000000e+00> : vector<8xf32>
      %639 = vector.multi_reduction <add>, %638, %cst_253 [1] : vector<8x512xf32> to vector<8xf32>
      %640 = vector.shape_cast %639 : vector<8xf32> to vector<8x1xf32>
      %641 = arith.addf %544, %640 : vector<8x1xf32>
      %cst_254 = arith.constant -17.320509 : f32
      %642 = vector.broadcast %cst_254 : f32 to vector<8x512xf32>
      %643 = arith.cmpf ole, %634, %642 : vector<8x512xf32>
      %cst_255 = arith.constant 0.000000e+00 : f32
      %644 = vector.broadcast %cst_255 : f32 to vector<8x512xf32>
      %645 = arith.select %643, %632, %644 : vector<8x512xi1>, vector<8x512xf32>
      %cst_256 = arith.constant dense<0.000000e+00> : vector<8xf32>
      %646 = vector.multi_reduction <add>, %645, %cst_256 [1] : vector<8x512xf32> to vector<8xf32>
      %647 = vector.shape_cast %646 : vector<8xf32> to vector<8x1xf32>
      %648 = arith.addf %551, %647 : vector<8x1xf32>
      %cst_257 = arith.constant -13.8564062 : f32
      %649 = vector.broadcast %cst_257 : f32 to vector<8x512xf32>
      %650 = arith.cmpf ole, %634, %649 : vector<8x512xf32>
      %cst_258 = arith.constant 0.000000e+00 : f32
      %651 = vector.broadcast %cst_258 : f32 to vector<8x512xf32>
      %652 = arith.select %650, %632, %651 : vector<8x512xi1>, vector<8x512xf32>
      %cst_259 = arith.constant dense<0.000000e+00> : vector<8xf32>
      %653 = vector.multi_reduction <add>, %652, %cst_259 [1] : vector<8x512xf32> to vector<8xf32>
      %654 = vector.shape_cast %653 : vector<8xf32> to vector<8x1xf32>
      %655 = arith.addf %558, %654 : vector<8x1xf32>
      %cst_260 = arith.constant -10.3923044 : f32
      %656 = vector.broadcast %cst_260 : f32 to vector<8x512xf32>
      %657 = arith.cmpf ole, %634, %656 : vector<8x512xf32>
      %cst_261 = arith.constant 0.000000e+00 : f32
      %658 = vector.broadcast %cst_261 : f32 to vector<8x512xf32>
      %659 = arith.select %657, %632, %658 : vector<8x512xi1>, vector<8x512xf32>
      %cst_262 = arith.constant dense<0.000000e+00> : vector<8xf32>
      %660 = vector.multi_reduction <add>, %659, %cst_262 [1] : vector<8x512xf32> to vector<8xf32>
      %661 = vector.shape_cast %660 : vector<8xf32> to vector<8x1xf32>
      %662 = arith.addf %565, %661 : vector<8x1xf32>
      %cst_263 = arith.constant -6.92820311 : f32
      %663 = vector.broadcast %cst_263 : f32 to vector<8x512xf32>
      %664 = arith.cmpf ole, %634, %663 : vector<8x512xf32>
      %cst_264 = arith.constant 0.000000e+00 : f32
      %665 = vector.broadcast %cst_264 : f32 to vector<8x512xf32>
      %666 = arith.select %664, %632, %665 : vector<8x512xi1>, vector<8x512xf32>
      %cst_265 = arith.constant dense<0.000000e+00> : vector<8xf32>
      %667 = vector.multi_reduction <add>, %666, %cst_265 [1] : vector<8x512xf32> to vector<8xf32>
      %668 = vector.shape_cast %667 : vector<8xf32> to vector<8x1xf32>
      %669 = arith.addf %572, %668 : vector<8x1xf32>
      %cst_266 = arith.constant -3.46410155 : f32
      %670 = vector.broadcast %cst_266 : f32 to vector<8x512xf32>
      %671 = arith.cmpf ole, %634, %670 : vector<8x512xf32>
      %cst_267 = arith.constant 0.000000e+00 : f32
      %672 = vector.broadcast %cst_267 : f32 to vector<8x512xf32>
      %673 = arith.select %671, %632, %672 : vector<8x512xi1>, vector<8x512xf32>
      %cst_268 = arith.constant dense<0.000000e+00> : vector<8xf32>
      %674 = vector.multi_reduction <add>, %673, %cst_268 [1] : vector<8x512xf32> to vector<8xf32>
      %675 = vector.shape_cast %674 : vector<8xf32> to vector<8x1xf32>
      %676 = arith.addf %579, %675 : vector<8x1xf32>
      %cst_269 = arith.constant -7.10542735E-15 : f32
      %677 = vector.broadcast %cst_269 : f32 to vector<8x512xf32>
      %678 = arith.cmpf ole, %634, %677 : vector<8x512xf32>
      %cst_270 = arith.constant 0.000000e+00 : f32
      %679 = vector.broadcast %cst_270 : f32 to vector<8x512xf32>
      %680 = arith.select %678, %632, %679 : vector<8x512xi1>, vector<8x512xf32>
      %cst_271 = arith.constant dense<0.000000e+00> : vector<8xf32>
      %681 = vector.multi_reduction <add>, %680, %cst_271 [1] : vector<8x512xf32> to vector<8xf32>
      %682 = vector.shape_cast %681 : vector<8xf32> to vector<8x1xf32>
      %683 = arith.addf %586, %682 : vector<8x1xf32>
      %cst_272 = arith.constant 3.46410155 : f32
      %684 = vector.broadcast %cst_272 : f32 to vector<8x512xf32>
      %685 = arith.cmpf ole, %634, %684 : vector<8x512xf32>
      %cst_273 = arith.constant 0.000000e+00 : f32
      %686 = vector.broadcast %cst_273 : f32 to vector<8x512xf32>
      %687 = arith.select %685, %632, %686 : vector<8x512xi1>, vector<8x512xf32>
      %cst_274 = arith.constant dense<0.000000e+00> : vector<8xf32>
      %688 = vector.multi_reduction <add>, %687, %cst_274 [1] : vector<8x512xf32> to vector<8xf32>
      %689 = vector.shape_cast %688 : vector<8xf32> to vector<8x1xf32>
      %690 = arith.addf %593, %689 : vector<8x1xf32>
      %cst_275 = arith.constant 6.92820311 : f32
      %691 = vector.broadcast %cst_275 : f32 to vector<8x512xf32>
      %692 = arith.cmpf ole, %634, %691 : vector<8x512xf32>
      %cst_276 = arith.constant 0.000000e+00 : f32
      %693 = vector.broadcast %cst_276 : f32 to vector<8x512xf32>
      %694 = arith.select %692, %632, %693 : vector<8x512xi1>, vector<8x512xf32>
      %cst_277 = arith.constant dense<0.000000e+00> : vector<8xf32>
      %695 = vector.multi_reduction <add>, %694, %cst_277 [1] : vector<8x512xf32> to vector<8xf32>
      %696 = vector.shape_cast %695 : vector<8xf32> to vector<8x1xf32>
      %697 = arith.addf %600, %696 : vector<8x1xf32>
      %cst_278 = arith.constant 10.3923044 : f32
      %698 = vector.broadcast %cst_278 : f32 to vector<8x512xf32>
      %699 = arith.cmpf ole, %634, %698 : vector<8x512xf32>
      %cst_279 = arith.constant 0.000000e+00 : f32
      %700 = vector.broadcast %cst_279 : f32 to vector<8x512xf32>
      %701 = arith.select %699, %632, %700 : vector<8x512xi1>, vector<8x512xf32>
      %cst_280 = arith.constant dense<0.000000e+00> : vector<8xf32>
      %702 = vector.multi_reduction <add>, %701, %cst_280 [1] : vector<8x512xf32> to vector<8xf32>
      %703 = vector.shape_cast %702 : vector<8xf32> to vector<8x1xf32>
      %704 = arith.addf %607, %703 : vector<8x1xf32>
      %cst_281 = arith.constant 13.8564062 : f32
      %705 = vector.broadcast %cst_281 : f32 to vector<8x512xf32>
      %706 = arith.cmpf ole, %634, %705 : vector<8x512xf32>
      %cst_282 = arith.constant 0.000000e+00 : f32
      %707 = vector.broadcast %cst_282 : f32 to vector<8x512xf32>
      %708 = arith.select %706, %632, %707 : vector<8x512xi1>, vector<8x512xf32>
      %cst_283 = arith.constant dense<0.000000e+00> : vector<8xf32>
      %709 = vector.multi_reduction <add>, %708, %cst_283 [1] : vector<8x512xf32> to vector<8xf32>
      %710 = vector.shape_cast %709 : vector<8xf32> to vector<8x1xf32>
      %711 = arith.addf %614, %710 : vector<8x1xf32>
      %cst_284 = arith.constant 17.320509 : f32
      %712 = vector.broadcast %cst_284 : f32 to vector<8x512xf32>
      %713 = arith.cmpf ole, %634, %712 : vector<8x512xf32>
      %cst_285 = arith.constant 0.000000e+00 : f32
      %714 = vector.broadcast %cst_285 : f32 to vector<8x512xf32>
      %715 = arith.select %713, %632, %714 : vector<8x512xi1>, vector<8x512xf32>
      %cst_286 = arith.constant dense<0.000000e+00> : vector<8xf32>
      %716 = vector.multi_reduction <add>, %715, %cst_286 [1] : vector<8x512xf32> to vector<8xf32>
      %717 = vector.shape_cast %716 : vector<8xf32> to vector<8x1xf32>
      %718 = arith.addf %621, %717 : vector<8x1xf32>
      %cst_287 = arith.constant 20.7846088 : f32
      %719 = vector.broadcast %cst_287 : f32 to vector<8x512xf32>
      %720 = arith.cmpf ole, %634, %719 : vector<8x512xf32>
      %cst_288 = arith.constant 0.000000e+00 : f32
      %721 = vector.broadcast %cst_288 : f32 to vector<8x512xf32>
      %722 = arith.select %720, %632, %721 : vector<8x512xi1>, vector<8x512xf32>
      %cst_289 = arith.constant dense<0.000000e+00> : vector<8xf32>
      %723 = vector.multi_reduction <add>, %722, %cst_289 [1] : vector<8x512xf32> to vector<8xf32>
      %724 = vector.shape_cast %723 : vector<8xf32> to vector<8x1xf32>
      %725 = arith.addf %628, %724 : vector<8x1xf32>
      %c6_290 = arith.constant 6 : index
      %726 = arith.index_cast %126 : i32 to index
      %727 = vector.load %arg4[%c6_290, %726] : memref<8x1024xf32, #tpu.memory_space<vmem>>, vector<1x512xf32>
      %728 = vector.shape_cast %727 : vector<1x512xf32> to vector<1x512xf32>
      %729 = vector.broadcast %728 : vector<1x512xf32> to vector<8x512xf32>
      %730 = vector.broadcast %12 : vector<8x1xf32> to vector<8x512xf32>
      %731 = arith.addf %143, %730 : vector<8x512xf32>
      %cst_291 = arith.constant -20.7846088 : f32
      %732 = vector.broadcast %cst_291 : f32 to vector<8x512xf32>
      %733 = arith.cmpf ole, %731, %732 : vector<8x512xf32>
      %cst_292 = arith.constant 0.000000e+00 : f32
      %734 = vector.broadcast %cst_292 : f32 to vector<8x512xf32>
      %735 = arith.select %733, %729, %734 : vector<8x512xi1>, vector<8x512xf32>
      %cst_293 = arith.constant dense<0.000000e+00> : vector<8xf32>
      %736 = vector.multi_reduction <add>, %735, %cst_293 [1] : vector<8x512xf32> to vector<8xf32>
      %737 = vector.shape_cast %736 : vector<8xf32> to vector<8x1xf32>
      %738 = arith.addf %641, %737 : vector<8x1xf32>
      %cst_294 = arith.constant -17.320509 : f32
      %739 = vector.broadcast %cst_294 : f32 to vector<8x512xf32>
      %740 = arith.cmpf ole, %731, %739 : vector<8x512xf32>
      %cst_295 = arith.constant 0.000000e+00 : f32
      %741 = vector.broadcast %cst_295 : f32 to vector<8x512xf32>
      %742 = arith.select %740, %729, %741 : vector<8x512xi1>, vector<8x512xf32>
      %cst_296 = arith.constant dense<0.000000e+00> : vector<8xf32>
      %743 = vector.multi_reduction <add>, %742, %cst_296 [1] : vector<8x512xf32> to vector<8xf32>
      %744 = vector.shape_cast %743 : vector<8xf32> to vector<8x1xf32>
      %745 = arith.addf %648, %744 : vector<8x1xf32>
      %cst_297 = arith.constant -13.8564062 : f32
      %746 = vector.broadcast %cst_297 : f32 to vector<8x512xf32>
      %747 = arith.cmpf ole, %731, %746 : vector<8x512xf32>
      %cst_298 = arith.constant 0.000000e+00 : f32
      %748 = vector.broadcast %cst_298 : f32 to vector<8x512xf32>
      %749 = arith.select %747, %729, %748 : vector<8x512xi1>, vector<8x512xf32>
      %cst_299 = arith.constant dense<0.000000e+00> : vector<8xf32>
      %750 = vector.multi_reduction <add>, %749, %cst_299 [1] : vector<8x512xf32> to vector<8xf32>
      %751 = vector.shape_cast %750 : vector<8xf32> to vector<8x1xf32>
      %752 = arith.addf %655, %751 : vector<8x1xf32>
      %cst_300 = arith.constant -10.3923044 : f32
      %753 = vector.broadcast %cst_300 : f32 to vector<8x512xf32>
      %754 = arith.cmpf ole, %731, %753 : vector<8x512xf32>
      %cst_301 = arith.constant 0.000000e+00 : f32
      %755 = vector.broadcast %cst_301 : f32 to vector<8x512xf32>
      %756 = arith.select %754, %729, %755 : vector<8x512xi1>, vector<8x512xf32>
      %cst_302 = arith.constant dense<0.000000e+00> : vector<8xf32>
      %757 = vector.multi_reduction <add>, %756, %cst_302 [1] : vector<8x512xf32> to vector<8xf32>
      %758 = vector.shape_cast %757 : vector<8xf32> to vector<8x1xf32>
      %759 = arith.addf %662, %758 : vector<8x1xf32>
      %cst_303 = arith.constant -6.92820311 : f32
      %760 = vector.broadcast %cst_303 : f32 to vector<8x512xf32>
      %761 = arith.cmpf ole, %731, %760 : vector<8x512xf32>
      %cst_304 = arith.constant 0.000000e+00 : f32
      %762 = vector.broadcast %cst_304 : f32 to vector<8x512xf32>
      %763 = arith.select %761, %729, %762 : vector<8x512xi1>, vector<8x512xf32>
      %cst_305 = arith.constant dense<0.000000e+00> : vector<8xf32>
      %764 = vector.multi_reduction <add>, %763, %cst_305 [1] : vector<8x512xf32> to vector<8xf32>
      %765 = vector.shape_cast %764 : vector<8xf32> to vector<8x1xf32>
      %766 = arith.addf %669, %765 : vector<8x1xf32>
      %cst_306 = arith.constant -3.46410155 : f32
      %767 = vector.broadcast %cst_306 : f32 to vector<8x512xf32>
      %768 = arith.cmpf ole, %731, %767 : vector<8x512xf32>
      %cst_307 = arith.constant 0.000000e+00 : f32
      %769 = vector.broadcast %cst_307 : f32 to vector<8x512xf32>
      %770 = arith.select %768, %729, %769 : vector<8x512xi1>, vector<8x512xf32>
      %cst_308 = arith.constant dense<0.000000e+00> : vector<8xf32>
      %771 = vector.multi_reduction <add>, %770, %cst_308 [1] : vector<8x512xf32> to vector<8xf32>
      %772 = vector.shape_cast %771 : vector<8xf32> to vector<8x1xf32>
      %773 = arith.addf %676, %772 : vector<8x1xf32>
      %cst_309 = arith.constant -7.10542735E-15 : f32
      %774 = vector.broadcast %cst_309 : f32 to vector<8x512xf32>
      %775 = arith.cmpf ole, %731, %774 : vector<8x512xf32>
      %cst_310 = arith.constant 0.000000e+00 : f32
      %776 = vector.broadcast %cst_310 : f32 to vector<8x512xf32>
      %777 = arith.select %775, %729, %776 : vector<8x512xi1>, vector<8x512xf32>
      %cst_311 = arith.constant dense<0.000000e+00> : vector<8xf32>
      %778 = vector.multi_reduction <add>, %777, %cst_311 [1] : vector<8x512xf32> to vector<8xf32>
      %779 = vector.shape_cast %778 : vector<8xf32> to vector<8x1xf32>
      %780 = arith.addf %683, %779 : vector<8x1xf32>
      %cst_312 = arith.constant 3.46410155 : f32
      %781 = vector.broadcast %cst_312 : f32 to vector<8x512xf32>
      %782 = arith.cmpf ole, %731, %781 : vector<8x512xf32>
      %cst_313 = arith.constant 0.000000e+00 : f32
      %783 = vector.broadcast %cst_313 : f32 to vector<8x512xf32>
      %784 = arith.select %782, %729, %783 : vector<8x512xi1>, vector<8x512xf32>
      %cst_314 = arith.constant dense<0.000000e+00> : vector<8xf32>
      %785 = vector.multi_reduction <add>, %784, %cst_314 [1] : vector<8x512xf32> to vector<8xf32>
      %786 = vector.shape_cast %785 : vector<8xf32> to vector<8x1xf32>
      %787 = arith.addf %690, %786 : vector<8x1xf32>
      %cst_315 = arith.constant 6.92820311 : f32
      %788 = vector.broadcast %cst_315 : f32 to vector<8x512xf32>
      %789 = arith.cmpf ole, %731, %788 : vector<8x512xf32>
      %cst_316 = arith.constant 0.000000e+00 : f32
      %790 = vector.broadcast %cst_316 : f32 to vector<8x512xf32>
      %791 = arith.select %789, %729, %790 : vector<8x512xi1>, vector<8x512xf32>
      %cst_317 = arith.constant dense<0.000000e+00> : vector<8xf32>
      %792 = vector.multi_reduction <add>, %791, %cst_317 [1] : vector<8x512xf32> to vector<8xf32>
      %793 = vector.shape_cast %792 : vector<8xf32> to vector<8x1xf32>
      %794 = arith.addf %697, %793 : vector<8x1xf32>
      %cst_318 = arith.constant 10.3923044 : f32
      %795 = vector.broadcast %cst_318 : f32 to vector<8x512xf32>
      %796 = arith.cmpf ole, %731, %795 : vector<8x512xf32>
      %cst_319 = arith.constant 0.000000e+00 : f32
      %797 = vector.broadcast %cst_319 : f32 to vector<8x512xf32>
      %798 = arith.select %796, %729, %797 : vector<8x512xi1>, vector<8x512xf32>
      %cst_320 = arith.constant dense<0.000000e+00> : vector<8xf32>
      %799 = vector.multi_reduction <add>, %798, %cst_320 [1] : vector<8x512xf32> to vector<8xf32>
      %800 = vector.shape_cast %799 : vector<8xf32> to vector<8x1xf32>
      %801 = arith.addf %704, %800 : vector<8x1xf32>
      %cst_321 = arith.constant 13.8564062 : f32
      %802 = vector.broadcast %cst_321 : f32 to vector<8x512xf32>
      %803 = arith.cmpf ole, %731, %802 : vector<8x512xf32>
      %cst_322 = arith.constant 0.000000e+00 : f32
      %804 = vector.broadcast %cst_322 : f32 to vector<8x512xf32>
      %805 = arith.select %803, %729, %804 : vector<8x512xi1>, vector<8x512xf32>
      %cst_323 = arith.constant dense<0.000000e+00> : vector<8xf32>
      %806 = vector.multi_reduction <add>, %805, %cst_323 [1] : vector<8x512xf32> to vector<8xf32>
      %807 = vector.shape_cast %806 : vector<8xf32> to vector<8x1xf32>
      %808 = arith.addf %711, %807 : vector<8x1xf32>
      %cst_324 = arith.constant 17.320509 : f32
      %809 = vector.broadcast %cst_324 : f32 to vector<8x512xf32>
      %810 = arith.cmpf ole, %731, %809 : vector<8x512xf32>
      %cst_325 = arith.constant 0.000000e+00 : f32
      %811 = vector.broadcast %cst_325 : f32 to vector<8x512xf32>
      %812 = arith.select %810, %729, %811 : vector<8x512xi1>, vector<8x512xf32>
      %cst_326 = arith.constant dense<0.000000e+00> : vector<8xf32>
      %813 = vector.multi_reduction <add>, %812, %cst_326 [1] : vector<8x512xf32> to vector<8xf32>
      %814 = vector.shape_cast %813 : vector<8xf32> to vector<8x1xf32>
      %815 = arith.addf %718, %814 : vector<8x1xf32>
      %cst_327 = arith.constant 20.7846088 : f32
      %816 = vector.broadcast %cst_327 : f32 to vector<8x512xf32>
      %817 = arith.cmpf ole, %731, %816 : vector<8x512xf32>
      %cst_328 = arith.constant 0.000000e+00 : f32
      %818 = vector.broadcast %cst_328 : f32 to vector<8x512xf32>
      %819 = arith.select %817, %729, %818 : vector<8x512xi1>, vector<8x512xf32>
      %cst_329 = arith.constant dense<0.000000e+00> : vector<8xf32>
      %820 = vector.multi_reduction <add>, %819, %cst_329 [1] : vector<8x512xf32> to vector<8xf32>
      %821 = vector.shape_cast %820 : vector<8xf32> to vector<8x1xf32>
      %822 = arith.addf %725, %821 : vector<8x1xf32>
      %c7_330 = arith.constant 7 : index
      %823 = arith.index_cast %126 : i32 to index
      %824 = vector.load %arg4[%c7_330, %823] : memref<8x1024xf32, #tpu.memory_space<vmem>>, vector<1x512xf32>
      %825 = vector.shape_cast %824 : vector<1x512xf32> to vector<1x512xf32>
      %826 = vector.broadcast %825 : vector<1x512xf32> to vector<8x512xf32>
      %827 = vector.broadcast %13 : vector<8x1xf32> to vector<8x512xf32>
      %828 = arith.addf %143, %827 : vector<8x512xf32>
      %cst_331 = arith.constant -20.7846088 : f32
      %829 = vector.broadcast %cst_331 : f32 to vector<8x512xf32>
      %830 = arith.cmpf ole, %828, %829 : vector<8x512xf32>
      %cst_332 = arith.constant 0.000000e+00 : f32
      %831 = vector.broadcast %cst_332 : f32 to vector<8x512xf32>
      %832 = arith.select %830, %826, %831 : vector<8x512xi1>, vector<8x512xf32>
      %cst_333 = arith.constant dense<0.000000e+00> : vector<8xf32>
      %833 = vector.multi_reduction <add>, %832, %cst_333 [1] : vector<8x512xf32> to vector<8xf32>
      %834 = vector.shape_cast %833 : vector<8xf32> to vector<8x1xf32>
      %835 = arith.addf %738, %834 : vector<8x1xf32>
      %cst_334 = arith.constant -17.320509 : f32
      %836 = vector.broadcast %cst_334 : f32 to vector<8x512xf32>
      %837 = arith.cmpf ole, %828, %836 : vector<8x512xf32>
      %cst_335 = arith.constant 0.000000e+00 : f32
      %838 = vector.broadcast %cst_335 : f32 to vector<8x512xf32>
      %839 = arith.select %837, %826, %838 : vector<8x512xi1>, vector<8x512xf32>
      %cst_336 = arith.constant dense<0.000000e+00> : vector<8xf32>
      %840 = vector.multi_reduction <add>, %839, %cst_336 [1] : vector<8x512xf32> to vector<8xf32>
      %841 = vector.shape_cast %840 : vector<8xf32> to vector<8x1xf32>
      %842 = arith.addf %745, %841 : vector<8x1xf32>
      %cst_337 = arith.constant -13.8564062 : f32
      %843 = vector.broadcast %cst_337 : f32 to vector<8x512xf32>
      %844 = arith.cmpf ole, %828, %843 : vector<8x512xf32>
      %cst_338 = arith.constant 0.000000e+00 : f32
      %845 = vector.broadcast %cst_338 : f32 to vector<8x512xf32>
      %846 = arith.select %844, %826, %845 : vector<8x512xi1>, vector<8x512xf32>
      %cst_339 = arith.constant dense<0.000000e+00> : vector<8xf32>
      %847 = vector.multi_reduction <add>, %846, %cst_339 [1] : vector<8x512xf32> to vector<8xf32>
      %848 = vector.shape_cast %847 : vector<8xf32> to vector<8x1xf32>
      %849 = arith.addf %752, %848 : vector<8x1xf32>
      %cst_340 = arith.constant -10.3923044 : f32
      %850 = vector.broadcast %cst_340 : f32 to vector<8x512xf32>
      %851 = arith.cmpf ole, %828, %850 : vector<8x512xf32>
      %cst_341 = arith.constant 0.000000e+00 : f32
      %852 = vector.broadcast %cst_341 : f32 to vector<8x512xf32>
      %853 = arith.select %851, %826, %852 : vector<8x512xi1>, vector<8x512xf32>
      %cst_342 = arith.constant dense<0.000000e+00> : vector<8xf32>
      %854 = vector.multi_reduction <add>, %853, %cst_342 [1] : vector<8x512xf32> to vector<8xf32>
      %855 = vector.shape_cast %854 : vector<8xf32> to vector<8x1xf32>
      %856 = arith.addf %759, %855 : vector<8x1xf32>
      %cst_343 = arith.constant -6.92820311 : f32
      %857 = vector.broadcast %cst_343 : f32 to vector<8x512xf32>
      %858 = arith.cmpf ole, %828, %857 : vector<8x512xf32>
      %cst_344 = arith.constant 0.000000e+00 : f32
      %859 = vector.broadcast %cst_344 : f32 to vector<8x512xf32>
      %860 = arith.select %858, %826, %859 : vector<8x512xi1>, vector<8x512xf32>
      %cst_345 = arith.constant dense<0.000000e+00> : vector<8xf32>
      %861 = vector.multi_reduction <add>, %860, %cst_345 [1] : vector<8x512xf32> to vector<8xf32>
      %862 = vector.shape_cast %861 : vector<8xf32> to vector<8x1xf32>
      %863 = arith.addf %766, %862 : vector<8x1xf32>
      %cst_346 = arith.constant -3.46410155 : f32
      %864 = vector.broadcast %cst_346 : f32 to vector<8x512xf32>
      %865 = arith.cmpf ole, %828, %864 : vector<8x512xf32>
      %cst_347 = arith.constant 0.000000e+00 : f32
      %866 = vector.broadcast %cst_347 : f32 to vector<8x512xf32>
      %867 = arith.select %865, %826, %866 : vector<8x512xi1>, vector<8x512xf32>
      %cst_348 = arith.constant dense<0.000000e+00> : vector<8xf32>
      %868 = vector.multi_reduction <add>, %867, %cst_348 [1] : vector<8x512xf32> to vector<8xf32>
      %869 = vector.shape_cast %868 : vector<8xf32> to vector<8x1xf32>
      %870 = arith.addf %773, %869 : vector<8x1xf32>
      %cst_349 = arith.constant -7.10542735E-15 : f32
      %871 = vector.broadcast %cst_349 : f32 to vector<8x512xf32>
      %872 = arith.cmpf ole, %828, %871 : vector<8x512xf32>
      %cst_350 = arith.constant 0.000000e+00 : f32
      %873 = vector.broadcast %cst_350 : f32 to vector<8x512xf32>
      %874 = arith.select %872, %826, %873 : vector<8x512xi1>, vector<8x512xf32>
      %cst_351 = arith.constant dense<0.000000e+00> : vector<8xf32>
      %875 = vector.multi_reduction <add>, %874, %cst_351 [1] : vector<8x512xf32> to vector<8xf32>
      %876 = vector.shape_cast %875 : vector<8xf32> to vector<8x1xf32>
      %877 = arith.addf %780, %876 : vector<8x1xf32>
      %cst_352 = arith.constant 3.46410155 : f32
      %878 = vector.broadcast %cst_352 : f32 to vector<8x512xf32>
      %879 = arith.cmpf ole, %828, %878 : vector<8x512xf32>
      %cst_353 = arith.constant 0.000000e+00 : f32
      %880 = vector.broadcast %cst_353 : f32 to vector<8x512xf32>
      %881 = arith.select %879, %826, %880 : vector<8x512xi1>, vector<8x512xf32>
      %cst_354 = arith.constant dense<0.000000e+00> : vector<8xf32>
      %882 = vector.multi_reduction <add>, %881, %cst_354 [1] : vector<8x512xf32> to vector<8xf32>
      %883 = vector.shape_cast %882 : vector<8xf32> to vector<8x1xf32>
      %884 = arith.addf %787, %883 : vector<8x1xf32>
      %cst_355 = arith.constant 6.92820311 : f32
      %885 = vector.broadcast %cst_355 : f32 to vector<8x512xf32>
      %886 = arith.cmpf ole, %828, %885 : vector<8x512xf32>
      %cst_356 = arith.constant 0.000000e+00 : f32
      %887 = vector.broadcast %cst_356 : f32 to vector<8x512xf32>
      %888 = arith.select %886, %826, %887 : vector<8x512xi1>, vector<8x512xf32>
      %cst_357 = arith.constant dense<0.000000e+00> : vector<8xf32>
      %889 = vector.multi_reduction <add>, %888, %cst_357 [1] : vector<8x512xf32> to vector<8xf32>
      %890 = vector.shape_cast %889 : vector<8xf32> to vector<8x1xf32>
      %891 = arith.addf %794, %890 : vector<8x1xf32>
      %cst_358 = arith.constant 10.3923044 : f32
      %892 = vector.broadcast %cst_358 : f32 to vector<8x512xf32>
      %893 = arith.cmpf ole, %828, %892 : vector<8x512xf32>
      %cst_359 = arith.constant 0.000000e+00 : f32
      %894 = vector.broadcast %cst_359 : f32 to vector<8x512xf32>
      %895 = arith.select %893, %826, %894 : vector<8x512xi1>, vector<8x512xf32>
      %cst_360 = arith.constant dense<0.000000e+00> : vector<8xf32>
      %896 = vector.multi_reduction <add>, %895, %cst_360 [1] : vector<8x512xf32> to vector<8xf32>
      %897 = vector.shape_cast %896 : vector<8xf32> to vector<8x1xf32>
      %898 = arith.addf %801, %897 : vector<8x1xf32>
      %cst_361 = arith.constant 13.8564062 : f32
      %899 = vector.broadcast %cst_361 : f32 to vector<8x512xf32>
      %900 = arith.cmpf ole, %828, %899 : vector<8x512xf32>
      %cst_362 = arith.constant 0.000000e+00 : f32
      %901 = vector.broadcast %cst_362 : f32 to vector<8x512xf32>
      %902 = arith.select %900, %826, %901 : vector<8x512xi1>, vector<8x512xf32>
      %cst_363 = arith.constant dense<0.000000e+00> : vector<8xf32>
      %903 = vector.multi_reduction <add>, %902, %cst_363 [1] : vector<8x512xf32> to vector<8xf32>
      %904 = vector.shape_cast %903 : vector<8xf32> to vector<8x1xf32>
      %905 = arith.addf %808, %904 : vector<8x1xf32>
      %cst_364 = arith.constant 17.320509 : f32
      %906 = vector.broadcast %cst_364 : f32 to vector<8x512xf32>
      %907 = arith.cmpf ole, %828, %906 : vector<8x512xf32>
      %cst_365 = arith.constant 0.000000e+00 : f32
      %908 = vector.broadcast %cst_365 : f32 to vector<8x512xf32>
      %909 = arith.select %907, %826, %908 : vector<8x512xi1>, vector<8x512xf32>
      %cst_366 = arith.constant dense<0.000000e+00> : vector<8xf32>
      %910 = vector.multi_reduction <add>, %909, %cst_366 [1] : vector<8x512xf32> to vector<8xf32>
      %911 = vector.shape_cast %910 : vector<8xf32> to vector<8x1xf32>
      %912 = arith.addf %815, %911 : vector<8x1xf32>
      %cst_367 = arith.constant 20.7846088 : f32
      %913 = vector.broadcast %cst_367 : f32 to vector<8x512xf32>
      %914 = arith.cmpf ole, %828, %913 : vector<8x512xf32>
      %cst_368 = arith.constant 0.000000e+00 : f32
      %915 = vector.broadcast %cst_368 : f32 to vector<8x512xf32>
      %916 = arith.select %914, %826, %915 : vector<8x512xi1>, vector<8x512xf32>
      %cst_369 = arith.constant dense<0.000000e+00> : vector<8xf32>
      %917 = vector.multi_reduction <add>, %916, %cst_369 [1] : vector<8x512xf32> to vector<8xf32>
      %918 = vector.shape_cast %917 : vector<8xf32> to vector<8x1xf32>
      %919 = arith.addf %822, %918 : vector<8x1xf32>
      scf.yield %835, %842, %849, %856, %863, %870, %877, %884, %891, %898, %905, %912, %919 : vector<8x1xf32>, vector<8x1xf32>, vector<8x1xf32>, vector<8x1xf32>, vector<8x1xf32>, vector<8x1xf32>, vector<8x1xf32>, vector<8x1xf32>, vector<8x1xf32>, vector<8x1xf32>, vector<8x1xf32>, vector<8x1xf32>, vector<8x1xf32>
    }
    %c2_i32_25 = arith.constant 2 : i32
    %29 = tpu.iota {dimensions = array<i32: 1>} : vector<8x128xi32>
    %cst_26 = arith.constant 0.000000e+00 : f32
    %30 = vector.broadcast %cst_26 : f32 to vector<8x128xf32>
    %c0_i32_27 = arith.constant 0 : i32
    %31 = vector.broadcast %c0_i32_27 : i32 to vector<8x128xi32>
    %32 = arith.cmpi eq, %29, %31 : vector<8x128xi32>
    %cst_28 = arith.constant 0.000000e+00 : f32
    %33 = vector.shape_cast %28#0 : vector<8x1xf32> to vector<8x1xf32>
    %34 = vector.broadcast %33 : vector<8x1xf32> to vector<8x128xf32>
    %35 = vector.broadcast %cst_28 : f32 to vector<8x128xf32>
    %36 = arith.select %32, %34, %35 : vector<8x128xi1>, vector<8x128xf32>
    %37 = arith.addf %30, %36 : vector<8x128xf32>
    %c1_i32_29 = arith.constant 1 : i32
    %38 = vector.broadcast %c1_i32_29 : i32 to vector<8x128xi32>
    %39 = arith.cmpi eq, %29, %38 : vector<8x128xi32>
    %cst_30 = arith.constant 0.000000e+00 : f32
    %40 = vector.shape_cast %28#1 : vector<8x1xf32> to vector<8x1xf32>
    %41 = vector.broadcast %40 : vector<8x1xf32> to vector<8x128xf32>
    %42 = vector.broadcast %cst_30 : f32 to vector<8x128xf32>
    %43 = arith.select %39, %41, %42 : vector<8x128xi1>, vector<8x128xf32>
    %44 = arith.addf %37, %43 : vector<8x128xf32>
    %c2_i32_31 = arith.constant 2 : i32
    %45 = vector.broadcast %c2_i32_31 : i32 to vector<8x128xi32>
    %46 = arith.cmpi eq, %29, %45 : vector<8x128xi32>
    %cst_32 = arith.constant 0.000000e+00 : f32
    %47 = vector.shape_cast %28#2 : vector<8x1xf32> to vector<8x1xf32>
    %48 = vector.broadcast %47 : vector<8x1xf32> to vector<8x128xf32>
    %49 = vector.broadcast %cst_32 : f32 to vector<8x128xf32>
    %50 = arith.select %46, %48, %49 : vector<8x128xi1>, vector<8x128xf32>
    %51 = arith.addf %44, %50 : vector<8x128xf32>
    %c3_i32 = arith.constant 3 : i32
    %52 = vector.broadcast %c3_i32 : i32 to vector<8x128xi32>
    %53 = arith.cmpi eq, %29, %52 : vector<8x128xi32>
    %cst_33 = arith.constant 0.000000e+00 : f32
    %54 = vector.shape_cast %28#3 : vector<8x1xf32> to vector<8x1xf32>
    %55 = vector.broadcast %54 : vector<8x1xf32> to vector<8x128xf32>
    %56 = vector.broadcast %cst_33 : f32 to vector<8x128xf32>
    %57 = arith.select %53, %55, %56 : vector<8x128xi1>, vector<8x128xf32>
    %58 = arith.addf %51, %57 : vector<8x128xf32>
    %c4_i32 = arith.constant 4 : i32
    %59 = vector.broadcast %c4_i32 : i32 to vector<8x128xi32>
    %60 = arith.cmpi eq, %29, %59 : vector<8x128xi32>
    %cst_34 = arith.constant 0.000000e+00 : f32
    %61 = vector.shape_cast %28#4 : vector<8x1xf32> to vector<8x1xf32>
    %62 = vector.broadcast %61 : vector<8x1xf32> to vector<8x128xf32>
    %63 = vector.broadcast %cst_34 : f32 to vector<8x128xf32>
    %64 = arith.select %60, %62, %63 : vector<8x128xi1>, vector<8x128xf32>
    %65 = arith.addf %58, %64 : vector<8x128xf32>
    %c5_i32 = arith.constant 5 : i32
    %66 = vector.broadcast %c5_i32 : i32 to vector<8x128xi32>
    %67 = arith.cmpi eq, %29, %66 : vector<8x128xi32>
    %cst_35 = arith.constant 0.000000e+00 : f32
    %68 = vector.shape_cast %28#5 : vector<8x1xf32> to vector<8x1xf32>
    %69 = vector.broadcast %68 : vector<8x1xf32> to vector<8x128xf32>
    %70 = vector.broadcast %cst_35 : f32 to vector<8x128xf32>
    %71 = arith.select %67, %69, %70 : vector<8x128xi1>, vector<8x128xf32>
    %72 = arith.addf %65, %71 : vector<8x128xf32>
    %c6_i32 = arith.constant 6 : i32
    %73 = vector.broadcast %c6_i32 : i32 to vector<8x128xi32>
    %74 = arith.cmpi eq, %29, %73 : vector<8x128xi32>
    %cst_36 = arith.constant 0.000000e+00 : f32
    %75 = vector.shape_cast %28#6 : vector<8x1xf32> to vector<8x1xf32>
    %76 = vector.broadcast %75 : vector<8x1xf32> to vector<8x128xf32>
    %77 = vector.broadcast %cst_36 : f32 to vector<8x128xf32>
    %78 = arith.select %74, %76, %77 : vector<8x128xi1>, vector<8x128xf32>
    %79 = arith.addf %72, %78 : vector<8x128xf32>
    %c7_i32 = arith.constant 7 : i32
    %80 = vector.broadcast %c7_i32 : i32 to vector<8x128xi32>
    %81 = arith.cmpi eq, %29, %80 : vector<8x128xi32>
    %cst_37 = arith.constant 0.000000e+00 : f32
    %82 = vector.shape_cast %28#7 : vector<8x1xf32> to vector<8x1xf32>
    %83 = vector.broadcast %82 : vector<8x1xf32> to vector<8x128xf32>
    %84 = vector.broadcast %cst_37 : f32 to vector<8x128xf32>
    %85 = arith.select %81, %83, %84 : vector<8x128xi1>, vector<8x128xf32>
    %86 = arith.addf %79, %85 : vector<8x128xf32>
    %c8_i32 = arith.constant 8 : i32
    %87 = vector.broadcast %c8_i32 : i32 to vector<8x128xi32>
    %88 = arith.cmpi eq, %29, %87 : vector<8x128xi32>
    %cst_38 = arith.constant 0.000000e+00 : f32
    %89 = vector.shape_cast %28#8 : vector<8x1xf32> to vector<8x1xf32>
    %90 = vector.broadcast %89 : vector<8x1xf32> to vector<8x128xf32>
    %91 = vector.broadcast %cst_38 : f32 to vector<8x128xf32>
    %92 = arith.select %88, %90, %91 : vector<8x128xi1>, vector<8x128xf32>
    %93 = arith.addf %86, %92 : vector<8x128xf32>
    %c9_i32 = arith.constant 9 : i32
    %94 = vector.broadcast %c9_i32 : i32 to vector<8x128xi32>
    %95 = arith.cmpi eq, %29, %94 : vector<8x128xi32>
    %cst_39 = arith.constant 0.000000e+00 : f32
    %96 = vector.shape_cast %28#9 : vector<8x1xf32> to vector<8x1xf32>
    %97 = vector.broadcast %96 : vector<8x1xf32> to vector<8x128xf32>
    %98 = vector.broadcast %cst_39 : f32 to vector<8x128xf32>
    %99 = arith.select %95, %97, %98 : vector<8x128xi1>, vector<8x128xf32>
    %100 = arith.addf %93, %99 : vector<8x128xf32>
    %c10_i32 = arith.constant 10 : i32
    %101 = vector.broadcast %c10_i32 : i32 to vector<8x128xi32>
    %102 = arith.cmpi eq, %29, %101 : vector<8x128xi32>
    %cst_40 = arith.constant 0.000000e+00 : f32
    %103 = vector.shape_cast %28#10 : vector<8x1xf32> to vector<8x1xf32>
    %104 = vector.broadcast %103 : vector<8x1xf32> to vector<8x128xf32>
    %105 = vector.broadcast %cst_40 : f32 to vector<8x128xf32>
    %106 = arith.select %102, %104, %105 : vector<8x128xi1>, vector<8x128xf32>
    %107 = arith.addf %100, %106 : vector<8x128xf32>
    %c11_i32 = arith.constant 11 : i32
    %108 = vector.broadcast %c11_i32 : i32 to vector<8x128xi32>
    %109 = arith.cmpi eq, %29, %108 : vector<8x128xi32>
    %cst_41 = arith.constant 0.000000e+00 : f32
    %110 = vector.shape_cast %28#11 : vector<8x1xf32> to vector<8x1xf32>
    %111 = vector.broadcast %110 : vector<8x1xf32> to vector<8x128xf32>
    %112 = vector.broadcast %cst_41 : f32 to vector<8x128xf32>
    %113 = arith.select %109, %111, %112 : vector<8x128xi1>, vector<8x128xf32>
    %114 = arith.addf %107, %113 : vector<8x128xf32>
    %c12_i32 = arith.constant 12 : i32
    %115 = vector.broadcast %c12_i32 : i32 to vector<8x128xi32>
    %116 = arith.cmpi eq, %29, %115 : vector<8x128xi32>
    %cst_42 = arith.constant 0.000000e+00 : f32
    %117 = vector.shape_cast %28#12 : vector<8x1xf32> to vector<8x1xf32>
    %118 = vector.broadcast %117 : vector<8x1xf32> to vector<8x128xf32>
    %119 = vector.broadcast %cst_42 : f32 to vector<8x128xf32>
    %120 = arith.select %116, %118, %119 : vector<8x128xi1>, vector<8x128xf32>
    %121 = arith.addf %114, %120 : vector<8x128xf32>
    %c0_43 = arith.constant 0 : index
    %c0_44 = arith.constant 0 : index
    %122 = vector.load %arg5[%c0_43, %c0_44] : memref<8x128xf32, #tpu.memory_space<vmem>>, vector<8x128xf32>
    %123 = arith.addf %122, %121 : vector<8x128xf32>
    %c0_45 = arith.constant 0 : index
    %c0_46 = arith.constant 0 : index
    %124 = vector.load %arg5[%c0_45, %c0_46] : memref<8x128xf32, #tpu.memory_space<vmem>>, vector<8x128xf32>
    tpu.vector_store %arg5[%c0_45, %c0_46], %123 {strides = array<i32>} : memref<8x128xf32, #tpu.memory_space<vmem>>, vector<8x128xf32>,
    return
  }
  func.func @transform_0(%arg0: i32, %arg1: i32) -> (i32, i32) {
    %c0_i32 = arith.constant 0 : i32
    %c0_i32_0 = arith.constant 0 : i32
    return %arg0, %c0_i32 : i32, i32
  }
  func.func @transform_1(%arg0: i32, %arg1: i32) -> (i32, i32) {
    %c0_i32 = arith.constant 0 : i32
    %c0_i32_0 = arith.constant 0 : i32
    return %c0_i32, %arg1 : i32, i32
  }
  func.func @transform_2(%arg0: i32, %arg1: i32) -> (i32, i32) {
    %c0_i32 = arith.constant 0 : i32
    %c0_i32_0 = arith.constant 0 : i32
    return %c0_i32, %arg1 : i32, i32
  }
  func.func @transform_3(%arg0: i32, %arg1: i32) -> (i32, i32) {
    %c0_i32 = arith.constant 0 : i32
    %c0_i32_0 = arith.constant 0 : i32
    return %arg0, %c0_i32 : i32, i32
  }
}

</mosaic_0001>

<llo_original>
// kernel: _wect_forward.1
$region0: #{_wect_forward.1}
  #allocation0 [shape = 'u32[]', space=smem, size = 0x4, offset = 0x4, fixed_abs, tag = 'smem constant byte address 0x4 - core index']
  #allocation1 [shape = 'u32[72,128]{1,0:T(1,128)}', space=vmem, size = 0x9000, scoped, tag = 'internal scratch']
  %s0 = inlined_call_operand.vmem [shape: f32[16,16], index: 0, kind: input, shape index: {}]
  %s1 = inlined_call_operand.vmem [shape: f32[8,2048], index: 1, kind: input, shape index: {}]
  %s2 = inlined_call_operand.vmem [shape: f32[8,2048], index: 2, kind: input, shape index: {}]
  %s3 = inlined_call_operand.hbm [shape: f32[16,128], index: 3, kind: output, shape index: {}]
  %s4 = sld [smem:[#allocation0]]
  $region56: #{_wect_forward.1} parent=0
    _
  %s6 = ssub.s32 1, %s4
  %s7 = scalar_select 0, %s6, %s4
  $region1: #{_wect_forward.1} parent=0
    #allocation2 [shape = 'u8[8192]{0}', space=vmem, size = 0x2000, scoped, tag = 'output window, operand 0']
    #allocation3 [shape = 's32[2]{0}', space=sflag, size = 0x8, scoped, tag = 'scoped memory for _wect_forward.1']
    %8 = vsyncpa [#allocation3], 0
    %s9 = scalar_lea.sflag [#allocation3], 1
    %10 = vsyncpa %s9, 0
    loop: start=0, step=1, limit=6
    $region2: #{_wect_forward.1} parent=1 // loop_pre_header
      _
    $region3: #{_wect_forward.1} parent=1 // loop_header
      %s12 = sphi 0, %s16
      %p13 = scmp.ge.s32.totalorder %s12, 6
      %s19 = sphi 0, %s31
      %s20 = sphi 0, %s27
      %s21 = sphi 0, %s19
      %s22 = sphi 0, %s20
      %s23 = sphi 0, %s21
      %s24 = sphi 0, %s22
      %s34 = sphi 0, %s36
      %s37 = sphi 0, %s34
      %s38 = sphi 0, %s37
      %s54 = sphi 0, %s38
      %s60 = sphi 0, %s62
      %s63 = sphi 0, %s60
      %s64 = sphi 0, %s63
      %s80 = sphi 0, %s64
      %s86 = sphi 0, %s88
      %s89 = sphi 0, %s86
      %s90 = sphi 0, %s89
      %s106 = sphi 0, %s90
      %s112 = sphi 0, %s114
      %s115 = sphi 0, %s112
      %s116 = sphi 0, %s115
      %s132 = sphi 0, %s116
    $region4: #{_wect_forward.1} parent=1 // loop_header_branch
      %15 = sbr.rel (%p13) target = $region8
    $region5: #{_wect_forward.1} parent=1 // loop_body
      %s17 = ssub.s32 %s12, 1
      %s18 = ssub.s32 %s12, 2
      %s25 = sadd.s32 1, %s20
      %p26 = scmp.ge.s32.totalorder %s25, 2
      %s27 = scalar_select %p26, 0, %s25
      %s28 = sadd.s32 1, %s19
      %s29 = scalar_select %p26, %s28, %s19
      %p30 = scmp.ge.s32.totalorder %s29, 2
      %s31 = scalar_select %p30, 0, %s29
      %s32 = ssub.s32 %s19, %s31
      %p33 = scmp.eq.s32.totalorder %s32, 0
      %s35 = sadd.s32 %s34, 1
      %s36 = scalar_select %p33, %s34, %s35
      %p39 = pneg %p33
      %p40 = scmp.eq.s32.totalorder %s12, 3
      %p41 = por %p39, %p40
      %p42 = scmp.ne.s32.totalorder %s34, %s37
      %p43 = scmp.eq.s32.totalorder %s12, 0
      %p44 = por %p42, %p43
      %p45 = scmp.ne.s32.totalorder %s34, %s37
      %p46 = scmp.eq.s32.totalorder %s17, 3
      %p47 = por %p45, %p46
      %p48 = scmp.ne.s32.totalorder %s37, %s38
      %p49 = scmp.eq.s32.totalorder %s17, 0
      %p50 = por %p48, %p49
      %p51 = scmp.ne.s32.totalorder %s37, %s38
      %p52 = scmp.eq.s32.totalorder %s18, 3
      %p53 = por %p51, %p52
      %p55 = scmp.ne.s32.totalorder %s38, %s54
      %p56 = scmp.eq.s32.totalorder %s18, 0
      %p57 = por %p55, %p56
      %s58 = ssub.s32 %s20, %s27
      %p59 = scmp.eq.s32.totalorder %s58, 0
      %s61 = sadd.s32 %s60, 1
      %s62 = scalar_select %p59, %s60, %s61
      %p65 = pneg %p59
      %p66 = scmp.eq.s32.totalorder %s12, 3
      %p67 = por %p65, %p66
      %p68 = scmp.ne.s32.totalorder %s60, %s63
      %p69 = scmp.eq.s32.totalorder %s12, 0
      %p70 = por %p68, %p69
      %p71 = scmp.ne.s32.totalorder %s60, %s63
      %p72 = scmp.eq.s32.totalorder %s17, 3
      %p73 = por %p71, %p72
      %p74 = scmp.ne.s32.totalorder %s63, %s64
      %p75 = scmp.eq.s32.totalorder %s17, 0
      %p76 = por %p74, %p75
      %p77 = scmp.ne.s32.totalorder %s63, %s64
      %p78 = scmp.eq.s32.totalorder %s18, 3
      %p79 = por %p77, %p78
      %p81 = scmp.ne.s32.totalorder %s64, %s80
      %p82 = scmp.eq.s32.totalorder %s18, 0
      %p83 = por %p81, %p82
      %s84 = ssub.s32 %s20, %s27
      %p85 = scmp.eq.s32.totalorder %s84, 0
      %s87 = sadd.s32 %s86, 1
      %s88 = scalar_select %p85, %s86, %s87
      %p91 = pneg %p85
      %p92 = scmp.eq.s32.totalorder %s12, 3
      %p93 = por %p91, %p92
      %p94 = scmp.ne.s32.totalorder %s86, %s89
      %p95 = scmp.eq.s32.totalorder %s12, 0
      %p96 = por %p94, %p95
      %p97 = scmp.ne.s32.totalorder %s86, %s89
      %p98 = scmp.eq.s32.totalorder %s17, 3
      %p99 = por %p97, %p98
      %p100 = scmp.ne.s32.totalorder %s89, %s90
      %p101 = scmp.eq.s32.totalorder %s17, 0
      %p102 = por %p100, %p101
      %p103 = scmp.ne.s32.totalorder %s89, %s90
      %p104 = scmp.eq.s32.totalorder %s18, 3
      %p105 = por %p103, %p104
      %p107 = scmp.ne.s32.totalorder %s90, %s106
      %p108 = scmp.eq.s32.totalorder %s18, 0
      %p109 = por %p107, %p108
      %s110 = ssub.s32 %s19, %s31
      %p111 = scmp.eq.s32.totalorder %s110, 0
      %s113 = sadd.s32 %s112, 1
      %s114 = scalar_select %p111, %s112, %s113
      %p117 = pneg %p111
      %p118 = scmp.eq.s32.totalorder %s12, 3
      %p119 = por %p117, %p118
      %p120 = scmp.ne.s32.totalorder %s112, %s115
      %p121 = scmp.eq.s32.totalorder %s12, 0
      %p122 = por %p120, %p121
      %p123 = scmp.ne.s32.totalorder %s112, %s115
      %p124 = scmp.eq.s32.totalorder %s17, 3
      %p125 = por %p123, %p124
      %p126 = scmp.ne.s32.totalorder %s115, %s116
      %p127 = scmp.eq.s32.totalorder %s17, 0
      %p128 = por %p126, %p127
      %p129 = scmp.ne.s32.totalorder %s115, %s116
      %p130 = scmp.eq.s32.totalorder %s18, 3
      %p131 = por %p129, %p130
      %p133 = scmp.ne.s32.totalorder %s116, %s132
      %p134 = scmp.eq.s32.totalorder %s18, 0
      %p135 = por %p133, %p134
      %p136 = scmp.le.s32.totalorder 1, %s12
      %p137 = scmp.lt.s32.totalorder %s12, 5
      %p138 = pnand %p136, %p137
      %p139 = pneg %p138
      // Predicated region
      $region9: #{_wect_forward.1} parent=5 // pred_check
        _
      $region10: #{_wect_forward.1} parent=5 // pred_check_branch
        %141 = sbr.rel (%p138) target = $region12
      $region11: #{_wect_forward.1} parent=5 // pred_region
        %s142 = ssub.s32 %s12, 1
      $region12: #{_wect_forward.1} parent=5 // pred_fallthru
        _
      %p143 = scmp.lt.s32.totalorder %s12, 4
      // Predicated region
      $region13: #{_wect_forward.1} parent=5 // pred_check
        %p144 = pneg %p143
      $region14: #{_wect_forward.1} parent=5 // pred_check_branch
        %146 = sbr.rel (%p144) target = $region16
      $region15: #{_wect_forward.1} parent=5 // pred_region
        // Predicated region
        $region17: #{_wect_forward.1} parent=15 // pred_check
          %p147 = pneg %p44
        $region18: #{_wect_forward.1} parent=15 // pred_check_branch
          %149 = sbr.rel (%p147) target = $region20
        $region19: #{_wect_forward.1} parent=15 // pred_region
          %p150 = scmp.lt.s32.totalorder %s19, 1
          %s151 = scalar_select %p150, %s19, 1
          %s152 = smul.addr %s151, 8
          %s153 = scalar_lea.vmem %s0, %s152
        $region20: #{_wect_forward.1} parent=15 // pred_fallthru
          _
        // Predicated region
        $region21: #{_wect_forward.1} parent=15 // pred_check
          %p154 = pneg %p70
        $region22: #{_wect_forward.1} parent=15 // pred_check_branch
          %156 = sbr.rel (%p154) target = $region24
        $region23: #{_wect_forward.1} parent=15 // pred_region
          %s157 = smul.u32 8, %s20
          %p158 = scmp.lt.s32.totalorder %s157, 15
          %s159 = scalar_select %p158, %s157, 15
          %s160 = smul.addr %s159, 8
          %s161 = scalar_lea.vmem %s1, %s160
          %s162 = smul.u32 8, %s20
        $region24: #{_wect_forward.1} parent=15 // pred_fallthru
          _
        // Predicated region
        $region25: #{_wect_forward.1} parent=15 // pred_check
          %p163 = pneg %p96
        $region26: #{_wect_forward.1} parent=15 // pred_check_branch
          %165 = sbr.rel (%p163) target = $region28
        $region27: #{_wect_forward.1} parent=15 // pred_region
          %s166 = smul.u32 8, %s20
          %p167 = scmp.lt.s32.totalorder %s166, 15
          %s168 = scalar_select %p167, %s166, 15
          %s169 = smul.addr %s168, 8
          %s170 = scalar_lea.vmem %s2, %s169
          %s171 = smul.u32 8, %s20
        $region28: #{_wect_forward.1} parent=15 // pred_fallthru
          _
      $region16: #{_wect_forward.1} parent=5 // pred_fallthru
        _
      %p172 = scmp.le.s32.totalorder 1, %s12
      %p173 = scmp.lt.s32.totalorder %s12, 5
      %p174 = pnand %p172, %p173
      %p175 = pneg %p174
      // Predicated region
      $region29: #{_wect_forward.1} parent=5 // pred_check
        _
      $region30: #{_wect_forward.1} parent=5 // pred_check_branch
        %177 = sbr.rel (%p174) target = $region32
      $region31: #{_wect_forward.1} parent=5 // pred_region
        %s178 = ssub.s32 %s12, 1
        %p179 = scmp.lt.s32.totalorder %s21, 1
        %s180 = scalar_select %p179, %s21, 1
        %s181 = smul.addr %s180, 8
        %s182 = scalar_lea.vmem %s0, %s181
        %p183 = pneg %p50
        %p184 = pneg %p47
        %s185 = smul.u32 8, %s22
        %p186 = scmp.lt.s32.totalorder %s185, 15
        %s187 = scalar_select %p186, %s185, 15
        %s188 = smul.addr %s187, 8
        %s189 = scalar_lea.vmem %s1, %s188
        %p190 = pneg %p76
        %p191 = pneg %p73
        %s192 = smul.u32 8, %s22
        %p193 = scmp.lt.s32.totalorder %s192, 15
        %s194 = scalar_select %p193, %s192, 15
        %s195 = smul.addr %s194, 8
        %s196 = scalar_lea.vmem %s2, %s195
        %p197 = pneg %p102
        %p198 = pneg %p99
        %p199 = pneg %p128
        %p200 = pneg %p125
        %s201 = sand.u32 %s115, 1
        %s202 = scalar_lea.sflag [#allocation3], %s201
        %s203 = sand.u32 %s115, 1
        %s204 = smul.addr %s203, 8
        %s205 = scalar_lea.vmem [#allocation2], %s204
        %p206 = scmp.lt.s32.totalorder %s21, 1
        %s207 = scalar_select %p206, %s21, 1
        %s208 = smul.addr %s207, 8
        %s209 = scalar_lea.vmem %s0, %s208
        %s210 = smul.u32 8, %s22
        %p211 = scmp.lt.s32.totalorder %s210, 15
        %s212 = scalar_select %p211, %s210, 15
        %s213 = smul.addr %s212, 8
        %s214 = scalar_lea.vmem %s1, %s213
        %s215 = smul.u32 8, %s22
        %s216 = smul.u32 8, %s22
        %p217 = scmp.lt.s32.totalorder %s216, 15
        %s218 = scalar_select %p217, %s216, 15
        %s219 = smul.addr %s218, 8
        %s220 = scalar_lea.vmem %s2, %s219
        %s221 = smul.u32 8, %s22
        %p222 = scmp.eq.s32.totalorder %s22, 0
        // Predicated region
        $region33: #{_wect_forward.1} parent=31 // pred_check
          %p223 = pneg %p222
        $region34: #{_wect_forward.1} parent=31 // pred_check_branch
          %225 = sbr.rel (%p223) target = $region36
        $region35: #{_wect_forward.1} parent=31 // pred_region
          %226 = vst [vmem:[%s205] sm:$0xff] 0.0
        $region36: #{_wect_forward.1} parent=31 // pred_fallthru
          _
        %v227 = vld [vmem:[%s209] sm:$0xff]
        loop: start=0, step=1, limit=2
        $region37: #{_wect_forward.1} parent=31 // loop_pre_header
          _
        $region38: #{_wect_forward.1} parent=31 // loop_header
          %s229 = sphi 0, %s233
          %p230 = scmp.ge.s32.totalorder %s229, 2
          %v234 = vphi 0.0, %v1757
          %v235 = vphi 0.0, %v1771
          %v236 = vphi 0.0, %v1785
          %v237 = vphi 0.0, %v1799
          %v238 = vphi 0.0, %v1813
          %v239 = vphi 0.0, %v1827
          %v240 = vphi 0.0, %v1841
          %v241 = vphi 0.0, %v1855
          %v242 = vphi 0.0, %v1869
          %v243 = vphi 0.0, %v1883
          %v244 = vphi 0.0, %v1897
          %v245 = vphi 0.0, %v1911
          %v246 = vphi 0.0, %v1925
        $region39: #{_wect_forward.1} parent=31 // loop_header_branch
          %232 = sbr.rel (%p230) target = $region43
        $region40: #{_wect_forward.1} parent=31 // loop_body
          %s247 = smul.u32 %s229, 512
          %s248 = sshra.s32 %s247, 7
          %s249 = sand.u32 %s247, 127
          %s250 = smul.addr %s248, 8
          %s251 = scalar_lea.vmem %s214, %s250
          %v252 = vld [vmem:[%s251] ss:$8 sm:$0xf]
          %s253 = scalar_lea.vmem %s251, 1
          %v254 = vld [vmem:[%s253] ss:$8 sm:$0xf]
          %s255 = scalar_lea.vmem %s251, 2
          %v256 = vld [vmem:[%s255] ss:$8 sm:$0xf]
          %258 = vset.pattern.permute.xlu0 0
          %259 = vperm.xlu0 %258, %v227
          %v260 = vpop.permute.xlu0 %259
          %v263 = vperm.slane %v252, 0
          %v264 = vperm.slane %v252, 1
          %v265 = vperm.slane %v252, 2
          %v266 = vperm.slane %v252, 3
          %v271 = vmul.f32 %v260, %v263
          %v272 = vmul.f32 %v260, %v264
          %v273 = vmul.f32 %v260, %v265
          %v274 = vmul.f32 %v260, %v266
          %275 = vset.pattern.permute.xlu0 1
          %276 = vperm.xlu0 %275, %v227
          %v277 = vpop.permute.xlu0 %276
          %v280 = vperm.slane %v254, 0
          %v281 = vperm.slane %v254, 1
          %v282 = vperm.slane %v254, 2
          %v283 = vperm.slane %v254, 3
          %v288 = vmul.f32 %v277, %v280
          %v289 = vmul.f32 %v277, %v281
          %v290 = vmul.f32 %v277, %v282
          %v291 = vmul.f32 %v277, %v283
          %v292 = vadd.f32 %v271, %v288
          %v293 = vadd.f32 %v272, %v289
          %v294 = vadd.f32 %v273, %v290
          %v295 = vadd.f32 %v274, %v291
          %296 = vset.pattern.permute.xlu0 2
          %297 = vperm.xlu0 %296, %v227
          %v298 = vpop.permute.xlu0 %297
          %v301 = vperm.slane %v256, 0
          %v302 = vperm.slane %v256, 1
          %v303 = vperm.slane %v256, 2
          %v304 = vperm.slane %v256, 3
          %v309 = vmul.f32 %v298, %v301
          %v310 = vmul.f32 %v298, %v302
          %v311 = vmul.f32 %v298, %v303
          %v312 = vmul.f32 %v298, %v304
          %v313 = vadd.f32 %v292, %v309
          %v314 = vadd.f32 %v293, %v310
          %v315 = vadd.f32 %v294, %v311
          %v316 = vadd.f32 %v295, %v312
          %s317 = smul.addr %s248, 8
          %s318 = scalar_lea.vmem %s220, %s317
          %v319 = vld [vmem:[%s318] ss:$8 sm:$0xf]
          %v321 = vperm.slane %v319, 0
          %v322 = vperm.slane %v319, 1
          %v323 = vperm.slane %v319, 2
          %v324 = vperm.slane %v319, 3
          %329 = vset.pattern.permute.xlu0 3
          %330 = vperm.xlu0 %329, %v227
          %v331 = vpop.permute.xlu0 %330
          %v333 = vadd.f32 %v313, %v331
          %v334 = vadd.f32 %v314, %v331
          %v335 = vadd.f32 %v315, %v331
          %v336 = vadd.f32 %v316, %v331
          %vm337 = vcmp.le.f32.partialorder %v333, -20.784609
          %vm338 = vcmp.le.f32.partialorder %v334, -20.784609
          %vm339 = vcmp.le.f32.partialorder %v335, -20.784609
          %vm340 = vcmp.le.f32.partialorder %v336, -20.784609
          %v341 = vsel %vm337, %v321, 0.0
          %v342 = vsel %vm338, %v322, 0.0
          %v343 = vsel %vm339, %v323, 0.0
          %v344 = vsel %vm340, %v324, 0.0
          %v345 = vadd.f32 %v341, %v342
          %v346 = vadd.f32 %v345, %v343
          %v347 = vadd.f32 %v346, %v344
          %348 = vadd.xlane.f32.xlu0 %v347
          %v349 = vpop.xlane.xlu0 %348
          %v350 = vadd.f32 %v234, %v349
          %vm351 = vcmp.le.f32.partialorder %v333, -17.320509
          %vm352 = vcmp.le.f32.partialorder %v334, -17.320509
          %vm353 = vcmp.le.f32.partialorder %v335, -17.320509
          %vm354 = vcmp.le.f32.partialorder %v336, -17.320509
          %v355 = vsel %vm351, %v321, 0.0
          %v356 = vsel %vm352, %v322, 0.0
          %v357 = vsel %vm353, %v323, 0.0
          %v358 = vsel %vm354, %v324, 0.0
          %v359 = vadd.f32 %v355, %v356
          %v360 = vadd.f32 %v359, %v357
          %v361 = vadd.f32 %v360, %v358
          %362 = vadd.xlane.f32.xlu0 %v361
          %v363 = vpop.xlane.xlu0 %362
          %v364 = vadd.f32 %v235, %v363
          %vm365 = vcmp.le.f32.partialorder %v333, -13.856406
          %vm366 = vcmp.le.f32.partialorder %v334, -13.856406
          %vm367 = vcmp.le.f32.partialorder %v335, -13.856406
          %vm368 = vcmp.le.f32.partialorder %v336, -13.856406
          %v369 = vsel %vm365, %v321, 0.0
          %v370 = vsel %vm366, %v322, 0.0
          %v371 = vsel %vm367, %v323, 0.0
          %v372 = vsel %vm368, %v324, 0.0
          %v373 = vadd.f32 %v369, %v370
          %v374 = vadd.f32 %v373, %v371
          %v375 = vadd.f32 %v374, %v372
          %376 = vadd.xlane.f32.xlu0 %v375
          %v377 = vpop.xlane.xlu0 %376
          %v378 = vadd.f32 %v236, %v377
          %vm379 = vcmp.le.f32.partialorder %v333, -10.392304
          %vm380 = vcmp.le.f32.partialorder %v334, -10.392304
          %vm381 = vcmp.le.f32.partialorder %v335, -10.392304
          %vm382 = vcmp.le.f32.partialorder %v336, -10.392304
          %v383 = vsel %vm379, %v321, 0.0
          %v384 = vsel %vm380, %v322, 0.0
          %v385 = vsel %vm381, %v323, 0.0
          %v386 = vsel %vm382, %v324, 0.0
          %v387 = vadd.f32 %v383, %v384
          %v388 = vadd.f32 %v387, %v385
          %v389 = vadd.f32 %v388, %v386
          %390 = vadd.xlane.f32.xlu0 %v389
          %v391 = vpop.xlane.xlu0 %390
          %v392 = vadd.f32 %v237, %v391
          %vm393 = vcmp.le.f32.partialorder %v333, -6.928203
          %vm394 = vcmp.le.f32.partialorder %v334, -6.928203
          %vm395 = vcmp.le.f32.partialorder %v335, -6.928203
          %vm396 = vcmp.le.f32.partialorder %v336, -6.928203
          %v397 = vsel %vm393, %v321, 0.0
          %v398 = vsel %vm394, %v322, 0.0
          %v399 = vsel %vm395, %v323, 0.0
          %v400 = vsel %vm396, %v324, 0.0
          %v401 = vadd.f32 %v397, %v398
          %v402 = vadd.f32 %v401, %v399
          %v403 = vadd.f32 %v402, %v400
          %404 = vadd.xlane.f32.xlu0 %v403
          %v405 = vpop.xlane.xlu0 %404
          %v406 = vadd.f32 %v238, %v405
          %vm407 = vcmp.le.f32.partialorder %v333, -3.4641016
          %vm408 = vcmp.le.f32.partialorder %v334, -3.4641016
          %vm409 = vcmp.le.f32.partialorder %v335, -3.4641016
          %vm410 = vcmp.le.f32.partialorder %v336, -3.4641016
          %v411 = vsel %vm407, %v321, 0.0
          %v412 = vsel %vm408, %v322, 0.0
          %v413 = vsel %vm409, %v323, 0.0
          %v414 = vsel %vm410, %v324, 0.0
          %v415 = vadd.f32 %v411, %v412
          %v416 = vadd.f32 %v415, %v413
          %v417 = vadd.f32 %v416, %v414
          %418 = vadd.xlane.f32.xlu0 %v417
          %v419 = vpop.xlane.xlu0 %418
          %v420 = vadd.f32 %v239, %v419
          %vm421 = vcmp.le.f32.partialorder %v333, -7.1054274e-15
          %vm422 = vcmp.le.f32.partialorder %v334, -7.1054274e-15
          %vm423 = vcmp.le.f32.partialorder %v335, -7.1054274e-15
          %vm424 = vcmp.le.f32.partialorder %v336, -7.1054274e-15
          %v425 = vsel %vm421, %v321, 0.0
          %v426 = vsel %vm422, %v322, 0.0
          %v427 = vsel %vm423, %v323, 0.0
          %v428 = vsel %vm424, %v324, 0.0
          %v429 = vadd.f32 %v425, %v426
          %v430 = vadd.f32 %v429, %v427
          %v431 = vadd.f32 %v430, %v428
          %432 = vadd.xlane.f32.xlu0 %v431
          %v433 = vpop.xlane.xlu0 %432
          %v434 = vadd.f32 %v240, %v433
          %vm435 = vcmp.le.f32.partialorder %v333, 3.4641016
          %vm436 = vcmp.le.f32.partialorder %v334, 3.4641016
          %vm437 = vcmp.le.f32.partialorder %v335, 3.4641016
          %vm438 = vcmp.le.f32.partialorder %v336, 3.4641016
          %v439 = vsel %vm435, %v321, 0.0
          %v440 = vsel %vm436, %v322, 0.0
          %v441 = vsel %vm437, %v323, 0.0
          %v442 = vsel %vm438, %v324, 0.0
          %v443 = vadd.f32 %v439, %v440
          %v444 = vadd.f32 %v443, %v441
          %v445 = vadd.f32 %v444, %v442
          %446 = vadd.xlane.f32.xlu0 %v445
          %v447 = vpop.xlane.xlu0 %446
          %v448 = vadd.f32 %v241, %v447
          %vm449 = vcmp.le.f32.partialorder %v333, 6.928203
          %vm450 = vcmp.le.f32.partialorder %v334, 6.928203
          %vm451 = vcmp.le.f32.partialorder %v335, 6.928203
          %vm452 = vcmp.le.f32.partialorder %v336, 6.928203
          %v453 = vsel %vm449, %v321, 0.0
          %v454 = vsel %vm450, %v322, 0.0
          %v455 = vsel %vm451, %v323, 0.0
          %v456 = vsel %vm452, %v324, 0.0
          %v457 = vadd.f32 %v453, %v454
          %v458 = vadd.f32 %v457, %v455
          %v459 = vadd.f32 %v458, %v456
          %460 = vadd.xlane.f32.xlu0 %v459
          %v461 = vpop.xlane.xlu0 %460
          %v462 = vadd.f32 %v242, %v461
          %vm463 = vcmp.le.f32.partialorder %v333, 10.392304
          %vm464 = vcmp.le.f32.partialorder %v334, 10.392304
          %vm465 = vcmp.le.f32.partialorder %v335, 10.392304
          %vm466 = vcmp.le.f32.partialorder %v336, 10.392304
          %v467 = vsel %vm463, %v321, 0.0
          %v468 = vsel %vm464, %v322, 0.0
          %v469 = vsel %vm465, %v323, 0.0
          %v470 = vsel %vm466, %v324, 0.0
          %v471 = vadd.f32 %v467, %v468
          %v472 = vadd.f32 %v471, %v469
          %v473 = vadd.f32 %v472, %v470
          %474 = vadd.xlane.f32.xlu0 %v473
          %v475 = vpop.xlane.xlu0 %474
          %v476 = vadd.f32 %v243, %v475
          %vm477 = vcmp.le.f32.partialorder %v333, 13.856406
          %vm478 = vcmp.le.f32.partialorder %v334, 13.856406
          %vm479 = vcmp.le.f32.partialorder %v335, 13.856406
          %vm480 = vcmp.le.f32.partialorder %v336, 13.856406
          %v481 = vsel %vm477, %v321, 0.0
          %v482 = vsel %vm478, %v322, 0.0
          %v483 = vsel %vm479, %v323, 0.0
          %v484 = vsel %vm480, %v324, 0.0
          %v485 = vadd.f32 %v481, %v482
          %v486 = vadd.f32 %v485, %v483
          %v487 = vadd.f32 %v486, %v484
          %488 = vadd.xlane.f32.xlu0 %v487
          %v489 = vpop.xlane.xlu0 %488
          %v490 = vadd.f32 %v244, %v489
          %vm491 = vcmp.le.f32.partialorder %v333, 17.320509
          %vm492 = vcmp.le.f32.partialorder %v334, 17.320509
          %vm493 = vcmp.le.f32.partialorder %v335, 17.320509
          %vm494 = vcmp.le.f32.partialorder %v336, 17.320509
          %v495 = vsel %vm491, %v321, 0.0
          %v496 = vsel %vm492, %v322, 0.0
          %v497 = vsel %vm493, %v323, 0.0
          %v498 = vsel %vm494, %v324, 0.0
          %v499 = vadd.f32 %v495, %v496
          %v500 = vadd.f32 %v499, %v497
          %v501 = vadd.f32 %v500, %v498
          %502 = vadd.xlane.f32.xlu0 %v501
          %v503 = vpop.xlane.xlu0 %502
          %v504 = vadd.f32 %v245, %v503
          %vm505 = vcmp.le.f32.partialorder %v333, 20.784609
          %vm506 = vcmp.le.f32.partialorder %v334, 20.784609
          %vm507 = vcmp.le.f32.partialorder %v335, 20.784609
          %vm508 = vcmp.le.f32.partialorder %v336, 20.784609
          %v509 = vsel %vm505, %v321, 0.0
          %v510 = vsel %vm506, %v322, 0.0
          %v511 = vsel %vm507, %v323, 0.0
          %v512 = vsel %vm508, %v324, 0.0
          %v513 = vadd.f32 %v509, %v510
          %v514 = vadd.f32 %v513, %v511
          %v515 = vadd.f32 %v514, %v512
          %516 = vadd.xlane.f32.xlu0 %v515
          %v517 = vpop.xlane.xlu0 %516
          %v518 = vadd.f32 %v246, %v517
          %s519 = scalar_lea.vmem %s318, 1
          %v520 = vld [vmem:[%s519] ss:$8 sm:$0xf]
          %v522 = vperm.slane %v520, 0
          %v523 = vperm.slane %v520, 1
          %v524 = vperm.slane %v520, 2
          %v525 = vperm.slane %v520, 3
          %530 = vset.pattern.permute.xlu0 4
          %531 = vperm.xlu0 %530, %v227
          %v532 = vpop.permute.xlu0 %531
          %v534 = vadd.f32 %v313, %v532
          %v535 = vadd.f32 %v314, %v532
          %v536 = vadd.f32 %v315, %v532
          %v537 = vadd.f32 %v316, %v532
          %vm538 = vcmp.le.f32.partialorder %v534, -20.784609
          %vm539 = vcmp.le.f32.partialorder %v535, -20.784609
          %vm540 = vcmp.le.f32.partialorder %v536, -20.784609
          %vm541 = vcmp.le.f32.partialorder %v537, -20.784609
          %v542 = vsel %vm538, %v522, 0.0
          %v543 = vsel %vm539, %v523, 0.0
          %v544 = vsel %vm540, %v524, 0.0
          %v545 = vsel %vm541, %v525, 0.0
          %v546 = vadd.f32 %v542, %v543
          %v547 = vadd.f32 %v546, %v544
          %v548 = vadd.f32 %v547, %v545
          %549 = vadd.xlane.f32.xlu0 %v548
          %v550 = vpop.xlane.xlu0 %549
          %v551 = vadd.f32 %v350, %v550
          %vm552 = vcmp.le.f32.partialorder %v534, -17.320509
          %vm553 = vcmp.le.f32.partialorder %v535, -17.320509
          %vm554 = vcmp.le.f32.partialorder %v536, -17.320509
          %vm555 = vcmp.le.f32.partialorder %v537, -17.320509
          %v556 = vsel %vm552, %v522, 0.0
          %v557 = vsel %vm553, %v523, 0.0
          %v558 = vsel %vm554, %v524, 0.0
          %v559 = vsel %vm555, %v525, 0.0
          %v560 = vadd.f32 %v556, %v557
          %v561 = vadd.f32 %v560, %v558
          %v562 = vadd.f32 %v561, %v559
          %563 = vadd.xlane.f32.xlu0 %v562
          %v564 = vpop.xlane.xlu0 %563
          %v565 = vadd.f32 %v364, %v564
          %vm566 = vcmp.le.f32.partialorder %v534, -13.856406
          %vm567 = vcmp.le.f32.partialorder %v535, -13.856406
          %vm568 = vcmp.le.f32.partialorder %v536, -13.856406
          %vm569 = vcmp.le.f32.partialorder %v537, -13.856406
          %v570 = vsel %vm566, %v522, 0.0
          %v571 = vsel %vm567, %v523, 0.0
          %v572 = vsel %vm568, %v524, 0.0
          %v573 = vsel %vm569, %v525, 0.0
          %v574 = vadd.f32 %v570, %v571
          %v575 = vadd.f32 %v574, %v572
          %v576 = vadd.f32 %v575, %v573
          %577 = vadd.xlane.f32.xlu0 %v576
          %v578 = vpop.xlane.xlu0 %577
          %v579 = vadd.f32 %v378, %v578
          %vm580 = vcmp.le.f32.partialorder %v534, -10.392304
          %vm581 = vcmp.le.f32.partialorder %v535, -10.392304
          %vm582 = vcmp.le.f32.partialorder %v536, -10.392304
          %vm583 = vcmp.le.f32.partialorder %v537, -10.392304
          %v584 = vsel %vm580, %v522, 0.0
          %v585 = vsel %vm581, %v523, 0.0
          %v586 = vsel %vm582, %v524, 0.0
          %v587 = vsel %vm583, %v525, 0.0
          %v588 = vadd.f32 %v584, %v585
          %v589 = vadd.f32 %v588, %v586
          %v590 = vadd.f32 %v589, %v587
          %591 = vadd.xlane.f32.xlu0 %v590
          %v592 = vpop.xlane.xlu0 %591
          %v593 = vadd.f32 %v392, %v592
          %vm594 = vcmp.le.f32.partialorder %v534, -6.928203
          %vm595 = vcmp.le.f32.partialorder %v535, -6.928203
          %vm596 = vcmp.le.f32.partialorder %v536, -6.928203
          %vm597 = vcmp.le.f32.partialorder %v537, -6.928203
          %v598 = vsel %vm594, %v522, 0.0
          %v599 = vsel %vm595, %v523, 0.0
          %v600 = vsel %vm596, %v524, 0.0
          %v601 = vsel %vm597, %v525, 0.0
          %v602 = vadd.f32 %v598, %v599
          %v603 = vadd.f32 %v602, %v600
          %v604 = vadd.f32 %v603, %v601
          %605 = vadd.xlane.f32.xlu0 %v604
          %v606 = vpop.xlane.xlu0 %605
          %v607 = vadd.f32 %v406, %v606
          %vm608 = vcmp.le.f32.partialorder %v534, -3.4641016
          %vm609 = vcmp.le.f32.partialorder %v535, -3.4641016
          %vm610 = vcmp.le.f32.partialorder %v536, -3.4641016
          %vm611 = vcmp.le.f32.partialorder %v537, -3.4641016
          %v612 = vsel %vm608, %v522, 0.0
          %v613 = vsel %vm609, %v523, 0.0
          %v614 = vsel %vm610, %v524, 0.0
          %v615 = vsel %vm611, %v525, 0.0
          %v616 = vadd.f32 %v612, %v613
          %v617 = vadd.f32 %v616, %v614
          %v618 = vadd.f32 %v617, %v615
          %619 = vadd.xlane.f32.xlu0 %v618
          %v620 = vpop.xlane.xlu0 %619
          %v621 = vadd.f32 %v420, %v620
          %vm622 = vcmp.le.f32.partialorder %v534, -7.1054274e-15
          %vm623 = vcmp.le.f32.partialorder %v535, -7.1054274e-15
          %vm624 = vcmp.le.f32.partialorder %v536, -7.1054274e-15
          %vm625 = vcmp.le.f32.partialorder %v537, -7.1054274e-15
          %v626 = vsel %vm622, %v522, 0.0
          %v627 = vsel %vm623, %v523, 0.0
          %v628 = vsel %vm624, %v524, 0.0
          %v629 = vsel %vm625, %v525, 0.0
          %v630 = vadd.f32 %v626, %v627
          %v631 = vadd.f32 %v630, %v628
          %v632 = vadd.f32 %v631, %v629
          %633 = vadd.xlane.f32.xlu0 %v632
          %v634 = vpop.xlane.xlu0 %633
          %v635 = vadd.f32 %v434, %v634
          %vm636 = vcmp.le.f32.partialorder %v534, 3.4641016
          %vm637 = vcmp.le.f32.partialorder %v535, 3.4641016
          %vm638 = vcmp.le.f32.partialorder %v536, 3.4641016
          %vm639 = vcmp.le.f32.partialorder %v537, 3.4641016
          %v640 = vsel %vm636, %v522, 0.0
          %v641 = vsel %vm637, %v523, 0.0
          %v642 = vsel %vm638, %v524, 0.0
          %v643 = vsel %vm639, %v525, 0.0
          %v644 = vadd.f32 %v640, %v641
          %v645 = vadd.f32 %v644, %v642
          %v646 = vadd.f32 %v645, %v643
          %647 = vadd.xlane.f32.xlu0 %v646
          %v648 = vpop.xlane.xlu0 %647
          %v649 = vadd.f32 %v448, %v648
          %vm650 = vcmp.le.f32.partialorder %v534, 6.928203
          %vm651 = vcmp.le.f32.partialorder %v535, 6.928203
          %vm652 = vcmp.le.f32.partialorder %v536, 6.928203
          %vm653 = vcmp.le.f32.partialorder %v537, 6.928203
          %v654 = vsel %vm650, %v522, 0.0
          %v655 = vsel %vm651, %v523, 0.0
          %v656 = vsel %vm652, %v524, 0.0
          %v657 = vsel %vm653, %v525, 0.0
          %v658 = vadd.f32 %v654, %v655
          %v659 = vadd.f32 %v658, %v656
          %v660 = vadd.f32 %v659, %v657
          %661 = vadd.xlane.f32.xlu0 %v660
          %v662 = vpop.xlane.xlu0 %661
          %v663 = vadd.f32 %v462, %v662
          %vm664 = vcmp.le.f32.partialorder %v534, 10.392304
          %vm665 = vcmp.le.f32.partialorder %v535, 10.392304
          %vm666 = vcmp.le.f32.partialorder %v536, 10.392304
          %vm667 = vcmp.le.f32.partialorder %v537, 10.392304
          %v668 = vsel %vm664, %v522, 0.0
          %v669 = vsel %vm665, %v523, 0.0
          %v670 = vsel %vm666, %v524, 0.0
          %v671 = vsel %vm667, %v525, 0.0
          %v672 = vadd.f32 %v668, %v669
          %v673 = vadd.f32 %v672, %v670
          %v674 = vadd.f32 %v673, %v671
          %675 = vadd.xlane.f32.xlu0 %v674
          %v676 = vpop.xlane.xlu0 %675
          %v677 = vadd.f32 %v476, %v676
          %vm678 = vcmp.le.f32.partialorder %v534, 13.856406
          %vm679 = vcmp.le.f32.partialorder %v535, 13.856406
          %vm680 = vcmp.le.f32.partialorder %v536, 13.856406
          %vm681 = vcmp.le.f32.partialorder %v537, 13.856406
          %v682 = vsel %vm678, %v522, 0.0
          %v683 = vsel %vm679, %v523, 0.0
          %v684 = vsel %vm680, %v524, 0.0
          %v685 = vsel %vm681, %v525, 0.0
          %v686 = vadd.f32 %v682, %v683
          %v687 = vadd.f32 %v686, %v684
          %v688 = vadd.f32 %v687, %v685
          %689 = vadd.xlane.f32.xlu0 %v688
          %v690 = vpop.xlane.xlu0 %689
          %v691 = vadd.f32 %v490, %v690
          %vm692 = vcmp.le.f32.partialorder %v534, 17.320509
          %vm693 = vcmp.le.f32.partialorder %v535, 17.320509
          %vm694 = vcmp.le.f32.partialorder %v536, 17.320509
          %vm695 = vcmp.le.f32.partialorder %v537, 17.320509
          %v696 = vsel %vm692, %v522, 0.0
          %v697 = vsel %vm693, %v523, 0.0
          %v698 = vsel %vm694, %v524, 0.0
          %v699 = vsel %vm695, %v525, 0.0
          %v700 = vadd.f32 %v696, %v697
          %v701 = vadd.f32 %v700, %v698
          %v702 = vadd.f32 %v701, %v699
          %703 = vadd.xlane.f32.xlu0 %v702
          %v704 = vpop.xlane.xlu0 %703
          %v705 = vadd.f32 %v504, %v704
          %vm706 = vcmp.le.f32.partialorder %v534, 20.784609
          %vm707 = vcmp.le.f32.partialorder %v535, 20.784609
          %vm708 = vcmp.le.f32.partialorder %v536, 20.784609
          %vm709 = vcmp.le.f32.partialorder %v537, 20.784609
          %v710 = vsel %vm706, %v522, 0.0
          %v711 = vsel %vm707, %v523, 0.0
          %v712 = vsel %vm708, %v524, 0.0
          %v713 = vsel %vm709, %v525, 0.0
          %v714 = vadd.f32 %v710, %v711
          %v715 = vadd.f32 %v714, %v712
          %v716 = vadd.f32 %v715, %v713
          %717 = vadd.xlane.f32.xlu0 %v716
          %v718 = vpop.xlane.xlu0 %717
          %v719 = vadd.f32 %v518, %v718
          %s720 = scalar_lea.vmem %s318, 2
          %v721 = vld [vmem:[%s720] ss:$8 sm:$0xf]
          %v723 = vperm.slane %v721, 0
          %v724 = vperm.slane %v721, 1
          %v725 = vperm.slane %v721, 2
          %v726 = vperm.slane %v721, 3
          %731 = vset.pattern.permute.xlu0 5
          %732 = vperm.xlu0 %731, %v227
          %v733 = vpop.permute.xlu0 %732
          %v735 = vadd.f32 %v313, %v733
          %v736 = vadd.f32 %v314, %v733
          %v737 = vadd.f32 %v315, %v733
          %v738 = vadd.f32 %v316, %v733
          %vm739 = vcmp.le.f32.partialorder %v735, -20.784609
          %vm740 = vcmp.le.f32.partialorder %v736, -20.784609
          %vm741 = vcmp.le.f32.partialorder %v737, -20.784609
          %vm742 = vcmp.le.f32.partialorder %v738, -20.784609
          %v743 = vsel %vm739, %v723, 0.0
          %v744 = vsel %vm740, %v724, 0.0
          %v745 = vsel %vm741, %v725, 0.0
          %v746 = vsel %vm742, %v726, 0.0
          %v747 = vadd.f32 %v743, %v744
          %v748 = vadd.f32 %v747, %v745
          %v749 = vadd.f32 %v748, %v746
          %750 = vadd.xlane.f32.xlu0 %v749
          %v751 = vpop.xlane.xlu0 %750
          %v752 = vadd.f32 %v551, %v751
          %vm753 = vcmp.le.f32.partialorder %v735, -17.320509
          %vm754 = vcmp.le.f32.partialorder %v736, -17.320509
          %vm755 = vcmp.le.f32.partialorder %v737, -17.320509
          %vm756 = vcmp.le.f32.partialorder %v738, -17.320509
          %v757 = vsel %vm753, %v723, 0.0
          %v758 = vsel %vm754, %v724, 0.0
          %v759 = vsel %vm755, %v725, 0.0
          %v760 = vsel %vm756, %v726, 0.0
          %v761 = vadd.f32 %v757, %v758
          %v762 = vadd.f32 %v761, %v759
          %v763 = vadd.f32 %v762, %v760
          %764 = vadd.xlane.f32.xlu0 %v763
          %v765 = vpop.xlane.xlu0 %764
          %v766 = vadd.f32 %v565, %v765
          %vm767 = vcmp.le.f32.partialorder %v735, -13.856406
          %vm768 = vcmp.le.f32.partialorder %v736, -13.856406
          %vm769 = vcmp.le.f32.partialorder %v737, -13.856406
          %vm770 = vcmp.le.f32.partialorder %v738, -13.856406
          %v771 = vsel %vm767, %v723, 0.0
          %v772 = vsel %vm768, %v724, 0.0
          %v773 = vsel %vm769, %v725, 0.0
          %v774 = vsel %vm770, %v726, 0.0
          %v775 = vadd.f32 %v771, %v772
          %v776 = vadd.f32 %v775, %v773
          %v777 = vadd.f32 %v776, %v774
          %778 = vadd.xlane.f32.xlu0 %v777
          %v779 = vpop.xlane.xlu0 %778
          %v780 = vadd.f32 %v579, %v779
          %vm781 = vcmp.le.f32.partialorder %v735, -10.392304
          %vm782 = vcmp.le.f32.partialorder %v736, -10.392304
          %vm783 = vcmp.le.f32.partialorder %v737, -10.392304
          %vm784 = vcmp.le.f32.partialorder %v738, -10.392304
          %v785 = vsel %vm781, %v723, 0.0
          %v786 = vsel %vm782, %v724, 0.0
          %v787 = vsel %vm783, %v725, 0.0
          %v788 = vsel %vm784, %v726, 0.0
          %v789 = vadd.f32 %v785, %v786
          %v790 = vadd.f32 %v789, %v787
          %v791 = vadd.f32 %v790, %v788
          %792 = vadd.xlane.f32.xlu0 %v791
          %v793 = vpop.xlane.xlu0 %792
          %v794 = vadd.f32 %v593, %v793
          %vm795 = vcmp.le.f32.partialorder %v735, -6.928203
          %vm796 = vcmp.le.f32.partialorder %v736, -6.928203
          %vm797 = vcmp.le.f32.partialorder %v737, -6.928203
          %vm798 = vcmp.le.f32.partialorder %v738, -6.928203
          %v799 = vsel %vm795, %v723, 0.0
          %v800 = vsel %vm796, %v724, 0.0
          %v801 = vsel %vm797, %v725, 0.0
          %v802 = vsel %vm798, %v726, 0.0
          %v803 = vadd.f32 %v799, %v800
          %v804 = vadd.f32 %v803, %v801
          %v805 = vadd.f32 %v804, %v802
          %806 = vadd.xlane.f32.xlu0 %v805
          %v807 = vpop.xlane.xlu0 %806
          %v808 = vadd.f32 %v607, %v807
          %vm809 = vcmp.le.f32.partialorder %v735, -3.4641016
          %vm810 = vcmp.le.f32.partialorder %v736, -3.4641016
          %vm811 = vcmp.le.f32.partialorder %v737, -3.4641016
          %vm812 = vcmp.le.f32.partialorder %v738, -3.4641016
          %v813 = vsel %vm809, %v723, 0.0
          %v814 = vsel %vm810, %v724, 0.0
          %v815 = vsel %vm811, %v725, 0.0
          %v816 = vsel %vm812, %v726, 0.0
          %v817 = vadd.f32 %v813, %v814
          %v818 = vadd.f32 %v817, %v815
          %v819 = vadd.f32 %v818, %v816
          %820 = vadd.xlane.f32.xlu0 %v819
          %v821 = vpop.xlane.xlu0 %820
          %v822 = vadd.f32 %v621, %v821
          %vm823 = vcmp.le.f32.partialorder %v735, -7.1054274e-15
          %vm824 = vcmp.le.f32.partialorder %v736, -7.1054274e-15
          %vm825 = vcmp.le.f32.partialorder %v737, -7.1054274e-15
          %vm826 = vcmp.le.f32.partialorder %v738, -7.1054274e-15
          %v827 = vsel %vm823, %v723, 0.0
          %v828 = vsel %vm824, %v724, 0.0
          %v829 = vsel %vm825, %v725, 0.0
          %v830 = vsel %vm826, %v726, 0.0
          %v831 = vadd.f32 %v827, %v828
          %v832 = vadd.f32 %v831, %v829
          %v833 = vadd.f32 %v832, %v830
          %834 = vadd.xlane.f32.xlu0 %v833
          %v835 = vpop.xlane.xlu0 %834
          %v836 = vadd.f32 %v635, %v835
          %vm837 = vcmp.le.f32.partialorder %v735, 3.4641016
          %vm838 = vcmp.le.f32.partialorder %v736, 3.4641016
          %vm839 = vcmp.le.f32.partialorder %v737, 3.4641016
          %vm840 = vcmp.le.f32.partialorder %v738, 3.4641016
          %v841 = vsel %vm837, %v723, 0.0
          %v842 = vsel %vm838, %v724, 0.0
          %v843 = vsel %vm839, %v725, 0.0
          %v844 = vsel %vm840, %v726, 0.0
          %v845 = vadd.f32 %v841, %v842
          %v846 = vadd.f32 %v845, %v843
          %v847 = vadd.f32 %v846, %v844
          %848 = vadd.xlane.f32.xlu0 %v847
          %v849 = vpop.xlane.xlu0 %848
          %v850 = vadd.f32 %v649, %v849
          %vm851 = vcmp.le.f32.partialorder %v735, 6.928203
          %vm852 = vcmp.le.f32.partialorder %v736, 6.928203
          %vm853 = vcmp.le.f32.partialorder %v737, 6.928203
          %vm854 = vcmp.le.f32.partialorder %v738, 6.928203
          %v855 = vsel %vm851, %v723, 0.0
          %v856 = vsel %vm852, %v724, 0.0
          %v857 = vsel %vm853, %v725, 0.0
          %v858 = vsel %vm854, %v726, 0.0
          %v859 = vadd.f32 %v855, %v856
          %v860 = vadd.f32 %v859, %v857
          %v861 = vadd.f32 %v860, %v858
          %862 = vadd.xlane.f32.xlu0 %v861
          %v863 = vpop.xlane.xlu0 %862
          %v864 = vadd.f32 %v663, %v863
          %vm865 = vcmp.le.f32.partialorder %v735, 10.392304
          %vm866 = vcmp.le.f32.partialorder %v736, 10.392304
          %vm867 = vcmp.le.f32.partialorder %v737, 10.392304
          %vm868 = vcmp.le.f32.partialorder %v738, 10.392304
          %v869 = vsel %vm865, %v723, 0.0
          %v870 = vsel %vm866, %v724, 0.0
          %v871 = vsel %vm867, %v725, 0.0
          %v872 = vsel %vm868, %v726, 0.0
          %v873 = vadd.f32 %v869, %v870
          %v874 = vadd.f32 %v873, %v871
          %v875 = vadd.f32 %v874, %v872
          %876 = vadd.xlane.f32.xlu0 %v875
          %v877 = vpop.xlane.xlu0 %876
          %v878 = vadd.f32 %v677, %v877
          %vm879 = vcmp.le.f32.partialorder %v735, 13.856406
          %vm880 = vcmp.le.f32.partialorder %v736, 13.856406
          %vm881 = vcmp.le.f32.partialorder %v737, 13.856406
          %vm882 = vcmp.le.f32.partialorder %v738, 13.856406
          %v883 = vsel %vm879, %v723, 0.0
          %v884 = vsel %vm880, %v724, 0.0
          %v885 = vsel %vm881, %v725, 0.0
          %v886 = vsel %vm882, %v726, 0.0
          %v887 = vadd.f32 %v883, %v884
          %v888 = vadd.f32 %v887, %v885
          %v889 = vadd.f32 %v888, %v886
          %890 = vadd.xlane.f32.xlu0 %v889
          %v891 = vpop.xlane.xlu0 %890
          %v892 = vadd.f32 %v691, %v891
          %vm893 = vcmp.le.f32.partialorder %v735, 17.320509
          %vm894 = vcmp.le.f32.partialorder %v736, 17.320509
          %vm895 = vcmp.le.f32.partialorder %v737, 17.320509
          %vm896 = vcmp.le.f32.partialorder %v738, 17.320509
          %v897 = vsel %vm893, %v723, 0.0
          %v898 = vsel %vm894, %v724, 0.0
          %v899 = vsel %vm895, %v725, 0.0
          %v900 = vsel %vm896, %v726, 0.0
          %v901 = vadd.f32 %v897, %v898
          %v902 = vadd.f32 %v901, %v899
          %v903 = vadd.f32 %v902, %v900
          %904 = vadd.xlane.f32.xlu0 %v903
          %v905 = vpop.xlane.xlu0 %904
          %v906 = vadd.f32 %v705, %v905
          %vm907 = vcmp.le.f32.partialorder %v735, 20.784609
          %vm908 = vcmp.le.f32.partialorder %v736, 20.784609
          %vm909 = vcmp.le.f32.partialorder %v737, 20.784609
          %vm910 = vcmp.le.f32.partialorder %v738, 20.784609
          %v911 = vsel %vm907, %v723, 0.0
          %v912 = vsel %vm908, %v724, 0.0
          %v913 = vsel %vm909, %v725, 0.0
          %v914 = vsel %vm910, %v726, 0.0
          %v915 = vadd.f32 %v911, %v912
          %v916 = vadd.f32 %v915, %v913
          %v917 = vadd.f32 %v916, %v914
          %918 = vadd.xlane.f32.xlu0 %v917
          %v919 = vpop.xlane.xlu0 %918
          %v920 = vadd.f32 %v719, %v919
          %s921 = scalar_lea.vmem %s318, 3
          %v922 = vld [vmem:[%s921] ss:$8 sm:$0xf]
          %v924 = vperm.slane %v922, 0
          %v925 = vperm.slane %v922, 1
          %v926 = vperm.slane %v922, 2
          %v927 = vperm.slane %v922, 3
          %932 = vset.pattern.permute.xlu0 6
          %933 = vperm.xlu0 %932, %v227
          %v934 = vpop.permute.xlu0 %933
          %v936 = vadd.f32 %v313, %v934
          %v937 = vadd.f32 %v314, %v934
          %v938 = vadd.f32 %v315, %v934
          %v939 = vadd.f32 %v316, %v934
          %vm940 = vcmp.le.f32.partialorder %v936, -20.784609
          %vm941 = vcmp.le.f32.partialorder %v937, -20.784609
          %vm942 = vcmp.le.f32.partialorder %v938, -20.784609
          %vm943 = vcmp.le.f32.partialorder %v939, -20.784609
          %v944 = vsel %vm940, %v924, 0.0
          %v945 = vsel %vm941, %v925, 0.0
          %v946 = vsel %vm942, %v926, 0.0
          %v947 = vsel %vm943, %v927, 0.0
          %v948 = vadd.f32 %v944, %v945
          %v949 = vadd.f32 %v948, %v946
          %v950 = vadd.f32 %v949, %v947
          %951 = vadd.xlane.f32.xlu0 %v950
          %v952 = vpop.xlane.xlu0 %951
          %v953 = vadd.f32 %v752, %v952
          %vm954 = vcmp.le.f32.partialorder %v936, -17.320509
          %vm955 = vcmp.le.f32.partialorder %v937, -17.320509
          %vm956 = vcmp.le.f32.partialorder %v938, -17.320509
          %vm957 = vcmp.le.f32.partialorder %v939, -17.320509
          %v958 = vsel %vm954, %v924, 0.0
          %v959 = vsel %vm955, %v925, 0.0
          %v960 = vsel %vm956, %v926, 0.0
          %v961 = vsel %vm957, %v927, 0.0
          %v962 = vadd.f32 %v958, %v959
          %v963 = vadd.f32 %v962, %v960
          %v964 = vadd.f32 %v963, %v961
          %965 = vadd.xlane.f32.xlu0 %v964
          %v966 = vpop.xlane.xlu0 %965
          %v967 = vadd.f32 %v766, %v966
          %vm968 = vcmp.le.f32.partialorder %v936, -13.856406
          %vm969 = vcmp.le.f32.partialorder %v937, -13.856406
          %vm970 = vcmp.le.f32.partialorder %v938, -13.856406
          %vm971 = vcmp.le.f32.partialorder %v939, -13.856406
          %v972 = vsel %vm968, %v924, 0.0
          %v973 = vsel %vm969, %v925, 0.0
          %v974 = vsel %vm970, %v926, 0.0
          %v975 = vsel %vm971, %v927, 0.0
          %v976 = vadd.f32 %v972, %v973
          %v977 = vadd.f32 %v976, %v974
          %v978 = vadd.f32 %v977, %v975
          %979 = vadd.xlane.f32.xlu0 %v978
          %v980 = vpop.xlane.xlu0 %979
          %v981 = vadd.f32 %v780, %v980
          %vm982 = vcmp.le.f32.partialorder %v936, -10.392304
          %vm983 = vcmp.le.f32.partialorder %v937, -10.392304
          %vm984 = vcmp.le.f32.partialorder %v938, -10.392304
          %vm985 = vcmp.le.f32.partialorder %v939, -10.392304
          %v986 = vsel %vm982, %v924, 0.0
          %v987 = vsel %vm983, %v925, 0.0
          %v988 = vsel %vm984, %v926, 0.0
          %v989 = vsel %vm985, %v927, 0.0
          %v990 = vadd.f32 %v986, %v987
          %v991 = vadd.f32 %v990, %v988
          %v992 = vadd.f32 %v991, %v989
          %993 = vadd.xlane.f32.xlu0 %v992
          %v994 = vpop.xlane.xlu0 %993
          %v995 = vadd.f32 %v794, %v994
          %vm996 = vcmp.le.f32.partialorder %v936, -6.928203
          %vm997 = vcmp.le.f32.partialorder %v937, -6.928203
          %vm998 = vcmp.le.f32.partialorder %v938, -6.928203
          %vm999 = vcmp.le.f32.partialorder %v939, -6.928203
          %v1000 = vsel %vm996, %v924, 0.0
          %v1001 = vsel %vm997, %v925, 0.0
          %v1002 = vsel %vm998, %v926, 0.0
          %v1003 = vsel %vm999, %v927, 0.0
          %v1004 = vadd.f32 %v1000, %v1001
          %v1005 = vadd.f32 %v1004, %v1002
          %v1006 = vadd.f32 %v1005, %v1003
          %1007 = vadd.xlane.f32.xlu0 %v1006
          %v1008 = vpop.xlane.xlu0 %1007
          %v1009 = vadd.f32 %v808, %v1008
          %vm1010 = vcmp.le.f32.partialorder %v936, -3.4641016
          %vm1011 = vcmp.le.f32.partialorder %v937, -3.4641016
          %vm1012 = vcmp.le.f32.partialorder %v938, -3.4641016
          %vm1013 = vcmp.le.f32.partialorder %v939, -3.4641016
          %v1014 = vsel %vm1010, %v924, 0.0
          %v1015 = vsel %vm1011, %v925, 0.0
          %v1016 = vsel %vm1012, %v926, 0.0
          %v1017 = vsel %vm1013, %v927, 0.0
          %v1018 = vadd.f32 %v1014, %v1015
          %v1019 = vadd.f32 %v1018, %v1016
          %v1020 = vadd.f32 %v1019, %v1017
          %1021 = vadd.xlane.f32.xlu0 %v1020
          %v1022 = vpop.xlane.xlu0 %1021
          %v1023 = vadd.f32 %v822, %v1022
          %vm1024 = vcmp.le.f32.partialorder %v936, -7.1054274e-15
          %vm1025 = vcmp.le.f32.partialorder %v937, -7.1054274e-15
          %vm1026 = vcmp.le.f32.partialorder %v938, -7.1054274e-15
          %vm1027 = vcmp.le.f32.partialorder %v939, -7.1054274e-15
          %v1028 = vsel %vm1024, %v924, 0.0
          %v1029 = vsel %vm1025, %v925, 0.0
          %v1030 = vsel %vm1026, %v926, 0.0
          %v1031 = vsel %vm1027, %v927, 0.0
          %v1032 = vadd.f32 %v1028, %v1029
          %v1033 = vadd.f32 %v1032, %v1030
          %v1034 = vadd.f32 %v1033, %v1031
          %1035 = vadd.xlane.f32.xlu0 %v1034
          %v1036 = vpop.xlane.xlu0 %1035
          %v1037 = vadd.f32 %v836, %v1036
          %vm1038 = vcmp.le.f32.partialorder %v936, 3.4641016
          %vm1039 = vcmp.le.f32.partialorder %v937, 3.4641016
          %vm1040 = vcmp.le.f32.partialorder %v938, 3.4641016
          %vm1041 = vcmp.le.f32.partialorder %v939, 3.4641016
          %v1042 = vsel %vm1038, %v924, 0.0
          %v1043 = vsel %vm1039, %v925, 0.0
          %v1044 = vsel %vm1040, %v926, 0.0
          %v1045 = vsel %vm1041, %v927, 0.0
          %v1046 = vadd.f32 %v1042, %v1043
          %v1047 = vadd.f32 %v1046, %v1044
          %v1048 = vadd.f32 %v1047, %v1045
          %1049 = vadd.xlane.f32.xlu0 %v1048
          %v1050 = vpop.xlane.xlu0 %1049
          %v1051 = vadd.f32 %v850, %v1050
          %vm1052 = vcmp.le.f32.partialorder %v936, 6.928203
          %vm1053 = vcmp.le.f32.partialorder %v937, 6.928203
          %vm1054 = vcmp.le.f32.partialorder %v938, 6.928203
          %vm1055 = vcmp.le.f32.partialorder %v939, 6.928203
          %v1056 = vsel %vm1052, %v924, 0.0
          %v1057 = vsel %vm1053, %v925, 0.0
          %v1058 = vsel %vm1054, %v926, 0.0
          %v1059 = vsel %vm1055, %v927, 0.0
          %v1060 = vadd.f32 %v1056, %v1057
          %v1061 = vadd.f32 %v1060, %v1058
          %v1062 = vadd.f32 %v1061, %v1059
          %1063 = vadd.xlane.f32.xlu0 %v1062
          %v1064 = vpop.xlane.xlu0 %1063
          %v1065 = vadd.f32 %v864, %v1064
          %vm1066 = vcmp.le.f32.partialorder %v936, 10.392304
          %vm1067 = vcmp.le.f32.partialorder %v937, 10.392304
          %vm1068 = vcmp.le.f32.partialorder %v938, 10.392304
          %vm1069 = vcmp.le.f32.partialorder %v939, 10.392304
          %v1070 = vsel %vm1066, %v924, 0.0
          %v1071 = vsel %vm1067, %v925, 0.0
          %v1072 = vsel %vm1068, %v926, 0.0
          %v1073 = vsel %vm1069, %v927, 0.0
          %v1074 = vadd.f32 %v1070, %v1071
          %v1075 = vadd.f32 %v1074, %v1072
          %v1076 = vadd.f32 %v1075, %v1073
          %1077 = vadd.xlane.f32.xlu0 %v1076
          %v1078 = vpop.xlane.xlu0 %1077
          %v1079 = vadd.f32 %v878, %v1078
          %vm1080 = vcmp.le.f32.partialorder %v936, 13.856406
          %vm1081 = vcmp.le.f32.partialorder %v937, 13.856406
          %vm1082 = vcmp.le.f32.partialorder %v938, 13.856406
          %vm1083 = vcmp.le.f32.partialorder %v939, 13.856406
          %v1084 = vsel %vm1080, %v924, 0.0
          %v1085 = vsel %vm1081, %v925, 0.0
          %v1086 = vsel %vm1082, %v926, 0.0
          %v1087 = vsel %vm1083, %v927, 0.0
          %v1088 = vadd.f32 %v1084, %v1085
          %v1089 = vadd.f32 %v1088, %v1086
          %v1090 = vadd.f32 %v1089, %v1087
          %1091 = vadd.xlane.f32.xlu0 %v1090
          %v1092 = vpop.xlane.xlu0 %1091
          %v1093 = vadd.f32 %v892, %v1092
          %vm1094 = vcmp.le.f32.partialorder %v936, 17.320509
          %vm1095 = vcmp.le.f32.partialorder %v937, 17.320509
          %vm1096 = vcmp.le.f32.partialorder %v938, 17.320509
          %vm1097 = vcmp.le.f32.partialorder %v939, 17.320509
          %v1098 = vsel %vm1094, %v924, 0.0
          %v1099 = vsel %vm1095, %v925, 0.0
          %v1100 = vsel %vm1096, %v926, 0.0
          %v1101 = vsel %vm1097, %v927, 0.0
          %v1102 = vadd.f32 %v1098, %v1099
          %v1103 = vadd.f32 %v1102, %v1100
          %v1104 = vadd.f32 %v1103, %v1101
          %1105 = vadd.xlane.f32.xlu0 %v1104
          %v1106 = vpop.xlane.xlu0 %1105
          %v1107 = vadd.f32 %v906, %v1106
          %vm1108 = vcmp.le.f32.partialorder %v936, 20.784609
          %vm1109 = vcmp.le.f32.partialorder %v937, 20.784609
          %vm1110 = vcmp.le.f32.partialorder %v938, 20.784609
          %vm1111 = vcmp.le.f32.partialorder %v939, 20.784609
          %v1112 = vsel %vm1108, %v924, 0.0
          %v1113 = vsel %vm1109, %v925, 0.0
          %v1114 = vsel %vm1110, %v926, 0.0
          %v1115 = vsel %vm1111, %v927, 0.0
          %v1116 = vadd.f32 %v1112, %v1113
          %v1117 = vadd.f32 %v1116, %v1114
          %v1118 = vadd.f32 %v1117, %v1115
          %1119 = vadd.xlane.f32.xlu0 %v1118
          %v1120 = vpop.xlane.xlu0 %1119
          %v1121 = vadd.f32 %v920, %v1120
          %s1122 = scalar_lea.vmem %s318, 4
          %v1123 = vld [vmem:[%s1122] ss:$8 sm:$0xf]
          %v1125 = vperm.slane %v1123, 0
          %v1126 = vperm.slane %v1123, 1
          %v1127 = vperm.slane %v1123, 2
          %v1128 = vperm.slane %v1123, 3
          %1133 = vset.pattern.permute.xlu0 7
          %1134 = vperm.xlu0 %1133, %v227
          %v1135 = vpop.permute.xlu0 %1134
          %v1137 = vadd.f32 %v313, %v1135
          %v1138 = vadd.f32 %v314, %v1135
          %v1139 = vadd.f32 %v315, %v1135
          %v1140 = vadd.f32 %v316, %v1135
          %vm1141 = vcmp.le.f32.partialorder %v1137, -20.784609
          %vm1142 = vcmp.le.f32.partialorder %v1138, -20.784609
          %vm1143 = vcmp.le.f32.partialorder %v1139, -20.784609
          %vm1144 = vcmp.le.f32.partialorder %v1140, -20.784609
          %v1145 = vsel %vm1141, %v1125, 0.0
          %v1146 = vsel %vm1142, %v1126, 0.0
          %v1147 = vsel %vm1143, %v1127, 0.0
          %v1148 = vsel %vm1144, %v1128, 0.0
          %v1149 = vadd.f32 %v1145, %v1146
          %v1150 = vadd.f32 %v1149, %v1147
          %v1151 = vadd.f32 %v1150, %v1148
          %1152 = vadd.xlane.f32.xlu0 %v1151
          %v1153 = vpop.xlane.xlu0 %1152
          %v1154 = vadd.f32 %v953, %v1153
          %vm1155 = vcmp.le.f32.partialorder %v1137, -17.320509
          %vm1156 = vcmp.le.f32.partialorder %v1138, -17.320509
          %vm1157 = vcmp.le.f32.partialorder %v1139, -17.320509
          %vm1158 = vcmp.le.f32.partialorder %v1140, -17.320509
          %v1159 = vsel %vm1155, %v1125, 0.0
          %v1160 = vsel %vm1156, %v1126, 0.0
          %v1161 = vsel %vm1157, %v1127, 0.0
          %v1162 = vsel %vm1158, %v1128, 0.0
          %v1163 = vadd.f32 %v1159, %v1160
          %v1164 = vadd.f32 %v1163, %v1161
          %v1165 = vadd.f32 %v1164, %v1162
          %1166 = vadd.xlane.f32.xlu0 %v1165
          %v1167 = vpop.xlane.xlu0 %1166
          %v1168 = vadd.f32 %v967, %v1167
          %vm1169 = vcmp.le.f32.partialorder %v1137, -13.856406
          %vm1170 = vcmp.le.f32.partialorder %v1138, -13.856406
          %vm1171 = vcmp.le.f32.partialorder %v1139, -13.856406
          %vm1172 = vcmp.le.f32.partialorder %v1140, -13.856406
          %v1173 = vsel %vm1169, %v1125, 0.0
          %v1174 = vsel %vm1170, %v1126, 0.0
          %v1175 = vsel %vm1171, %v1127, 0.0
          %v1176 = vsel %vm1172, %v1128, 0.0
          %v1177 = vadd.f32 %v1173, %v1174
          %v1178 = vadd.f32 %v1177, %v1175
          %v1179 = vadd.f32 %v1178, %v1176
          %1180 = vadd.xlane.f32.xlu0 %v1179
          %v1181 = vpop.xlane.xlu0 %1180
          %v1182 = vadd.f32 %v981, %v1181
          %vm1183 = vcmp.le.f32.partialorder %v1137, -10.392304
          %vm1184 = vcmp.le.f32.partialorder %v1138, -10.392304
          %vm1185 = vcmp.le.f32.partialorder %v1139, -10.392304
          %vm1186 = vcmp.le.f32.partialorder %v1140, -10.392304
          %v1187 = vsel %vm1183, %v1125, 0.0
          %v1188 = vsel %vm1184, %v1126, 0.0
          %v1189 = vsel %vm1185, %v1127, 0.0
          %v1190 = vsel %vm1186, %v1128, 0.0
          %v1191 = vadd.f32 %v1187, %v1188
          %v1192 = vadd.f32 %v1191, %v1189
          %v1193 = vadd.f32 %v1192, %v1190
          %1194 = vadd.xlane.f32.xlu0 %v1193
          %v1195 = vpop.xlane.xlu0 %1194
          %v1196 = vadd.f32 %v995, %v1195
          %vm1197 = vcmp.le.f32.partialorder %v1137, -6.928203
          %vm1198 = vcmp.le.f32.partialorder %v1138, -6.928203
          %vm1199 = vcmp.le.f32.partialorder %v1139, -6.928203
          %vm1200 = vcmp.le.f32.partialorder %v1140, -6.928203
          %v1201 = vsel %vm1197, %v1125, 0.0
          %v1202 = vsel %vm1198, %v1126, 0.0
          %v1203 = vsel %vm1199, %v1127, 0.0
          %v1204 = vsel %vm1200, %v1128, 0.0
          %v1205 = vadd.f32 %v1201, %v1202
          %v1206 = vadd.f32 %v1205, %v1203
          %v1207 = vadd.f32 %v1206, %v1204
          %1208 = vadd.xlane.f32.xlu0 %v1207
          %v1209 = vpop.xlane.xlu0 %1208
          %v1210 = vadd.f32 %v1009, %v1209
          %vm1211 = vcmp.le.f32.partialorder %v1137, -3.4641016
          %vm1212 = vcmp.le.f32.partialorder %v1138, -3.4641016
          %vm1213 = vcmp.le.f32.partialorder %v1139, -3.4641016
          %vm1214 = vcmp.le.f32.partialorder %v1140, -3.4641016
          %v1215 = vsel %vm1211, %v1125, 0.0
          %v1216 = vsel %vm1212, %v1126, 0.0
          %v1217 = vsel %vm1213, %v1127, 0.0
          %v1218 = vsel %vm1214, %v1128, 0.0
          %v1219 = vadd.f32 %v1215, %v1216
          %v1220 = vadd.f32 %v1219, %v1217
          %v1221 = vadd.f32 %v1220, %v1218
          %1222 = vadd.xlane.f32.xlu0 %v1221
          %v1223 = vpop.xlane.xlu0 %1222
          %v1224 = vadd.f32 %v1023, %v1223
          %vm1225 = vcmp.le.f32.partialorder %v1137, -7.1054274e-15
          %vm1226 = vcmp.le.f32.partialorder %v1138, -7.1054274e-15
          %vm1227 = vcmp.le.f32.partialorder %v1139, -7.1054274e-15
          %vm1228 = vcmp.le.f32.partialorder %v1140, -7.1054274e-15
          %v1229 = vsel %vm1225, %v1125, 0.0
          %v1230 = vsel %vm1226, %v1126, 0.0
          %v1231 = vsel %vm1227, %v1127, 0.0
          %v1232 = vsel %vm1228, %v1128, 0.0
          %v1233 = vadd.f32 %v1229, %v1230
          %v1234 = vadd.f32 %v1233, %v1231
          %v1235 = vadd.f32 %v1234, %v1232
          %1236 = vadd.xlane.f32.xlu0 %v1235
          %v1237 = vpop.xlane.xlu0 %1236
          %v1238 = vadd.f32 %v1037, %v1237
          %vm1239 = vcmp.le.f32.partialorder %v1137, 3.4641016
          %vm1240 = vcmp.le.f32.partialorder %v1138, 3.4641016
          %vm1241 = vcmp.le.f32.partialorder %v1139, 3.4641016
          %vm1242 = vcmp.le.f32.partialorder %v1140, 3.4641016
          %v1243 = vsel %vm1239, %v1125, 0.0
          %v1244 = vsel %vm1240, %v1126, 0.0
          %v1245 = vsel %vm1241, %v1127, 0.0
          %v1246 = vsel %vm1242, %v1128, 0.0
          %v1247 = vadd.f32 %v1243, %v1244
          %v1248 = vadd.f32 %v1247, %v1245
          %v1249 = vadd.f32 %v1248, %v1246
          %1250 = vadd.xlane.f32.xlu0 %v1249
          %v1251 = vpop.xlane.xlu0 %1250
          %v1252 = vadd.f32 %v1051, %v1251
          %vm1253 = vcmp.le.f32.partialorder %v1137, 6.928203
          %vm1254 = vcmp.le.f32.partialorder %v1138, 6.928203
          %vm1255 = vcmp.le.f32.partialorder %v1139, 6.928203
          %vm1256 = vcmp.le.f32.partialorder %v1140, 6.928203
          %v1257 = vsel %vm1253, %v1125, 0.0
          %v1258 = vsel %vm1254, %v1126, 0.0
          %v1259 = vsel %vm1255, %v1127, 0.0
          %v1260 = vsel %vm1256, %v1128, 0.0
          %v1261 = vadd.f32 %v1257, %v1258
          %v1262 = vadd.f32 %v1261, %v1259
          %v1263 = vadd.f32 %v1262, %v1260
          %1264 = vadd.xlane.f32.xlu0 %v1263
          %v1265 = vpop.xlane.xlu0 %1264
          %v1266 = vadd.f32 %v1065, %v1265
          %vm1267 = vcmp.le.f32.partialorder %v1137, 10.392304
          %vm1268 = vcmp.le.f32.partialorder %v1138, 10.392304
          %vm1269 = vcmp.le.f32.partialorder %v1139, 10.392304
          %vm1270 = vcmp.le.f32.partialorder %v1140, 10.392304
          %v1271 = vsel %vm1267, %v1125, 0.0
          %v1272 = vsel %vm1268, %v1126, 0.0
          %v1273 = vsel %vm1269, %v1127, 0.0
          %v1274 = vsel %vm1270, %v1128, 0.0
          %v1275 = vadd.f32 %v1271, %v1272
          %v1276 = vadd.f32 %v1275, %v1273
          %v1277 = vadd.f32 %v1276, %v1274
          %1278 = vadd.xlane.f32.xlu0 %v1277
          %v1279 = vpop.xlane.xlu0 %1278
          %v1280 = vadd.f32 %v1079, %v1279
          %vm1281 = vcmp.le.f32.partialorder %v1137, 13.856406
          %vm1282 = vcmp.le.f32.partialorder %v1138, 13.856406
          %vm1283 = vcmp.le.f32.partialorder %v1139, 13.856406
          %vm1284 = vcmp.le.f32.partialorder %v1140, 13.856406
          %v1285 = vsel %vm1281, %v1125, 0.0
          %v1286 = vsel %vm1282, %v1126, 0.0
          %v1287 = vsel %vm1283, %v1127, 0.0
          %v1288 = vsel %vm1284, %v1128, 0.0
          %v1289 = vadd.f32 %v1285, %v1286
          %v1290 = vadd.f32 %v1289, %v1287
          %v1291 = vadd.f32 %v1290, %v1288
          %1292 = vadd.xlane.f32.xlu0 %v1291
          %v1293 = vpop.xlane.xlu0 %1292
          %v1294 = vadd.f32 %v1093, %v1293
          %vm1295 = vcmp.le.f32.partialorder %v1137, 17.320509
          %vm1296 = vcmp.le.f32.partialorder %v1138, 17.320509
          %vm1297 = vcmp.le.f32.partialorder %v1139, 17.320509
          %vm1298 = vcmp.le.f32.partialorder %v1140, 17.320509
          %v1299 = vsel %vm1295, %v1125, 0.0
          %v1300 = vsel %vm1296, %v1126, 0.0
          %v1301 = vsel %vm1297, %v1127, 0.0
          %v1302 = vsel %vm1298, %v1128, 0.0
          %v1303 = vadd.f32 %v1299, %v1300
          %v1304 = vadd.f32 %v1303, %v1301
          %v1305 = vadd.f32 %v1304, %v1302
          %1306 = vadd.xlane.f32.xlu0 %v1305
          %v1307 = vpop.xlane.xlu0 %1306
          %v1308 = vadd.f32 %v1107, %v1307
          %vm1309 = vcmp.le.f32.partialorder %v1137, 20.784609
          %vm1310 = vcmp.le.f32.partialorder %v1138, 20.784609
          %vm1311 = vcmp.le.f32.partialorder %v1139, 20.784609
          %vm1312 = vcmp.le.f32.partialorder %v1140, 20.784609
          %v1313 = vsel %vm1309, %v1125, 0.0
          %v1314 = vsel %vm1310, %v1126, 0.0
          %v1315 = vsel %vm1311, %v1127, 0.0
          %v1316 = vsel %vm1312, %v1128, 0.0
          %v1317 = vadd.f32 %v1313, %v1314
          %v1318 = vadd.f32 %v1317, %v1315
          %v1319 = vadd.f32 %v1318, %v1316
          %1320 = vadd.xlane.f32.xlu0 %v1319
          %v1321 = vpop.xlane.xlu0 %1320
          %v1322 = vadd.f32 %v1121, %v1321
          %s1323 = scalar_lea.vmem %s318, 5
          %v1324 = vld [vmem:[%s1323] ss:$8 sm:$0xf]
          %v1326 = vperm.slane %v1324, 0
          %v1327 = vperm.slane %v1324, 1
          %v1328 = vperm.slane %v1324, 2
          %v1329 = vperm.slane %v1324, 3
          %1334 = vset.pattern.permute.xlu0 8
          %1335 = vperm.xlu0 %1334, %v227
          %v1336 = vpop.permute.xlu0 %1335
          %v1338 = vadd.f32 %v313, %v1336
          %v1339 = vadd.f32 %v314, %v1336
          %v1340 = vadd.f32 %v315, %v1336
          %v1341 = vadd.f32 %v316, %v1336
          %vm1342 = vcmp.le.f32.partialorder %v1338, -20.784609
          %vm1343 = vcmp.le.f32.partialorder %v1339, -20.784609
          %vm1344 = vcmp.le.f32.partialorder %v1340, -20.784609
          %vm1345 = vcmp.le.f32.partialorder %v1341, -20.784609
          %v1346 = vsel %vm1342, %v1326, 0.0
          %v1347 = vsel %vm1343, %v1327, 0.0
          %v1348 = vsel %vm1344, %v1328, 0.0
          %v1349 = vsel %vm1345, %v1329, 0.0
          %v1350 = vadd.f32 %v1346, %v1347
          %v1351 = vadd.f32 %v1350, %v1348
          %v1352 = vadd.f32 %v1351, %v1349
          %1353 = vadd.xlane.f32.xlu0 %v1352
          %v1354 = vpop.xlane.xlu0 %1353
          %v1355 = vadd.f32 %v1154, %v1354
          %vm1356 = vcmp.le.f32.partialorder %v1338, -17.320509
          %vm1357 = vcmp.le.f32.partialorder %v1339, -17.320509
          %vm1358 = vcmp.le.f32.partialorder %v1340, -17.320509
          %vm1359 = vcmp.le.f32.partialorder %v1341, -17.320509
          %v1360 = vsel %vm1356, %v1326, 0.0
          %v1361 = vsel %vm1357, %v1327, 0.0
          %v1362 = vsel %vm1358, %v1328, 0.0
          %v1363 = vsel %vm1359, %v1329, 0.0
          %v1364 = vadd.f32 %v1360, %v1361
          %v1365 = vadd.f32 %v1364, %v1362
          %v1366 = vadd.f32 %v1365, %v1363
          %1367 = vadd.xlane.f32.xlu0 %v1366
          %v1368 = vpop.xlane.xlu0 %1367
          %v1369 = vadd.f32 %v1168, %v1368
          %vm1370 = vcmp.le.f32.partialorder %v1338, -13.856406
          %vm1371 = vcmp.le.f32.partialorder %v1339, -13.856406
          %vm1372 = vcmp.le.f32.partialorder %v1340, -13.856406
          %vm1373 = vcmp.le.f32.partialorder %v1341, -13.856406
          %v1374 = vsel %vm1370, %v1326, 0.0
          %v1375 = vsel %vm1371, %v1327, 0.0
          %v1376 = vsel %vm1372, %v1328, 0.0
          %v1377 = vsel %vm1373, %v1329, 0.0
          %v1378 = vadd.f32 %v1374, %v1375
          %v1379 = vadd.f32 %v1378, %v1376
          %v1380 = vadd.f32 %v1379, %v1377
          %1381 = vadd.xlane.f32.xlu0 %v1380
          %v1382 = vpop.xlane.xlu0 %1381
          %v1383 = vadd.f32 %v1182, %v1382
          %vm1384 = vcmp.le.f32.partialorder %v1338, -10.392304
          %vm1385 = vcmp.le.f32.partialorder %v1339, -10.392304
          %vm1386 = vcmp.le.f32.partialorder %v1340, -10.392304
          %vm1387 = vcmp.le.f32.partialorder %v1341, -10.392304
          %v1388 = vsel %vm1384, %v1326, 0.0
          %v1389 = vsel %vm1385, %v1327, 0.0
          %v1390 = vsel %vm1386, %v1328, 0.0
          %v1391 = vsel %vm1387, %v1329, 0.0
          %v1392 = vadd.f32 %v1388, %v1389
          %v1393 = vadd.f32 %v1392, %v1390
          %v1394 = vadd.f32 %v1393, %v1391
          %1395 = vadd.xlane.f32.xlu0 %v1394
          %v1396 = vpop.xlane.xlu0 %1395
          %v1397 = vadd.f32 %v1196, %v1396
          %vm1398 = vcmp.le.f32.partialorder %v1338, -6.928203
          %vm1399 = vcmp.le.f32.partialorder %v1339, -6.928203
          %vm1400 = vcmp.le.f32.partialorder %v1340, -6.928203
          %vm1401 = vcmp.le.f32.partialorder %v1341, -6.928203
          %v1402 = vsel %vm1398, %v1326, 0.0
          %v1403 = vsel %vm1399, %v1327, 0.0
          %v1404 = vsel %vm1400, %v1328, 0.0
          %v1405 = vsel %vm1401, %v1329, 0.0
          %v1406 = vadd.f32 %v1402, %v1403
          %v1407 = vadd.f32 %v1406, %v1404
          %v1408 = vadd.f32 %v1407, %v1405
          %1409 = vadd.xlane.f32.xlu0 %v1408
          %v1410 = vpop.xlane.xlu0 %1409
          %v1411 = vadd.f32 %v1210, %v1410
          %vm1412 = vcmp.le.f32.partialorder %v1338, -3.4641016
          %vm1413 = vcmp.le.f32.partialorder %v1339, -3.4641016
          %vm1414 = vcmp.le.f32.partialorder %v1340, -3.4641016
          %vm1415 = vcmp.le.f32.partialorder %v1341, -3.4641016
          %v1416 = vsel %vm1412, %v1326, 0.0
          %v1417 = vsel %vm1413, %v1327, 0.0
          %v1418 = vsel %vm1414, %v1328, 0.0
          %v1419 = vsel %vm1415, %v1329, 0.0
          %v1420 = vadd.f32 %v1416, %v1417
          %v1421 = vadd.f32 %v1420, %v1418
          %v1422 = vadd.f32 %v1421, %v1419
          %1423 = vadd.xlane.f32.xlu0 %v1422
          %v1424 = vpop.xlane.xlu0 %1423
          %v1425 = vadd.f32 %v1224, %v1424
          %vm1426 = vcmp.le.f32.partialorder %v1338, -7.1054274e-15
          %vm1427 = vcmp.le.f32.partialorder %v1339, -7.1054274e-15
          %vm1428 = vcmp.le.f32.partialorder %v1340, -7.1054274e-15
          %vm1429 = vcmp.le.f32.partialorder %v1341, -7.1054274e-15
          %v1430 = vsel %vm1426, %v1326, 0.0
          %v1431 = vsel %vm1427, %v1327, 0.0
          %v1432 = vsel %vm1428, %v1328, 0.0
          %v1433 = vsel %vm1429, %v1329, 0.0
          %v1434 = vadd.f32 %v1430, %v1431
          %v1435 = vadd.f32 %v1434, %v1432
          %v1436 = vadd.f32 %v1435, %v1433
          %1437 = vadd.xlane.f32.xlu0 %v1436
          %v1438 = vpop.xlane.xlu0 %1437
          %v1439 = vadd.f32 %v1238, %v1438
          %vm1440 = vcmp.le.f32.partialorder %v1338, 3.4641016
          %vm1441 = vcmp.le.f32.partialorder %v1339, 3.4641016
          %vm1442 = vcmp.le.f32.partialorder %v1340, 3.4641016
          %vm1443 = vcmp.le.f32.partialorder %v1341, 3.4641016
          %v1444 = vsel %vm1440, %v1326, 0.0
          %v1445 = vsel %vm1441, %v1327, 0.0
          %v1446 = vsel %vm1442, %v1328, 0.0
          %v1447 = vsel %vm1443, %v1329, 0.0
          %v1448 = vadd.f32 %v1444, %v1445
          %v1449 = vadd.f32 %v1448, %v1446
          %v1450 = vadd.f32 %v1449, %v1447
          %1451 = vadd.xlane.f32.xlu0 %v1450
          %v1452 = vpop.xlane.xlu0 %1451
          %v1453 = vadd.f32 %v1252, %v1452
          %vm1454 = vcmp.le.f32.partialorder %v1338, 6.928203
          %vm1455 = vcmp.le.f32.partialorder %v1339, 6.928203
          %vm1456 = vcmp.le.f32.partialorder %v1340, 6.928203
          %vm1457 = vcmp.le.f32.partialorder %v1341, 6.928203
          %v1458 = vsel %vm1454, %v1326, 0.0
          %v1459 = vsel %vm1455, %v1327, 0.0
          %v1460 = vsel %vm1456, %v1328, 0.0
          %v1461 = vsel %vm1457, %v1329, 0.0
          %v1462 = vadd.f32 %v1458, %v1459
          %v1463 = vadd.f32 %v1462, %v1460
          %v1464 = vadd.f32 %v1463, %v1461
          %1465 = vadd.xlane.f32.xlu0 %v1464
          %v1466 = vpop.xlane.xlu0 %1465
          %v1467 = vadd.f32 %v1266, %v1466
          %vm1468 = vcmp.le.f32.partialorder %v1338, 10.392304
          %vm1469 = vcmp.le.f32.partialorder %v1339, 10.392304
          %vm1470 = vcmp.le.f32.partialorder %v1340, 10.392304
          %vm1471 = vcmp.le.f32.partialorder %v1341, 10.392304
          %v1472 = vsel %vm1468, %v1326, 0.0
          %v1473 = vsel %vm1469, %v1327, 0.0
          %v1474 = vsel %vm1470, %v1328, 0.0
          %v1475 = vsel %vm1471, %v1329, 0.0
          %v1476 = vadd.f32 %v1472, %v1473
          %v1477 = vadd.f32 %v1476, %v1474
          %v1478 = vadd.f32 %v1477, %v1475
          %1479 = vadd.xlane.f32.xlu0 %v1478
          %v1480 = vpop.xlane.xlu0 %1479
          %v1481 = vadd.f32 %v1280, %v1480
          %vm1482 = vcmp.le.f32.partialorder %v1338, 13.856406
          %vm1483 = vcmp.le.f32.partialorder %v1339, 13.856406
          %vm1484 = vcmp.le.f32.partialorder %v1340, 13.856406
          %vm1485 = vcmp.le.f32.partialorder %v1341, 13.856406
          %v1486 = vsel %vm1482, %v1326, 0.0
          %v1487 = vsel %vm1483, %v1327, 0.0
          %v1488 = vsel %vm1484, %v1328, 0.0
          %v1489 = vsel %vm1485, %v1329, 0.0
          %v1490 = vadd.f32 %v1486, %v1487
          %v1491 = vadd.f32 %v1490, %v1488
          %v1492 = vadd.f32 %v1491, %v1489
          %1493 = vadd.xlane.f32.xlu0 %v1492
          %v1494 = vpop.xlane.xlu0 %1493
          %v1495 = vadd.f32 %v1294, %v1494
          %vm1496 = vcmp.le.f32.partialorder %v1338, 17.320509
          %vm1497 = vcmp.le.f32.partialorder %v1339, 17.320509
          %vm1498 = vcmp.le.f32.partialorder %v1340, 17.320509
          %vm1499 = vcmp.le.f32.partialorder %v1341, 17.320509
          %v1500 = vsel %vm1496, %v1326, 0.0
          %v1501 = vsel %vm1497, %v1327, 0.0
          %v1502 = vsel %vm1498, %v1328, 0.0
          %v1503 = vsel %vm1499, %v1329, 0.0
          %v1504 = vadd.f32 %v1500, %v1501
          %v1505 = vadd.f32 %v1504, %v1502
          %v1506 = vadd.f32 %v1505, %v1503
          %1507 = vadd.xlane.f32.xlu0 %v1506
          %v1508 = vpop.xlane.xlu0 %1507
          %v1509 = vadd.f32 %v1308, %v1508
          %vm1510 = vcmp.le.f32.partialorder %v1338, 20.784609
          %vm1511 = vcmp.le.f32.partialorder %v1339, 20.784609
          %vm1512 = vcmp.le.f32.partialorder %v1340, 20.784609
          %vm1513 = vcmp.le.f32.partialorder %v1341, 20.784609
          %v1514 = vsel %vm1510, %v1326, 0.0
          %v1515 = vsel %vm1511, %v1327, 0.0
          %v1516 = vsel %vm1512, %v1328, 0.0
          %v1517 = vsel %vm1513, %v1329, 0.0
          %v1518 = vadd.f32 %v1514, %v1515
          %v1519 = vadd.f32 %v1518, %v1516
          %v1520 = vadd.f32 %v1519, %v1517
          %1521 = vadd.xlane.f32.xlu0 %v1520
          %v1522 = vpop.xlane.xlu0 %1521
          %v1523 = vadd.f32 %v1322, %v1522
          %s1524 = scalar_lea.vmem %s318, 6
          %v1525 = vld [vmem:[%s1524] ss:$8 sm:$0xf]
          %v1527 = vperm.slane %v1525, 0
          %v1528 = vperm.slane %v1525, 1
          %v1529 = vperm.slane %v1525, 2
          %v1530 = vperm.slane %v1525, 3
          %1535 = vset.pattern.permute.xlu0 9
          %1536 = vperm.xlu0 %1535, %v227
          %v1537 = vpop.permute.xlu0 %1536
          %v1539 = vadd.f32 %v313, %v1537
          %v1540 = vadd.f32 %v314, %v1537
          %v1541 = vadd.f32 %v315, %v1537
          %v1542 = vadd.f32 %v316, %v1537
          %vm1543 = vcmp.le.f32.partialorder %v1539, -20.784609
          %vm1544 = vcmp.le.f32.partialorder %v1540, -20.784609
          %vm1545 = vcmp.le.f32.partialorder %v1541, -20.784609
          %vm1546 = vcmp.le.f32.partialorder %v1542, -20.784609
          %v1547 = vsel %vm1543, %v1527, 0.0
          %v1548 = vsel %vm1544, %v1528, 0.0
          %v1549 = vsel %vm1545, %v1529, 0.0
          %v1550 = vsel %vm1546, %v1530, 0.0
          %v1551 = vadd.f32 %v1547, %v1548
          %v1552 = vadd.f32 %v1551, %v1549
          %v1553 = vadd.f32 %v1552, %v1550
          %1554 = vadd.xlane.f32.xlu0 %v1553
          %v1555 = vpop.xlane.xlu0 %1554
          %v1556 = vadd.f32 %v1355, %v1555
          %vm1557 = vcmp.le.f32.partialorder %v1539, -17.320509
          %vm1558 = vcmp.le.f32.partialorder %v1540, -17.320509
          %vm1559 = vcmp.le.f32.partialorder %v1541, -17.320509
          %vm1560 = vcmp.le.f32.partialorder %v1542, -17.320509
          %v1561 = vsel %vm1557, %v1527, 0.0
          %v1562 = vsel %vm1558, %v1528, 0.0
          %v1563 = vsel %vm1559, %v1529, 0.0
          %v1564 = vsel %vm1560, %v1530, 0.0
          %v1565 = vadd.f32 %v1561, %v1562
          %v1566 = vadd.f32 %v1565, %v1563
          %v1567 = vadd.f32 %v1566, %v1564
          %1568 = vadd.xlane.f32.xlu0 %v1567
          %v1569 = vpop.xlane.xlu0 %1568
          %v1570 = vadd.f32 %v1369, %v1569
          %vm1571 = vcmp.le.f32.partialorder %v1539, -13.856406
          %vm1572 = vcmp.le.f32.partialorder %v1540, -13.856406
          %vm1573 = vcmp.le.f32.partialorder %v1541, -13.856406
          %vm1574 = vcmp.le.f32.partialorder %v1542, -13.856406
          %v1575 = vsel %vm1571, %v1527, 0.0
          %v1576 = vsel %vm1572, %v1528, 0.0
          %v1577 = vsel %vm1573, %v1529, 0.0
          %v1578 = vsel %vm1574, %v1530, 0.0
          %v1579 = vadd.f32 %v1575, %v1576
          %v1580 = vadd.f32 %v1579, %v1577
          %v1581 = vadd.f32 %v1580, %v1578
          %1582 = vadd.xlane.f32.xlu0 %v1581
          %v1583 = vpop.xlane.xlu0 %1582
          %v1584 = vadd.f32 %v1383, %v1583
          %vm1585 = vcmp.le.f32.partialorder %v1539, -10.392304
          %vm1586 = vcmp.le.f32.partialorder %v1540, -10.392304
          %vm1587 = vcmp.le.f32.partialorder %v1541, -10.392304
          %vm1588 = vcmp.le.f32.partialorder %v1542, -10.392304
          %v1589 = vsel %vm1585, %v1527, 0.0
          %v1590 = vsel %vm1586, %v1528, 0.0
          %v1591 = vsel %vm1587, %v1529, 0.0
          %v1592 = vsel %vm1588, %v1530, 0.0
          %v1593 = vadd.f32 %v1589, %v1590
          %v1594 = vadd.f32 %v1593, %v1591
          %v1595 = vadd.f32 %v1594, %v1592
          %1596 = vadd.xlane.f32.xlu0 %v1595
          %v1597 = vpop.xlane.xlu0 %1596
          %v1598 = vadd.f32 %v1397, %v1597
          %vm1599 = vcmp.le.f32.partialorder %v1539, -6.928203
          %vm1600 = vcmp.le.f32.partialorder %v1540, -6.928203
          %vm1601 = vcmp.le.f32.partialorder %v1541, -6.928203
          %vm1602 = vcmp.le.f32.partialorder %v1542, -6.928203
          %v1603 = vsel %vm1599, %v1527, 0.0
          %v1604 = vsel %vm1600, %v1528, 0.0
          %v1605 = vsel %vm1601, %v1529, 0.0
          %v1606 = vsel %vm1602, %v1530, 0.0
          %v1607 = vadd.f32 %v1603, %v1604
          %v1608 = vadd.f32 %v1607, %v1605
          %v1609 = vadd.f32 %v1608, %v1606
          %1610 = vadd.xlane.f32.xlu0 %v1609
          %v1611 = vpop.xlane.xlu0 %1610
          %v1612 = vadd.f32 %v1411, %v1611
          %vm1613 = vcmp.le.f32.partialorder %v1539, -3.4641016
          %vm1614 = vcmp.le.f32.partialorder %v1540, -3.4641016
          %vm1615 = vcmp.le.f32.partialorder %v1541, -3.4641016
          %vm1616 = vcmp.le.f32.partialorder %v1542, -3.4641016
          %v1617 = vsel %vm1613, %v1527, 0.0
          %v1618 = vsel %vm1614, %v1528, 0.0
          %v1619 = vsel %vm1615, %v1529, 0.0
          %v1620 = vsel %vm1616, %v1530, 0.0
          %v1621 = vadd.f32 %v1617, %v1618
          %v1622 = vadd.f32 %v1621, %v1619
          %v1623 = vadd.f32 %v1622, %v1620
          %1624 = vadd.xlane.f32.xlu0 %v1623
          %v1625 = vpop.xlane.xlu0 %1624
          %v1626 = vadd.f32 %v1425, %v1625
          %vm1627 = vcmp.le.f32.partialorder %v1539, -7.1054274e-15
          %vm1628 = vcmp.le.f32.partialorder %v1540, -7.1054274e-15
          %vm1629 = vcmp.le.f32.partialorder %v1541, -7.1054274e-15
          %vm1630 = vcmp.le.f32.partialorder %v1542, -7.1054274e-15
          %v1631 = vsel %vm1627, %v1527, 0.0
          %v1632 = vsel %vm1628, %v1528, 0.0
          %v1633 = vsel %vm1629, %v1529, 0.0
          %v1634 = vsel %vm1630, %v1530, 0.0
          %v1635 = vadd.f32 %v1631, %v1632
          %v1636 = vadd.f32 %v1635, %v1633
          %v1637 = vadd.f32 %v1636, %v1634
          %1638 = vadd.xlane.f32.xlu0 %v1637
          %v1639 = vpop.xlane.xlu0 %1638
          %v1640 = vadd.f32 %v1439, %v1639
          %vm1641 = vcmp.le.f32.partialorder %v1539, 3.4641016
          %vm1642 = vcmp.le.f32.partialorder %v1540, 3.4641016
          %vm1643 = vcmp.le.f32.partialorder %v1541, 3.4641016
          %vm1644 = vcmp.le.f32.partialorder %v1542, 3.4641016
          %v1645 = vsel %vm1641, %v1527, 0.0
          %v1646 = vsel %vm1642, %v1528, 0.0
          %v1647 = vsel %vm1643, %v1529, 0.0
          %v1648 = vsel %vm1644, %v1530, 0.0
          %v1649 = vadd.f32 %v1645, %v1646
          %v1650 = vadd.f32 %v1649, %v1647
          %v1651 = vadd.f32 %v1650, %v1648
          %1652 = vadd.xlane.f32.xlu0 %v1651
          %v1653 = vpop.xlane.xlu0 %1652
          %v1654 = vadd.f32 %v1453, %v1653
          %vm1655 = vcmp.le.f32.partialorder %v1539, 6.928203
          %vm1656 = vcmp.le.f32.partialorder %v1540, 6.928203
          %vm1657 = vcmp.le.f32.partialorder %v1541, 6.928203
          %vm1658 = vcmp.le.f32.partialorder %v1542, 6.928203
          %v1659 = vsel %vm1655, %v1527, 0.0
          %v1660 = vsel %vm1656, %v1528, 0.0
          %v1661 = vsel %vm1657, %v1529, 0.0
          %v1662 = vsel %vm1658, %v1530, 0.0
          %v1663 = vadd.f32 %v1659, %v1660
          %v1664 = vadd.f32 %v1663, %v1661
          %v1665 = vadd.f32 %v1664, %v1662
          %1666 = vadd.xlane.f32.xlu0 %v1665
          %v1667 = vpop.xlane.xlu0 %1666
          %v1668 = vadd.f32 %v1467, %v1667
          %vm1669 = vcmp.le.f32.partialorder %v1539, 10.392304
          %vm1670 = vcmp.le.f32.partialorder %v1540, 10.392304
          %vm1671 = vcmp.le.f32.partialorder %v1541, 10.392304
          %vm1672 = vcmp.le.f32.partialorder %v1542, 10.392304
          %v1673 = vsel %vm1669, %v1527, 0.0
          %v1674 = vsel %vm1670, %v1528, 0.0
          %v1675 = vsel %vm1671, %v1529, 0.0
          %v1676 = vsel %vm1672, %v1530, 0.0
          %v1677 = vadd.f32 %v1673, %v1674
          %v1678 = vadd.f32 %v1677, %v1675
          %v1679 = vadd.f32 %v1678, %v1676
          %1680 = vadd.xlane.f32.xlu0 %v1679
          %v1681 = vpop.xlane.xlu0 %1680
          %v1682 = vadd.f32 %v1481, %v1681
          %vm1683 = vcmp.le.f32.partialorder %v1539, 13.856406
          %vm1684 = vcmp.le.f32.partialorder %v1540, 13.856406
          %vm1685 = vcmp.le.f32.partialorder %v1541, 13.856406
          %vm1686 = vcmp.le.f32.partialorder %v1542, 13.856406
          %v1687 = vsel %vm1683, %v1527, 0.0
          %v1688 = vsel %vm1684, %v1528, 0.0
          %v1689 = vsel %vm1685, %v1529, 0.0
          %v1690 = vsel %vm1686, %v1530, 0.0
          %v1691 = vadd.f32 %v1687, %v1688
          %v1692 = vadd.f32 %v1691, %v1689
          %v1693 = vadd.f32 %v1692, %v1690
          %1694 = vadd.xlane.f32.xlu0 %v1693
          %v1695 = vpop.xlane.xlu0 %1694
          %v1696 = vadd.f32 %v1495, %v1695
          %vm1697 = vcmp.le.f32.partialorder %v1539, 17.320509
          %vm1698 = vcmp.le.f32.partialorder %v1540, 17.320509
          %vm1699 = vcmp.le.f32.partialorder %v1541, 17.320509
          %vm1700 = vcmp.le.f32.partialorder %v1542, 17.320509
          %v1701 = vsel %vm1697, %v1527, 0.0
          %v1702 = vsel %vm1698, %v1528, 0.0
          %v1703 = vsel %vm1699, %v1529, 0.0
          %v1704 = vsel %vm1700, %v1530, 0.0
          %v1705 = vadd.f32 %v1701, %v1702
          %v1706 = vadd.f32 %v1705, %v1703
          %v1707 = vadd.f32 %v1706, %v1704
          %1708 = vadd.xlane.f32.xlu0 %v1707
          %v1709 = vpop.xlane.xlu0 %1708
          %v1710 = vadd.f32 %v1509, %v1709
          %vm1711 = vcmp.le.f32.partialorder %v1539, 20.784609
          %vm1712 = vcmp.le.f32.partialorder %v1540, 20.784609
          %vm1713 = vcmp.le.f32.partialorder %v1541, 20.784609
          %vm1714 = vcmp.le.f32.partialorder %v1542, 20.784609
          %v1715 = vsel %vm1711, %v1527, 0.0
          %v1716 = vsel %vm1712, %v1528, 0.0
          %v1717 = vsel %vm1713, %v1529, 0.0
          %v1718 = vsel %vm1714, %v1530, 0.0
          %v1719 = vadd.f32 %v1715, %v1716
          %v1720 = vadd.f32 %v1719, %v1717
          %v1721 = vadd.f32 %v1720, %v1718
          %1722 = vadd.xlane.f32.xlu0 %v1721
          %v1723 = vpop.xlane.xlu0 %1722
          %v1724 = vadd.f32 %v1523, %v1723
          %s1725 = scalar_lea.vmem %s318, 7
          %v1726 = vld [vmem:[%s1725] ss:$8 sm:$0xf]
          %v1728 = vperm.slane %v1726, 0
          %v1729 = vperm.slane %v1726, 1
          %v1730 = vperm.slane %v1726, 2
          %v1731 = vperm.slane %v1726, 3
          %1736 = vset.pattern.permute.xlu0 10
          %1737 = vperm.xlu0 %1736, %v227
          %v1738 = vpop.permute.xlu0 %1737
          %v1740 = vadd.f32 %v313, %v1738
          %v1741 = vadd.f32 %v314, %v1738
          %v1742 = vadd.f32 %v315, %v1738
          %v1743 = vadd.f32 %v316, %v1738
          %vm1744 = vcmp.le.f32.partialorder %v1740, -20.784609
          %vm1745 = vcmp.le.f32.partialorder %v1741, -20.784609
          %vm1746 = vcmp.le.f32.partialorder %v1742, -20.784609
          %vm1747 = vcmp.le.f32.partialorder %v1743, -20.784609
          %v1748 = vsel %vm1744, %v1728, 0.0
          %v1749 = vsel %vm1745, %v1729, 0.0
          %v1750 = vsel %vm1746, %v1730, 0.0
          %v1751 = vsel %vm1747, %v1731, 0.0
          %v1752 = vadd.f32 %v1748, %v1749
          %v1753 = vadd.f32 %v1752, %v1750
          %v1754 = vadd.f32 %v1753, %v1751
          %1755 = vadd.xlane.f32.xlu0 %v1754
          %v1756 = vpop.xlane.xlu0 %1755
          %v1757 = vadd.f32 %v1556, %v1756
          %vm1758 = vcmp.le.f32.partialorder %v1740, -17.320509
          %vm1759 = vcmp.le.f32.partialorder %v1741, -17.320509
          %vm1760 = vcmp.le.f32.partialorder %v1742, -17.320509
          %vm1761 = vcmp.le.f32.partialorder %v1743, -17.320509
          %v1762 = vsel %vm1758, %v1728, 0.0
          %v1763 = vsel %vm1759, %v1729, 0.0
          %v1764 = vsel %vm1760, %v1730, 0.0
          %v1765 = vsel %vm1761, %v1731, 0.0
          %v1766 = vadd.f32 %v1762, %v1763
          %v1767 = vadd.f32 %v1766, %v1764
          %v1768 = vadd.f32 %v1767, %v1765
          %1769 = vadd.xlane.f32.xlu0 %v1768
          %v1770 = vpop.xlane.xlu0 %1769
          %v1771 = vadd.f32 %v1570, %v1770
          %vm1772 = vcmp.le.f32.partialorder %v1740, -13.856406
          %vm1773 = vcmp.le.f32.partialorder %v1741, -13.856406
          %vm1774 = vcmp.le.f32.partialorder %v1742, -13.856406
          %vm1775 = vcmp.le.f32.partialorder %v1743, -13.856406
          %v1776 = vsel %vm1772, %v1728, 0.0
          %v1777 = vsel %vm1773, %v1729, 0.0
          %v1778 = vsel %vm1774, %v1730, 0.0
          %v1779 = vsel %vm1775, %v1731, 0.0
          %v1780 = vadd.f32 %v1776, %v1777
          %v1781 = vadd.f32 %v1780, %v1778
          %v1782 = vadd.f32 %v1781, %v1779
          %1783 = vadd.xlane.f32.xlu0 %v1782
          %v1784 = vpop.xlane.xlu0 %1783
          %v1785 = vadd.f32 %v1584, %v1784
          %vm1786 = vcmp.le.f32.partialorder %v1740, -10.392304
          %vm1787 = vcmp.le.f32.partialorder %v1741, -10.392304
          %vm1788 = vcmp.le.f32.partialorder %v1742, -10.392304
          %vm1789 = vcmp.le.f32.partialorder %v1743, -10.392304
          %v1790 = vsel %vm1786, %v1728, 0.0
          %v1791 = vsel %vm1787, %v1729, 0.0
          %v1792 = vsel %vm1788, %v1730, 0.0
          %v1793 = vsel %vm1789, %v1731, 0.0
          %v1794 = vadd.f32 %v1790, %v1791
          %v1795 = vadd.f32 %v1794, %v1792
          %v1796 = vadd.f32 %v1795, %v1793
          %1797 = vadd.xlane.f32.xlu0 %v1796
          %v1798 = vpop.xlane.xlu0 %1797
          %v1799 = vadd.f32 %v1598, %v1798
          %vm1800 = vcmp.le.f32.partialorder %v1740, -6.928203
          %vm1801 = vcmp.le.f32.partialorder %v1741, -6.928203
          %vm1802 = vcmp.le.f32.partialorder %v1742, -6.928203
          %vm1803 = vcmp.le.f32.partialorder %v1743, -6.928203
          %v1804 = vsel %vm1800, %v1728, 0.0
          %v1805 = vsel %vm1801, %v1729, 0.0
          %v1806 = vsel %vm1802, %v1730, 0.0
          %v1807 = vsel %vm1803, %v1731, 0.0
          %v1808 = vadd.f32 %v1804, %v1805
          %v1809 = vadd.f32 %v1808, %v1806
          %v1810 = vadd.f32 %v1809, %v1807
          %1811 = vadd.xlane.f32.xlu0 %v1810
          %v1812 = vpop.xlane.xlu0 %1811
          %v1813 = vadd.f32 %v1612, %v1812
          %vm1814 = vcmp.le.f32.partialorder %v1740, -3.4641016
          %vm1815 = vcmp.le.f32.partialorder %v1741, -3.4641016
          %vm1816 = vcmp.le.f32.partialorder %v1742, -3.4641016
          %vm1817 = vcmp.le.f32.partialorder %v1743, -3.4641016
          %v1818 = vsel %vm1814, %v1728, 0.0
          %v1819 = vsel %vm1815, %v1729, 0.0
          %v1820 = vsel %vm1816, %v1730, 0.0
          %v1821 = vsel %vm1817, %v1731, 0.0
          %v1822 = vadd.f32 %v1818, %v1819
          %v1823 = vadd.f32 %v1822, %v1820
          %v1824 = vadd.f32 %v1823, %v1821
          %1825 = vadd.xlane.f32.xlu0 %v1824
          %v1826 = vpop.xlane.xlu0 %1825
          %v1827 = vadd.f32 %v1626, %v1826
          %vm1828 = vcmp.le.f32.partialorder %v1740, -7.1054274e-15
          %vm1829 = vcmp.le.f32.partialorder %v1741, -7.1054274e-15
          %vm1830 = vcmp.le.f32.partialorder %v1742, -7.1054274e-15
          %vm1831 = vcmp.le.f32.partialorder %v1743, -7.1054274e-15
          %v1832 = vsel %vm1828, %v1728, 0.0
          %v1833 = vsel %vm1829, %v1729, 0.0
          %v1834 = vsel %vm1830, %v1730, 0.0
          %v1835 = vsel %vm1831, %v1731, 0.0
          %v1836 = vadd.f32 %v1832, %v1833
          %v1837 = vadd.f32 %v1836, %v1834
          %v1838 = vadd.f32 %v1837, %v1835
          %1839 = vadd.xlane.f32.xlu0 %v1838
          %v1840 = vpop.xlane.xlu0 %1839
          %v1841 = vadd.f32 %v1640, %v1840
          %vm1842 = vcmp.le.f32.partialorder %v1740, 3.4641016
          %vm1843 = vcmp.le.f32.partialorder %v1741, 3.4641016
          %vm1844 = vcmp.le.f32.partialorder %v1742, 3.4641016
          %vm1845 = vcmp.le.f32.partialorder %v1743, 3.4641016
          %v1846 = vsel %vm1842, %v1728, 0.0
          %v1847 = vsel %vm1843, %v1729, 0.0
          %v1848 = vsel %vm1844, %v1730, 0.0
          %v1849 = vsel %vm1845, %v1731, 0.0
          %v1850 = vadd.f32 %v1846, %v1847
          %v1851 = vadd.f32 %v1850, %v1848
          %v1852 = vadd.f32 %v1851, %v1849
          %1853 = vadd.xlane.f32.xlu0 %v1852
          %v1854 = vpop.xlane.xlu0 %1853
          %v1855 = vadd.f32 %v1654, %v1854
          %vm1856 = vcmp.le.f32.partialorder %v1740, 6.928203
          %vm1857 = vcmp.le.f32.partialorder %v1741, 6.928203
          %vm1858 = vcmp.le.f32.partialorder %v1742, 6.928203
          %vm1859 = vcmp.le.f32.partialorder %v1743, 6.928203
          %v1860 = vsel %vm1856, %v1728, 0.0
          %v1861 = vsel %vm1857, %v1729, 0.0
          %v1862 = vsel %vm1858, %v1730, 0.0
          %v1863 = vsel %vm1859, %v1731, 0.0
          %v1864 = vadd.f32 %v1860, %v1861
          %v1865 = vadd.f32 %v1864, %v1862
          %v1866 = vadd.f32 %v1865, %v1863
          %1867 = vadd.xlane.f32.xlu0 %v1866
          %v1868 = vpop.xlane.xlu0 %1867
          %v1869 = vadd.f32 %v1668, %v1868
          %vm1870 = vcmp.le.f32.partialorder %v1740, 10.392304
          %vm1871 = vcmp.le.f32.partialorder %v1741, 10.392304
          %vm1872 = vcmp.le.f32.partialorder %v1742, 10.392304
          %vm1873 = vcmp.le.f32.partialorder %v1743, 10.392304
          %v1874 = vsel %vm1870, %v1728, 0.0
          %v1875 = vsel %vm1871, %v1729, 0.0
          %v1876 = vsel %vm1872, %v1730, 0.0
          %v1877 = vsel %vm1873, %v1731, 0.0
          %v1878 = vadd.f32 %v1874, %v1875
          %v1879 = vadd.f32 %v1878, %v1876
          %v1880 = vadd.f32 %v1879, %v1877
          %1881 = vadd.xlane.f32.xlu0 %v1880
          %v1882 = vpop.xlane.xlu0 %1881
          %v1883 = vadd.f32 %v1682, %v1882
          %vm1884 = vcmp.le.f32.partialorder %v1740, 13.856406
          %vm1885 = vcmp.le.f32.partialorder %v1741, 13.856406
          %vm1886 = vcmp.le.f32.partialorder %v1742, 13.856406
          %vm1887 = vcmp.le.f32.partialorder %v1743, 13.856406
          %v1888 = vsel %vm1884, %v1728, 0.0
          %v1889 = vsel %vm1885, %v1729, 0.0
          %v1890 = vsel %vm1886, %v1730, 0.0
          %v1891 = vsel %vm1887, %v1731, 0.0
          %v1892 = vadd.f32 %v1888, %v1889
          %v1893 = vadd.f32 %v1892, %v1890
          %v1894 = vadd.f32 %v1893, %v1891
          %1895 = vadd.xlane.f32.xlu0 %v1894
          %v1896 = vpop.xlane.xlu0 %1895
          %v1897 = vadd.f32 %v1696, %v1896
          %vm1898 = vcmp.le.f32.partialorder %v1740, 17.320509
          %vm1899 = vcmp.le.f32.partialorder %v1741, 17.320509
          %vm1900 = vcmp.le.f32.partialorder %v1742, 17.320509
          %vm1901 = vcmp.le.f32.partialorder %v1743, 17.320509
          %v1902 = vsel %vm1898, %v1728, 0.0
          %v1903 = vsel %vm1899, %v1729, 0.0
          %v1904 = vsel %vm1900, %v1730, 0.0
          %v1905 = vsel %vm1901, %v1731, 0.0
          %v1906 = vadd.f32 %v1902, %v1903
          %v1907 = vadd.f32 %v1906, %v1904
          %v1908 = vadd.f32 %v1907, %v1905
          %1909 = vadd.xlane.f32.xlu0 %v1908
          %v1910 = vpop.xlane.xlu0 %1909
          %v1911 = vadd.f32 %v1710, %v1910
          %vm1912 = vcmp.le.f32.partialorder %v1740, 20.784609
          %vm1913 = vcmp.le.f32.partialorder %v1741, 20.784609
          %vm1914 = vcmp.le.f32.partialorder %v1742, 20.784609
          %vm1915 = vcmp.le.f32.partialorder %v1743, 20.784609
          %v1916 = vsel %vm1912, %v1728, 0.0
          %v1917 = vsel %vm1913, %v1729, 0.0
          %v1918 = vsel %vm1914, %v1730, 0.0
          %v1919 = vsel %vm1915, %v1731, 0.0
          %v1920 = vadd.f32 %v1916, %v1917
          %v1921 = vadd.f32 %v1920, %v1918
          %v1922 = vadd.f32 %v1921, %v1919
          %1923 = vadd.xlane.f32.xlu0 %v1922
          %v1924 = vpop.xlane.xlu0 %1923
          %v1925 = vadd.f32 %v1724, %v1924
        $region41: #{_wect_forward.1} parent=31 // loop_footer
          %s233 = sadd.s32 1, %s229
        $region42: #{_wect_forward.1} parent=31 // loop_footer_branch
          %228 = sbr.rel target = $region38
        $region43: #{_wect_forward.1} parent=31 // loop_exit
          _
        %v1926 = vlaneseq
        %v1927 = vand.u32 %v1926, 127
        %vm1928 = vcmp.eq.s32.totalorder %v1927, 0
        %v1929 = vsel %vm1928, %v234, 0.0
        %v1930 = vadd.f32 %v1929, 0.0
        %vm1931 = vcmp.eq.s32.totalorder %v1927, 1
        %v1932 = vsel %vm1931, %v235, 0.0
        %v1933 = vadd.f32 %v1930, %v1932
        %vm1934 = vcmp.eq.s32.totalorder %v1927, 2
        %v1935 = vsel %vm1934, %v236, 0.0
        %v1936 = vadd.f32 %v1933, %v1935
        %vm1937 = vcmp.eq.s32.totalorder %v1927, 3
        %v1938 = vsel %vm1937, %v237, 0.0
        %v1939 = vadd.f32 %v1936, %v1938
        %vm1940 = vcmp.eq.s32.totalorder %v1927, 4
        %v1941 = vsel %vm1940, %v238, 0.0
        %v1942 = vadd.f32 %v1939, %v1941
        %vm1943 = vcmp.eq.s32.totalorder %v1927, 5
        %v1944 = vsel %vm1943, %v239, 0.0
        %v1945 = vadd.f32 %v1942, %v1944
        %vm1946 = vcmp.eq.s32.totalorder %v1927, 6
        %v1947 = vsel %vm1946, %v240, 0.0
        %v1948 = vadd.f32 %v1945, %v1947
        %vm1949 = vcmp.eq.s32.totalorder %v1927, 7
        %v1950 = vsel %vm1949, %v241, 0.0
        %v1951 = vadd.f32 %v1948, %v1950
        %vm1952 = vcmp.eq.s32.totalorder %v1927, 8
        %v1953 = vsel %vm1952, %v242, 0.0
        %v1954 = vadd.f32 %v1951, %v1953
        %vm1955 = vcmp.eq.s32.totalorder %v1927, 9
        %v1956 = vsel %vm1955, %v243, 0.0
        %v1957 = vadd.f32 %v1954, %v1956
        %vm1958 = vcmp.eq.s32.totalorder %v1927, 10
        %v1959 = vsel %vm1958, %v244, 0.0
        %v1960 = vadd.f32 %v1957, %v1959
        %vm1961 = vcmp.eq.s32.totalorder %v1927, 11
        %v1962 = vsel %vm1961, %v245, 0.0
        %v1963 = vadd.f32 %v1960, %v1962
        %vm1964 = vcmp.eq.s32.totalorder %v1927, 12
        %v1965 = vsel %vm1964, %v246, 0.0
        %v1966 = vadd.f32 %v1963, %v1965
        %v1967 = vld [vmem:[%s205] sm:$0xff]
        %v1968 = vadd.f32 %v1967, %v1966
        %1969 = vst [vmem:[%s205] sm:$0xff] %v1968
        %s1970 = sand.u32 %s115, 1
        %s1971 = scalar_lea.sflag [#allocation3], %s1970
        %s1972 = sand.u32 %s115, 1
        %s1973 = smul.addr %s1972, 8
        %s1974 = scalar_lea.vmem [#allocation2], %s1973
        // Predicated region
        $region44: #{_wect_forward.1} parent=31 // pred_check
          %p1975 = pneg %p125
        $region45: #{_wect_forward.1} parent=31 // pred_check_branch
          %1977 = sbr.rel (%p1975) target = $region47
        $region46: #{_wect_forward.1} parent=31 // pred_region
          %1979 = vsyncadd %s1971, 0
          %s1980 = smul.addr %s21, 8
          %s1981 = scalar_lea.hbm %s3, %s1980
          %s1983 = sshll.u32 %s1974, 4
          %s1984 = int_to_ptr.vmem [resolvable:$true] %s1983
          %s1985 = sshll.u32 %s1981, 4
          %s1986 = int_to_ptr.hbm [resolvable:$true] %s1985
          %1988 = dma.vmem_to_hbm [thread:$0]  %s1984, 128, %s1986, %s1971
        $region47: #{_wect_forward.1} parent=31 // pred_fallthru
          _
      $region32: #{_wect_forward.1} parent=5 // pred_fallthru
        _
      %p1989 = scmp.le.s32.totalorder 2, %s12
      // Predicated region
      $region48: #{_wect_forward.1} parent=5 // pred_check
        %p1990 = pneg %p1989
      $region49: #{_wect_forward.1} parent=5 // pred_check_branch
        %1992 = sbr.rel (%p1990) target = $region51
      $region50: #{_wect_forward.1} parent=5 // pred_region
        %s1993 = ssub.s32 %s12, 2
        // Predicated region
        $region52: #{_wect_forward.1} parent=50 // pred_check
          %p1994 = pneg %p131
        $region53: #{_wect_forward.1} parent=50 // pred_check_branch
          %1996 = sbr.rel (%p1994) target = $region55
        $region54: #{_wect_forward.1} parent=50 // pred_region
          %s1997 = sand.u32 %s116, 1
          %s1998 = scalar_lea.sflag [#allocation3], %s1997
          %s1999 = sand.u32 %s116, 1
          %s2000 = smul.addr %s1999, 8
          %s2001 = scalar_lea.vmem [#allocation2], %s2000
          %2003 = dma.done %s1998, 128
        $region55: #{_wect_forward.1} parent=50 // pred_fallthru
          _
      $region51: #{_wect_forward.1} parent=5 // pred_fallthru
        _
    $region6: #{_wect_forward.1} parent=1 // loop_footer
      %s16 = sadd.s32 1, %s12
    $region7: #{_wect_forward.1} parent=1 // loop_footer_branch
      %11 = sbr.rel target = $region3
    $region8: #{_wect_forward.1} parent=1 // loop_exit
      _
    %2004 = vsyncpa [#allocation3], 1
    %s2005 = scalar_lea.sflag [#allocation3], 1
    %2006 = vsyncpa %s2005, 1

</llo_original>
